<compile_context>
chip_gen: v7x
topology: tpu7x:2x2x1
jax: 0.10.0
libtpu: 0.0.40
codegen_flags: <defaults>
</compile_context>

<pallas_src>
import functools

import jax
import jax.numpy as jnp
from jax import lax
from jax.experimental import pallas as pl
from jax.experimental.pallas import tpu as pltpu

FOLD = 4      # batch samples packed per folded row (free reshape + block-diag weights)
CHUNK = 1024  # folded rows per inner step => FOLD*CHUNK = 4096 batch elems per chunk


def _round_up(a, m):
    return ((a + m - 1) // m) * m


def mlp_kernel(x_ref, w1_ref, b1_ref, w2_ref, b2_ref, w3_ref, b3_ref, o_ref,
               *, n_chunks, chunk):
    # Tiny weights/biases are VMEM-resident (constant index maps); load once per tile.
    w1 = w1_ref[...]          # [24, 256]  bf16 (block-diag of W1^T, FOLD copies)
    b1 = b1_ref[...]          # [1, 256]   f32
    w2 = w2_ref[...]          # [256, 128] bf16
    b2 = b2_ref[...]          # [1, 128]   f32
    w3 = w3_ref[...]          # [128, 16]  bf16
    b3 = b3_ref[...]          # [1, 16]    f32

    def body(c, carry):
        r0 = pl.multiple_of(c * chunk, chunk)
        xb = x_ref[pl.ds(r0, chunk), :].astype(jnp.bfloat16)      # [chunk, 24]
        # Fused bias + ReLU + cast: only the bf16 activation is materialized.
        h = jnp.maximum(
            jnp.dot(xb, w1, preferred_element_type=jnp.float32) + b1, 0.0
        ).astype(jnp.bfloat16)                                    # [chunk, 256]
        h = jnp.maximum(
            jnp.dot(h, w2, preferred_element_type=jnp.float32) + b2, 0.0
        ).astype(jnp.bfloat16)                                    # [chunk, 128]
        y = jnp.dot(h, w3, preferred_element_type=jnp.float32) + b3  # [chunk, 16]
        o_ref[pl.ds(r0, chunk), :] = y.astype(o_ref.dtype)
        return carry

    lax.fori_loop(0, n_chunks, body, 0)


def custom_net_forward(x, params, *, block_b=32768, out_dtype=jnp.float32):
    """x: [B, 6] float32. params: PyTorch-style weights. Returns [B, 4] out_dtype."""
    w1, b1 = params["w1"], params["b1"]   # [64, 6],  [64]
    w2, b2 = params["w2"], params["b2"]   # [32, 64], [32]
    w3, b3 = params["w3"], params["b3"]   # [4, 32],  [4]

    B = x.shape[0]
    gran = FOLD * CHUNK   # 4096 batch elements per inner chunk

    try:
        vmem_bytes = int(pltpu.get_tpu_info().vmem_capacity_bytes)
    except Exception:
        vmem_bytes = 64 * 1024 * 1024   # conservative (v7x-sized) fallback

    # Folded x/out blocks are lane-padded to 128 lanes in VMEM (~512 B per batch
    # element across both double-buffered operands).  Keep them within half of
    # VMEM; the rest is for the chunked intermediates + headroom.
    vmem_cap_elems = max(gran, ((vmem_bytes // 2) // 512 // gran) * gran)
    # Make grid >= 2 once B is large enough so the batch axis shards across the
    # two v7x TensorCores (megacore) via dimension_semantics=("parallel",).
    half_b = _round_up(max(1, -(-B // 2)), gran)
    tb = min(_round_up(block_b, gran), vmem_cap_elems, half_b)

    bp = _round_up(B, tb)
    xp = x if bp == B else jnp.pad(x, ((0, bp - B), (0, 0)))
    x_fold = xp.reshape(bp // FOLD, FOLD * 6)   # free: row-major compatible

    # Host-side (tiny, one-time) weight prep: block-diag(W^T) x FOLD, bf16.
    def fold_w(w):
        return jnp.kron(jnp.eye(FOLD, dtype=w.dtype), w.T).astype(jnp.bfloat16)

    def fold_b(b):
        return jnp.tile(b.reshape(1, -1), (1, FOLD)).astype(jnp.float32)

    w1f, b1f = fold_w(w1), fold_b(b1)   # [24, 256],  [1, 256]
    w2f, b2f = fold_w(w2), fold_b(b2)   # [256, 128], [1, 128]
    w3f, b3f = fold_w(w3), fold_b(b3)   # [128, 16],  [1, 16]

    bpr, tbr = bp // FOLD, tb // FOLD
    out_itemsize = jnp.dtype(out_dtype).itemsize
    flops = 2 * bp * (6 * 64 + 64 * 32 + 32 * 4)
    bytes_accessed = (bp * 6 * 4 + bp * 4 * out_itemsize
                      + (24 * 256 + 256 * 128 + 128 * 16) * 2
                      + (256 + 128 + 16) * 4)

    kernel = functools.partial(mlp_kernel, n_chunks=tbr // CHUNK, chunk=CHUNK)

    out_fold = pl.pallas_call(
        kernel,
        out_shape=jax.ShapeDtypeStruct((bpr, FOLD * 4), out_dtype),
        grid=(bp // tb,),
        in_specs=[
            pl.BlockSpec((tbr, FOLD * 6), lambda i: (i, 0)),      # x tile follows grid
            pl.BlockSpec((FOLD * 6, FOLD * 64), lambda i: (0, 0)),  # resident weights
            pl.BlockSpec((1, FOLD * 64), lambda i: (0, 0)),
            pl.BlockSpec((FOLD * 64, FOLD * 32), lambda i: (0, 0)),
            pl.BlockSpec((1, FOLD * 32), lambda i: (0, 0)),
            pl.BlockSpec((FOLD * 32, FOLD * 4), lambda i: (0, 0)),
            pl.BlockSpec((1, FOLD * 4), lambda i: (0, 0)),
        ],
        out_specs=pl.BlockSpec((tbr, FOLD * 4), lambda i: (i, 0)),
        compiler_params=pltpu.CompilerParams(
            dimension_semantics=("parallel",),
            vmem_limit_bytes=int(vmem_bytes * 0.9),
        ),
        cost_estimate=pl.CostEstimate(
            flops=flops, transcendentals=0, bytes_accessed=int(bytes_accessed)),
    )(x_fold, w1f, b1f, w2f, b2f, w3f, b3f)

    out = out_fold.reshape(bp, 4)       # free: row-major compatible
    return out if bp == B else out[:B]


def init_params(key):
    """PyTorch nn.Linear default init (uniform +-1/sqrt(fan_in)); weights [out, in]."""
    def linear(key, fan_in, fan_out):
        kw, kb = jax.random.split(key)
        bound = 1.0 / (fan_in ** 0.5)
        w = jax.random.uniform(kw, (fan_out, fan_in), jnp.float32, -bound, bound)
        b = jax.random.uniform(kb, (fan_out,), jnp.float32, -bound, bound)
        return w, b

    k1, k2, k3 = jax.random.split(key, 3)
    w1, b1 = linear(k1, 6, 64)
    w2, b2 = linear(k2, 64, 32)
    w3, b3 = linear(k3, 32, 4)
    return {"w1": w1, "b1": b1, "w2": w2, "b2": b2, "w3": w3, "b3": b3}


def reference_forward(x, p):
    """Pure-JAX reference mirroring the kernel's bf16-operand / f32-accumulate math."""
    bf = jnp.bfloat16
    h = jnp.dot(x.astype(bf), p["w1"].astype(bf).T,
                preferred_element_type=jnp.float32) + p["b1"]
    h = jnp.maximum(h, 0.0)
    h = jnp.dot(h.astype(bf), p["w2"].astype(bf).T,
                preferred_element_type=jnp.float32) + p["b2"]
    h = jnp.maximum(h, 0.0)
    return jnp.dot(h.astype(bf), p["w3"].astype(bf).T,
                   preferred_element_type=jnp.float32) + p["b3"]


if __name__ == "__main__":
    key = jax.random.PRNGKey(0)
    k_params, k_x = jax.random.split(key)

    params = init_params(k_params)
    B = 8
    x = jax.random.normal(k_x, (B, 6), jnp.float32)

    fwd = jax.jit(lambda xx, pp: custom_net_forward(xx, pp))
    out = jax.block_until_ready(fwd(x, params))

    ref = reference_forward(x, params)
    assert out.shape == (B, 4)
    assert bool(jnp.allclose(out, ref, atol=1e-2, rtol=1e-2)), "mismatch vs JAX reference"

    print("KERNEL_OK")
</pallas_src>

<mosaic_0001>
module attributes {stable_mosaic.version = 11 : i64} {
  func.func @mlp_kernel(%arg0: i32, %arg1: memref<1024x24xf32, #tpu.memory_space<vmem>>, %arg2: memref<24x256xbf16, #tpu.memory_space<vmem>>, %arg3: memref<1x256xf32, #tpu.memory_space<vmem>>, %arg4: memref<256x128xbf16, #tpu.memory_space<vmem>>, %arg5: memref<1x128xf32, #tpu.memory_space<vmem>>, %arg6: memref<128x16xbf16, #tpu.memory_space<vmem>>, %arg7: memref<1x16xf32, #tpu.memory_space<vmem>>, %arg8: memref<1024x16xf32, #tpu.memory_space<vmem>>) attributes {dimension_semantics = [#tpu.dimension_semantics<parallel>], iteration_bounds = array<i64: 1>, scalar_prefetch = 0 : i64, scratch_operands = 0 : i64, tpu.core_type = #tpu.core_type<tc>, window_params = [{transform_indices = @transform_0, window_bounds = array<i64: 1024, 24>}, {pipeline_mode = #tpu.pipeline_mode<synchronous>, transform_indices = @transform_1, window_bounds = array<i64: 24, 256>}, {pipeline_mode = #tpu.pipeline_mode<synchronous>, transform_indices = @transform_2, window_bounds = array<i64: 1, 256>}, {pipeline_mode = #tpu.pipeline_mode<synchronous>, transform_indices = @transform_3, window_bounds = array<i64: 256, 128>}, {pipeline_mode = #tpu.pipeline_mode<synchronous>, transform_indices = @transform_4, window_bounds = array<i64: 1, 128>}, {pipeline_mode = #tpu.pipeline_mode<synchronous>, transform_indices = @transform_5, window_bounds = array<i64: 128, 16>}, {pipeline_mode = #tpu.pipeline_mode<synchronous>, transform_indices = @transform_6, window_bounds = array<i64: 1, 16>}, {transform_indices = @transform_7, window_bounds = array<i64: 1024, 16>}]} {
    %c0 = arith.constant 0 : index
    %c0_0 = arith.constant 0 : index
    %0 = vector.load %arg2[%c0, %c0_0] : memref<24x256xbf16, #tpu.memory_space<vmem>>, vector<24x256xbf16>
    %c0_1 = arith.constant 0 : index
    %c0_2 = arith.constant 0 : index
    %1 = vector.load %arg3[%c0_1, %c0_2] : memref<1x256xf32, #tpu.memory_space<vmem>>, vector<1x256xf32>
    %c0_3 = arith.constant 0 : index
    %c0_4 = arith.constant 0 : index
    %2 = vector.load %arg4[%c0_3, %c0_4] : memref<256x128xbf16, #tpu.memory_space<vmem>>, vector<256x128xbf16>
    %c0_5 = arith.constant 0 : index
    %c0_6 = arith.constant 0 : index
    %3 = vector.load %arg5[%c0_5, %c0_6] : memref<1x128xf32, #tpu.memory_space<vmem>>, vector<1x128xf32>
    %c0_7 = arith.constant 0 : index
    %c0_8 = arith.constant 0 : index
    %4 = vector.load %arg6[%c0_7, %c0_8] : memref<128x16xbf16, #tpu.memory_space<vmem>>, vector<128x16xbf16>
    %c0_9 = arith.constant 0 : index
    %c0_10 = arith.constant 0 : index
    %5 = vector.load %arg7[%c0_9, %c0_10] : memref<1x16xf32, #tpu.memory_space<vmem>>, vector<1x16xf32>
    %c0_i32 = arith.constant 0 : i32
    %c1024_i32 = arith.constant 1024 : i32
    %6 = arith.muli %c0_i32, %c1024_i32 : i32
    %7 = tpu.assume_multiple %6, 1024 : i32
    %8 = arith.index_cast %7 : i32 to index
    %c0_11 = arith.constant 0 : index
    %9 = vector.load %arg1[%8, %c0_11] : memref<1024x24xf32, #tpu.memory_space<vmem>>, vector<1024x24xf32>
    %10 = arith.truncf %9 : vector<1024x24xf32> to vector<1024x24xbf16>
    %cst = arith.constant dense<0.000000e+00> : vector<1024x256xf32>
    %11 = tpu.matmul %10, %0, %cst {dimension_numbers = #tpu.dot_dimension_numbers<[1], [0], [0], [1], [0, 0, 1, 1], [], []>} : vector<1024x24xbf16>, vector<24x256xbf16>, vector<1024x256xf32> -> vector<1024x256xf32>
    %12 = vector.broadcast %1 : vector<1x256xf32> to vector<1024x256xf32>
    %13 = arith.addf %11, %12 : vector<1024x256xf32>
    %cst_12 = arith.constant 0.000000e+00 : f32
    %14 = vector.broadcast %cst_12 : f32 to vector<1024x256xf32>
    %15 = arith.maximumf %13, %14 : vector<1024x256xf32>
    %16 = arith.truncf %15 : vector<1024x256xf32> to vector<1024x256xbf16>
    %cst_13 = arith.constant dense<0.000000e+00> : vector<1024x128xf32>
    %17 = tpu.matmul %16, %2, %cst_13 {dimension_numbers = #tpu.dot_dimension_numbers<[1], [0], [0], [1], [0, 0, 1, 1], [], []>} : vector<1024x256xbf16>, vector<256x128xbf16>, vector<1024x128xf32> -> vector<1024x128xf32>
    %18 = vector.broadcast %3 : vector<1x128xf32> to vector<1024x128xf32>
    %19 = arith.addf %17, %18 : vector<1024x128xf32>
    %cst_14 = arith.constant 0.000000e+00 : f32
    %20 = vector.broadcast %cst_14 : f32 to vector<1024x128xf32>
    %21 = arith.maximumf %19, %20 : vector<1024x128xf32>
    %22 = arith.truncf %21 : vector<1024x128xf32> to vector<1024x128xbf16>
    %cst_15 = arith.constant dense<0.000000e+00> : vector<1024x16xf32>
    %23 = tpu.matmul %22, %4, %cst_15 {dimension_numbers = #tpu.dot_dimension_numbers<[1], [0], [0], [1], [0, 0, 1, 1], [], []>} : vector<1024x128xbf16>, vector<128x16xbf16>, vector<1024x16xf32> -> vector<1024x16xf32>
    %24 = vector.broadcast %5 : vector<1x16xf32> to vector<1024x16xf32>
    %25 = arith.addf %23, %24 : vector<1024x16xf32>
    %26 = arith.index_cast %7 : i32 to index
    %c0_16 = arith.constant 0 : index
    %27 = vector.load %arg8[%26, %c0_16] : memref<1024x16xf32, #tpu.memory_space<vmem>>, vector<1024x16xf32>
    tpu.vector_store %arg8[%26, %c0_16], %25 {strides = array<i32>} : memref<1024x16xf32, #tpu.memory_space<vmem>>, vector<1024x16xf32>,
    %c1_i32 = arith.constant 1 : i32
    return
  }
  func.func @transform_0(%arg0: i32) -> (i32, i32) {
    %c0_i32 = arith.constant 0 : i32
    %c0_i32_0 = arith.constant 0 : i32
    return %arg0, %c0_i32 : i32, i32
  }
  func.func @transform_1(%arg0: i32) -> (i32, i32) {
    %c0_i32 = arith.constant 0 : i32
    %c0_i32_0 = arith.constant 0 : i32
    %c0_i32_1 = arith.constant 0 : i32
    return %c0_i32, %c0_i32_0 : i32, i32
  }
  func.func @transform_2(%arg0: i32) -> (i32, i32) {
    %c0_i32 = arith.constant 0 : i32
    %c0_i32_0 = arith.constant 0 : i32
    %c0_i32_1 = arith.constant 0 : i32
    return %c0_i32, %c0_i32_0 : i32, i32
  }
  func.func @transform_3(%arg0: i32) -> (i32, i32) {
    %c0_i32 = arith.constant 0 : i32
    %c0_i32_0 = arith.constant 0 : i32
    %c0_i32_1 = arith.constant 0 : i32
    return %c0_i32, %c0_i32_0 : i32, i32
  }
  func.func @transform_4(%arg0: i32) -> (i32, i32) {
    %c0_i32 = arith.constant 0 : i32
    %c0_i32_0 = arith.constant 0 : i32
    %c0_i32_1 = arith.constant 0 : i32
    return %c0_i32, %c0_i32_0 : i32, i32
  }
  func.func @transform_5(%arg0: i32) -> (i32, i32) {
    %c0_i32 = arith.constant 0 : i32
    %c0_i32_0 = arith.constant 0 : i32
    %c0_i32_1 = arith.constant 0 : i32
    return %c0_i32, %c0_i32_0 : i32, i32
  }
  func.func @transform_6(%arg0: i32) -> (i32, i32) {
    %c0_i32 = arith.constant 0 : i32
    %c0_i32_0 = arith.constant 0 : i32
    %c0_i32_1 = arith.constant 0 : i32
    return %c0_i32, %c0_i32_0 : i32, i32
  }
  func.func @transform_7(%arg0: i32) -> (i32, i32) {
    %c0_i32 = arith.constant 0 : i32
    %c0_i32_0 = arith.constant 0 : i32
    return %arg0, %c0_i32 : i32, i32
  }
}

</mosaic_0001>

<llo_original>
// kernel: _lambda_.1
$region0: #{_lambda_.1}
  #allocation0 [shape = 'u32[]', space=smem, size = 0x4, offset = 0x4, fixed_abs, tag = 'smem constant byte address 0x4 - core index']
  #allocation1 [shape = 'u32[144,128]{1,0:T(1,128)}', space=vmem, size = 0x12000, scoped, tag = 'internal scratch']
  %s0 = inlined_call_operand.vmem [shape: f32[1024,24], index: 0, kind: input, shape index: {}]
  %s1 = inlined_call_operand.vmem [shape: bf16[24,256], index: 1, kind: input, shape index: {}]
  %s2 = inlined_call_operand.vmem [shape: f32[1,256], index: 2, kind: input, shape index: {}]
  %s3 = inlined_call_operand.vmem [shape: bf16[256,128], index: 3, kind: input, shape index: {}]
  %s4 = inlined_call_operand.vmem [shape: f32[1,128], index: 4, kind: input, shape index: {}]
  %s5 = inlined_call_operand.vmem [shape: bf16[128,16], index: 5, kind: input, shape index: {}]
  %s6 = inlined_call_operand.vmem [shape: f32[1,16], index: 6, kind: input, shape index: {}]
  %s7 = inlined_call_operand.vmem [shape: f32[1024,16], index: 7, kind: output, shape index: {}]
  %s8 = sld [smem:[#allocation0]]
  $region38: #{_lambda_.1} parent=0
    _
  %s10 = ssub.s32 1, %s8
  %s11 = scalar_select 0, %s10, %s8
  // Predicated region
  $region2: #{_lambda_.1} parent=0 // pred_check
    _
  $region3: #{_lambda_.1} parent=0 // pred_check_branch
    %13 = sbr.rel (0) target = $region5
  $region4: #{_lambda_.1} parent=0 // pred_region
    _
  $region5: #{_lambda_.1} parent=0 // pred_fallthru
    _
  // Predicated region
  $region6: #{_lambda_.1} parent=0 // pred_check
    _
  $region7: #{_lambda_.1} parent=0 // pred_check_branch
    %15 = sbr.rel (0) target = $region9
  $region8: #{_lambda_.1} parent=0 // pred_region
    _
  $region9: #{_lambda_.1} parent=0 // pred_fallthru
    _
  // Predicated region
  $region10: #{_lambda_.1} parent=0 // pred_check
    _
  $region11: #{_lambda_.1} parent=0 // pred_check_branch
    %17 = sbr.rel (0) target = $region13
  $region12: #{_lambda_.1} parent=0 // pred_region
    _
  $region13: #{_lambda_.1} parent=0 // pred_fallthru
    _
  // Predicated region
  $region14: #{_lambda_.1} parent=0 // pred_check
    _
  $region15: #{_lambda_.1} parent=0 // pred_check_branch
    %19 = sbr.rel (0) target = $region17
  $region16: #{_lambda_.1} parent=0 // pred_region
    _
  $region17: #{_lambda_.1} parent=0 // pred_fallthru
    _
  // Predicated region
  $region18: #{_lambda_.1} parent=0 // pred_check
    _
  $region19: #{_lambda_.1} parent=0 // pred_check_branch
    %21 = sbr.rel (0) target = $region21
  $region20: #{_lambda_.1} parent=0 // pred_region
    _
  $region21: #{_lambda_.1} parent=0 // pred_fallthru
    _
  // Predicated region
  $region22: #{_lambda_.1} parent=0 // pred_check
    _
  $region23: #{_lambda_.1} parent=0 // pred_check_branch
    %23 = sbr.rel (0) target = $region25
  $region24: #{_lambda_.1} parent=0 // pred_region
    _
  $region25: #{_lambda_.1} parent=0 // pred_fallthru
    _
  // Predicated region
  $region26: #{_lambda_.1} parent=0 // pred_check
    _
  $region27: #{_lambda_.1} parent=0 // pred_check_branch
    %25 = sbr.rel (0) target = $region29
  $region28: #{_lambda_.1} parent=0 // pred_region
    _
  $region29: #{_lambda_.1} parent=0 // pred_fallthru
    _
  %v27 = vld [vmem:[%s1] sm:$0xff]
  %v28 = vld [vmem:[%s1 + $0x8] sm:$0xff]
  %v29 = vld [vmem:[%s1 + $0x10] sm:$0xff]
  %v30 = vld [vmem:[%s2] sm:$0x3]
  %v31 = vld [vmem:[%s3] sm:$0xf]
  %v32 = vld [vmem:[%s3 + $0x4] sm:$0xf]
  %v33 = vld [vmem:[%s3 + $0x8] sm:$0xf]
  %v34 = vld [vmem:[%s3 + $0xc] sm:$0xf]
  %v35 = vld [vmem:[%s3 + $0x10] sm:$0xf]
  %v36 = vld [vmem:[%s3 + $0x14] sm:$0xf]
  %v37 = vld [vmem:[%s3 + $0x18] sm:$0xf]
  %v38 = vld [vmem:[%s3 + $0x1c] sm:$0xf]
  %v39 = vld [vmem:[%s3 + $0x20] sm:$0xf]
  %v40 = vld [vmem:[%s3 + $0x24] sm:$0xf]
  %v41 = vld [vmem:[%s3 + $0x28] sm:$0xf]
  %v42 = vld [vmem:[%s3 + $0x2c] sm:$0xf]
  %v43 = vld [vmem:[%s3 + $0x30] sm:$0xf]
  %v44 = vld [vmem:[%s3 + $0x34] sm:$0xf]
  %v45 = vld [vmem:[%s3 + $0x38] sm:$0xf]
  %v46 = vld [vmem:[%s3 + $0x3c] sm:$0xf]
  %v47 = vld [vmem:[%s3 + $0x40] sm:$0xf]
  %v48 = vld [vmem:[%s3 + $0x44] sm:$0xf]
  %v49 = vld [vmem:[%s3 + $0x48] sm:$0xf]
  %v50 = vld [vmem:[%s3 + $0x4c] sm:$0xf]
  %v51 = vld [vmem:[%s3 + $0x50] sm:$0xf]
  %v52 = vld [vmem:[%s3 + $0x54] sm:$0xf]
  %v53 = vld [vmem:[%s3 + $0x58] sm:$0xf]
  %v54 = vld [vmem:[%s3 + $0x5c] sm:$0xf]
  %v55 = vld [vmem:[%s3 + $0x60] sm:$0xf]
  %v56 = vld [vmem:[%s3 + $0x64] sm:$0xf]
  %v57 = vld [vmem:[%s3 + $0x68] sm:$0xf]
  %v58 = vld [vmem:[%s3 + $0x6c] sm:$0xf]
  %v59 = vld [vmem:[%s3 + $0x70] sm:$0xf]
  %v60 = vld [vmem:[%s3 + $0x74] sm:$0xf]
  %v61 = vld [vmem:[%s3 + $0x78] sm:$0xf]
  %v62 = vld [vmem:[%s3 + $0x7c] sm:$0xf]
  %v63 = vld [vmem:[%s4] sm:$0x1]
  %v64 = vld [vmem:[%s5] sm:$0xf]
  %v65 = vld [vmem:[%s5 + $0x4] sm:$0xf]
  %v66 = vld [vmem:[%s5 + $0x8] sm:$0xf]
  %v67 = vld [vmem:[%s5 + $0xc] sm:$0xf]
  %v68 = vld [vmem:[%s5 + $0x10] sm:$0xf]
  %v69 = vld [vmem:[%s5 + $0x14] sm:$0xf]
  %v70 = vld [vmem:[%s5 + $0x18] sm:$0xf]
  %v71 = vld [vmem:[%s5 + $0x1c] sm:$0xf]
  %v72 = vld [vmem:[%s5 + $0x20] sm:$0xf]
  %v73 = vld [vmem:[%s5 + $0x24] sm:$0xf]
  %v74 = vld [vmem:[%s5 + $0x28] sm:$0xf]
  %v75 = vld [vmem:[%s5 + $0x2c] sm:$0xf]
  %v76 = vld [vmem:[%s5 + $0x30] sm:$0xf]
  %v77 = vld [vmem:[%s5 + $0x34] sm:$0xf]
  %v78 = vld [vmem:[%s5 + $0x38] sm:$0xf]
  %v79 = vld [vmem:[%s5 + $0x3c] sm:$0xf]
  %v80 = vld [vmem:[%s6] sm:$0x1]
  %v81 = vld [vmem:[%s0] sm:$0xff]
  %v82 = vld [vmem:[%s0 + $0x8] sm:$0xff]
  %v83 = vld [vmem:[%s0 + $0x10] sm:$0xff]
  %v84 = vld [vmem:[%s0 + $0x18] sm:$0xff]
  %v85 = vld [vmem:[%s0 + $0x20] sm:$0xff]
  %v86 = vld [vmem:[%s0 + $0x28] sm:$0xff]
  %v87 = vld [vmem:[%s0 + $0x30] sm:$0xff]
  %v88 = vld [vmem:[%s0 + $0x38] sm:$0xff]
  %v89 = vld [vmem:[%s0 + $0x40] sm:$0xff]
  %v90 = vld [vmem:[%s0 + $0x48] sm:$0xff]
  %v91 = vld [vmem:[%s0 + $0x50] sm:$0xff]
  %v92 = vld [vmem:[%s0 + $0x58] sm:$0xff]
  %v93 = vld [vmem:[%s0 + $0x60] sm:$0xff]
  %v94 = vld [vmem:[%s0 + $0x68] sm:$0xff]
  %v95 = vld [vmem:[%s0 + $0x70] sm:$0xff]
  %v96 = vld [vmem:[%s0 + $0x78] sm:$0xff]
  %v97 = vld [vmem:[%s0 + $0x80] sm:$0xff]
  %v98 = vld [vmem:[%s0 + $0x88] sm:$0xff]
  %v99 = vld [vmem:[%s0 + $0x90] sm:$0xff]
  %v100 = vld [vmem:[%s0 + $0x98] sm:$0xff]
  %v101 = vld [vmem:[%s0 + $0xa0] sm:$0xff]
  %v102 = vld [vmem:[%s0 + $0xa8] sm:$0xff]
  %v103 = vld [vmem:[%s0 + $0xb0] sm:$0xff]
  %v104 = vld [vmem:[%s0 + $0xb8] sm:$0xff]
  %v105 = vld [vmem:[%s0 + $0xc0] sm:$0xff]
  %v106 = vld [vmem:[%s0 + $0xc8] sm:$0xff]
  %v107 = vld [vmem:[%s0 + $0xd0] sm:$0xff]
  %v108 = vld [vmem:[%s0 + $0xd8] sm:$0xff]
  %v109 = vld [vmem:[%s0 + $0xe0] sm:$0xff]
  %v110 = vld [vmem:[%s0 + $0xe8] sm:$0xff]
  %v111 = vld [vmem:[%s0 + $0xf0] sm:$0xff]
  %v112 = vld [vmem:[%s0 + $0xf8] sm:$0xff]
  %v113 = vld [vmem:[%s0 + $0x100] sm:$0xff]
  %v114 = vld [vmem:[%s0 + $0x108] sm:$0xff]
  %v115 = vld [vmem:[%s0 + $0x110] sm:$0xff]
  %v116 = vld [vmem:[%s0 + $0x118] sm:$0xff]
  %v117 = vld [vmem:[%s0 + $0x120] sm:$0xff]
  %v118 = vld [vmem:[%s0 + $0x128] sm:$0xff]
  %v119 = vld [vmem:[%s0 + $0x130] sm:$0xff]
  %v120 = vld [vmem:[%s0 + $0x138] sm:$0xff]
  %v121 = vld [vmem:[%s0 + $0x140] sm:$0xff]
  %v122 = vld [vmem:[%s0 + $0x148] sm:$0xff]
  %v123 = vld [vmem:[%s0 + $0x150] sm:$0xff]
  %v124 = vld [vmem:[%s0 + $0x158] sm:$0xff]
  %v125 = vld [vmem:[%s0 + $0x160] sm:$0xff]
  %v126 = vld [vmem:[%s0 + $0x168] sm:$0xff]
  %v127 = vld [vmem:[%s0 + $0x170] sm:$0xff]
  %v128 = vld [vmem:[%s0 + $0x178] sm:$0xff]
  %v129 = vld [vmem:[%s0 + $0x180] sm:$0xff]
  %v130 = vld [vmem:[%s0 + $0x188] sm:$0xff]
  %v131 = vld [vmem:[%s0 + $0x190] sm:$0xff]
  %v132 = vld [vmem:[%s0 + $0x198] sm:$0xff]
  %v133 = vld [vmem:[%s0 + $0x1a0] sm:$0xff]
  %v134 = vld [vmem:[%s0 + $0x1a8] sm:$0xff]
  %v135 = vld [vmem:[%s0 + $0x1b0] sm:$0xff]
  %v136 = vld [vmem:[%s0 + $0x1b8] sm:$0xff]
  %v137 = vld [vmem:[%s0 + $0x1c0] sm:$0xff]
  %v138 = vld [vmem:[%s0 + $0x1c8] sm:$0xff]
  %v139 = vld [vmem:[%s0 + $0x1d0] sm:$0xff]
  %v140 = vld [vmem:[%s0 + $0x1d8] sm:$0xff]
  %v141 = vld [vmem:[%s0 + $0x1e0] sm:$0xff]
  %v142 = vld [vmem:[%s0 + $0x1e8] sm:$0xff]
  %v143 = vld [vmem:[%s0 + $0x1f0] sm:$0xff]
  %v144 = vld [vmem:[%s0 + $0x1f8] sm:$0xff]
  %v145 = vld [vmem:[%s0 + $0x200] sm:$0xff]
  %v146 = vld [vmem:[%s0 + $0x208] sm:$0xff]
  %v147 = vld [vmem:[%s0 + $0x210] sm:$0xff]
  %v148 = vld [vmem:[%s0 + $0x218] sm:$0xff]
  %v149 = vld [vmem:[%s0 + $0x220] sm:$0xff]
  %v150 = vld [vmem:[%s0 + $0x228] sm:$0xff]
  %v151 = vld [vmem:[%s0 + $0x230] sm:$0xff]
  %v152 = vld [vmem:[%s0 + $0x238] sm:$0xff]
  %v153 = vld [vmem:[%s0 + $0x240] sm:$0xff]
  %v154 = vld [vmem:[%s0 + $0x248] sm:$0xff]
  %v155 = vld [vmem:[%s0 + $0x250] sm:$0xff]
  %v156 = vld [vmem:[%s0 + $0x258] sm:$0xff]
  %v157 = vld [vmem:[%s0 + $0x260] sm:$0xff]
  %v158 = vld [vmem:[%s0 + $0x268] sm:$0xff]
  %v159 = vld [vmem:[%s0 + $0x270] sm:$0xff]
  %v160 = vld [vmem:[%s0 + $0x278] sm:$0xff]
  %v161 = vld [vmem:[%s0 + $0x280] sm:$0xff]
  %v162 = vld [vmem:[%s0 + $0x288] sm:$0xff]
  %v163 = vld [vmem:[%s0 + $0x290] sm:$0xff]
  %v164 = vld [vmem:[%s0 + $0x298] sm:$0xff]
  %v165 = vld [vmem:[%s0 + $0x2a0] sm:$0xff]
  %v166 = vld [vmem:[%s0 + $0x2a8] sm:$0xff]
  %v167 = vld [vmem:[%s0 + $0x2b0] sm:$0xff]
  %v168 = vld [vmem:[%s0 + $0x2b8] sm:$0xff]
  %v169 = vld [vmem:[%s0 + $0x2c0] sm:$0xff]
  %v170 = vld [vmem:[%s0 + $0x2c8] sm:$0xff]
  %v171 = vld [vmem:[%s0 + $0x2d0] sm:$0xff]
  %v172 = vld [vmem:[%s0 + $0x2d8] sm:$0xff]
  %v173 = vld [vmem:[%s0 + $0x2e0] sm:$0xff]
  %v174 = vld [vmem:[%s0 + $0x2e8] sm:$0xff]
  %v175 = vld [vmem:[%s0 + $0x2f0] sm:$0xff]
  %v176 = vld [vmem:[%s0 + $0x2f8] sm:$0xff]
  %v177 = vld [vmem:[%s0 + $0x300] sm:$0xff]
  %v178 = vld [vmem:[%s0 + $0x308] sm:$0xff]
  %v179 = vld [vmem:[%s0 + $0x310] sm:$0xff]
  %v180 = vld [vmem:[%s0 + $0x318] sm:$0xff]
  %v181 = vld [vmem:[%s0 + $0x320] sm:$0xff]
  %v182 = vld [vmem:[%s0 + $0x328] sm:$0xff]
  %v183 = vld [vmem:[%s0 + $0x330] sm:$0xff]
  %v184 = vld [vmem:[%s0 + $0x338] sm:$0xff]
  %v185 = vld [vmem:[%s0 + $0x340] sm:$0xff]
  %v186 = vld [vmem:[%s0 + $0x348] sm:$0xff]
  %v187 = vld [vmem:[%s0 + $0x350] sm:$0xff]
  %v188 = vld [vmem:[%s0 + $0x358] sm:$0xff]
  %v189 = vld [vmem:[%s0 + $0x360] sm:$0xff]
  %v190 = vld [vmem:[%s0 + $0x368] sm:$0xff]
  %v191 = vld [vmem:[%s0 + $0x370] sm:$0xff]
  %v192 = vld [vmem:[%s0 + $0x378] sm:$0xff]
  %v193 = vld [vmem:[%s0 + $0x380] sm:$0xff]
  %v194 = vld [vmem:[%s0 + $0x388] sm:$0xff]
  %v195 = vld [vmem:[%s0 + $0x390] sm:$0xff]
  %v196 = vld [vmem:[%s0 + $0x398] sm:$0xff]
  %v197 = vld [vmem:[%s0 + $0x3a0] sm:$0xff]
  %v198 = vld [vmem:[%s0 + $0x3a8] sm:$0xff]
  %v199 = vld [vmem:[%s0 + $0x3b0] sm:$0xff]
  %v200 = vld [vmem:[%s0 + $0x3b8] sm:$0xff]
  %v201 = vld [vmem:[%s0 + $0x3c0] sm:$0xff]
  %v202 = vld [vmem:[%s0 + $0x3c8] sm:$0xff]
  %v203 = vld [vmem:[%s0 + $0x3d0] sm:$0xff]
  %v204 = vld [vmem:[%s0 + $0x3d8] sm:$0xff]
  %v205 = vld [vmem:[%s0 + $0x3e0] sm:$0xff]
  %v206 = vld [vmem:[%s0 + $0x3e8] sm:$0xff]
  %v207 = vld [vmem:[%s0 + $0x3f0] sm:$0xff]
  %v208 = vld [vmem:[%s0 + $0x3f8] sm:$0xff]
  %v209 = vpack.c.bf16 %v82, %v81
  %v210 = vpack.c.bf16 %v84, %v83
  %v211 = vpack.c.bf16 %v86, %v85
  %v212 = vpack.c.bf16 %v88, %v87
  %v213 = vpack.c.bf16 %v90, %v89
  %v214 = vpack.c.bf16 %v92, %v91
  %v215 = vpack.c.bf16 %v94, %v93
  %v216 = vpack.c.bf16 %v96, %v95
  %v217 = vpack.c.bf16 %v98, %v97
  %v218 = vpack.c.bf16 %v100, %v99
  %v219 = vpack.c.bf16 %v102, %v101
  %v220 = vpack.c.bf16 %v104, %v103
  %v221 = vpack.c.bf16 %v106, %v105
  %v222 = vpack.c.bf16 %v108, %v107
  %v223 = vpack.c.bf16 %v110, %v109
  %v224 = vpack.c.bf16 %v112, %v111
  %v225 = vpack.c.bf16 %v114, %v113
  %v226 = vpack.c.bf16 %v116, %v115
  %v227 = vpack.c.bf16 %v118, %v117
  %v228 = vpack.c.bf16 %v120, %v119
  %v229 = vpack.c.bf16 %v122, %v121
  %v230 = vpack.c.bf16 %v124, %v123
  %v231 = vpack.c.bf16 %v126, %v125
  %v232 = vpack.c.bf16 %v128, %v127
  %v233 = vpack.c.bf16 %v130, %v129
  %v234 = vpack.c.bf16 %v132, %v131
  %v235 = vpack.c.bf16 %v134, %v133
  %v236 = vpack.c.bf16 %v136, %v135
  %v237 = vpack.c.bf16 %v138, %v137
  %v238 = vpack.c.bf16 %v140, %v139
  %v239 = vpack.c.bf16 %v142, %v141
  %v240 = vpack.c.bf16 %v144, %v143
  %v241 = vpack.c.bf16 %v146, %v145
  %v242 = vpack.c.bf16 %v148, %v147
  %v243 = vpack.c.bf16 %v150, %v149
  %v244 = vpack.c.bf16 %v152, %v151
  %v245 = vpack.c.bf16 %v154, %v153
  %v246 = vpack.c.bf16 %v156, %v155
  %v247 = vpack.c.bf16 %v158, %v157
  %v248 = vpack.c.bf16 %v160, %v159
  %v249 = vpack.c.bf16 %v162, %v161
  %v250 = vpack.c.bf16 %v164, %v163
  %v251 = vpack.c.bf16 %v166, %v165
  %v252 = vpack.c.bf16 %v168, %v167
  %v253 = vpack.c.bf16 %v170, %v169
  %v254 = vpack.c.bf16 %v172, %v171
  %v255 = vpack.c.bf16 %v174, %v173
  %v256 = vpack.c.bf16 %v176, %v175
  %v257 = vpack.c.bf16 %v178, %v177
  %v258 = vpack.c.bf16 %v180, %v179
  %v259 = vpack.c.bf16 %v182, %v181
  %v260 = vpack.c.bf16 %v184, %v183
  %v261 = vpack.c.bf16 %v186, %v185
  %v262 = vpack.c.bf16 %v188, %v187
  %v263 = vpack.c.bf16 %v190, %v189
  %v264 = vpack.c.bf16 %v192, %v191
  %v265 = vpack.c.bf16 %v194, %v193
  %v266 = vpack.c.bf16 %v196, %v195
  %v267 = vpack.c.bf16 %v198, %v197
  %v268 = vpack.c.bf16 %v200, %v199
  %v269 = vpack.c.bf16 %v202, %v201
  %v270 = vpack.c.bf16 %v204, %v203
  %v271 = vpack.c.bf16 %v206, %v205
  %v272 = vpack.c.bf16 %v208, %v207
  %v274 = vlaneseq
  %v275 = vshrl.u32 %v274, 7
  %v276 = vsub.s32 0, %v275
  %v277 = vrot.slane %v30, %v276
  %v278 = vlaneseq
  %v279 = vshrl.u32 %v278, 7
  %v280 = vsub.s32 1, %v279
  %v281 = vrot.slane %v30, %v280
  %v287 = vunpack.c.l.b16 %v27
  %v288 = vunpack.c.h.b16 %v27
  %v289 = vunpack.c.l.b16 %v28
  %v290 = vunpack.c.h.b16 %v28
  %v291 = vunpack.c.l.b16 %v29
  %v292 = vunpack.c.h.b16 %v29
  %v293 = vpack.c.b16 %v289, %v287
  %v294 = vpack.c.b16 %v290, %v288
  %v295 = vpack.c.b16 %v291, %v291
  %v296 = vpack.c.b16 %v292, %v292
  %vm299 = vcmask 195584
  %v301 = vsel %vm299, %v209, 0
  %v304 = vsel %vm299, %v210, 0
  %v307 = vsel %vm299, %v211, 0
  %v310 = vsel %vm299, %v212, 0
  %v313 = vsel %vm299, %v213, 0
  %v316 = vsel %vm299, %v214, 0
  %v319 = vsel %vm299, %v215, 0
  %v322 = vsel %vm299, %v216, 0
  %v325 = vsel %vm299, %v217, 0
  %v328 = vsel %vm299, %v218, 0
  %v331 = vsel %vm299, %v219, 0
  %v334 = vsel %vm299, %v220, 0
  %v337 = vsel %vm299, %v221, 0
  %v340 = vsel %vm299, %v222, 0
  %v343 = vsel %vm299, %v223, 0
  %v346 = vsel %vm299, %v224, 0
  %v349 = vsel %vm299, %v225, 0
  %v352 = vsel %vm299, %v226, 0
  %v355 = vsel %vm299, %v227, 0
  %v358 = vsel %vm299, %v228, 0
  %v361 = vsel %vm299, %v229, 0
  %v364 = vsel %vm299, %v230, 0
  %v367 = vsel %vm299, %v231, 0
  %v370 = vsel %vm299, %v232, 0
  %v373 = vsel %vm299, %v233, 0
  %v376 = vsel %vm299, %v234, 0
  %v379 = vsel %vm299, %v235, 0
  %v382 = vsel %vm299, %v236, 0
  %v385 = vsel %vm299, %v237, 0
  %v388 = vsel %vm299, %v238, 0
  %v391 = vsel %vm299, %v239, 0
  %v394 = vsel %vm299, %v240, 0
  %v397 = vsel %vm299, %v241, 0
  %v400 = vsel %vm299, %v242, 0
  %v403 = vsel %vm299, %v243, 0
  %v406 = vsel %vm299, %v244, 0
  %v409 = vsel %vm299, %v245, 0
  %v412 = vsel %vm299, %v246, 0
  %v415 = vsel %vm299, %v247, 0
  %v418 = vsel %vm299, %v248, 0
  %v421 = vsel %vm299, %v249, 0
  %v424 = vsel %vm299, %v250, 0
  %v427 = vsel %vm299, %v251, 0
  %v430 = vsel %vm299, %v252, 0
  %v433 = vsel %vm299, %v253, 0
  %v436 = vsel %vm299, %v254, 0
  %v439 = vsel %vm299, %v255, 0
  %v442 = vsel %vm299, %v256, 0
  %v445 = vsel %vm299, %v257, 0
  %v448 = vsel %vm299, %v258, 0
  %v451 = vsel %vm299, %v259, 0
  %v454 = vsel %vm299, %v260, 0
  %v457 = vsel %vm299, %v261, 0
  %v460 = vsel %vm299, %v262, 0
  %v463 = vsel %vm299, %v263, 0
  %v466 = vsel %vm299, %v264, 0
  %v469 = vsel %vm299, %v265, 0
  %v472 = vsel %vm299, %v266, 0
  %v475 = vsel %vm299, %v267, 0
  %v478 = vsel %vm299, %v268, 0
  %v481 = vsel %vm299, %v269, 0
  %v484 = vsel %vm299, %v270, 0
  %v487 = vsel %vm299, %v271, 0
  %v490 = vsel %vm299, %v272, 0
  %vm492 = vcmask 1043456
  %v494 = vsel %vm492, %v295, 0
  %v497 = vsel %vm492, %v296, 0
  %499 = vmatprep.subr.bf16.mxu0 %v294
  %500 = vmatpush1.bf16.msra.mxu0 %v293
  %501 = vmatprep.subr.bf16.mxu0 %v497
  %502 = vmatpush1.bf16.msra.mxu0 %v494
  %503 = vmatprep.subr.bf16.mxu0 0
  %504 = vmatpush1.bf16.msra.mxu0 0
  %505 = vmatprep.subr.bf16.mxu0 0
  %506 = vmatpush1.bf16.msra.mxu0 0
  %507 = vmatprep.subr.bf16.mxu0 0
  %508 = vmatpush1.bf16.msra.mxu0 0
  %509 = vmatprep.subr.bf16.mxu0 0
  %510 = vmatpush1.bf16.msra.mxu0 0
  %511 = vmatprep.subr.bf16.mxu0 0
  %512 = vmatpush1.bf16.msra.mxu0 0
  %513 = vmatprep.subr.bf16.mxu0 0
  %514 = vmatpush1.bf16.msra.mxu0 0
  %515 = vmatprep.subr.bf16.mxu0 0
  %516 = vmatpush1.bf16.msra.mxu0 0
  %517 = vmatprep.subr.bf16.mxu0 0
  %518 = vmatpush1.bf16.msra.mxu0 0
  %519 = vmatprep.subr.bf16.mxu0 0
  %520 = vmatpush1.bf16.msra.mxu0 0
  %521 = vmatprep.subr.bf16.mxu0 0
  %522 = vmatpush1.bf16.msra.mxu0 0
  %523 = vmatprep.subr.bf16.mxu0 0
  %524 = vmatpush1.bf16.msra.mxu0 0
  %525 = vmatprep.subr.bf16.mxu0 0
  %526 = vmatpush1.bf16.msra.mxu0 0
  %527 = vmatprep.subr.bf16.mxu0 0
  %528 = vmatpush1.bf16.msra.mxu0 0
  %529 = vmatprep.subr.bf16.mxu0 0
  %530 = vmatpush1.bf16.msra.mxu0 0
  %531 = vmatprep.mubr.bf16.mxu0 0
  %532 = vmatmul.mubr.bf16.gmra.mrb[0].mxu0 %v301
  %v533 = vpop.f32.mrb[0].mxu0
  %v534 = vadd.f32 %v277, %v533
  %v535 = vpop.f32.mrb[0].mxu0
  %v536 = vadd.f32 %v281, %v535
  %v537 = vpop.f32.mrb[0].mxu0
  %v538 = vadd.f32 %v277, %v537
  %v539 = vpop.f32.mrb[0].mxu0
  %v540 = vadd.f32 %v281, %v539
  %541 = vmatprep.mubr.bf16.mxu0 0
  %542 = vmatmul.mubr.bf16.gmra.mrb[0].mxu0 %v304
  %v543 = vpop.f32.mrb[0].mxu0
  %v544 = vadd.f32 %v277, %v543
  %v545 = vpop.f32.mrb[0].mxu0
  %v546 = vadd.f32 %v281, %v545
  %v547 = vpop.f32.mrb[0].mxu0
  %v548 = vadd.f32 %v277, %v547
  %v549 = vpop.f32.mrb[0].mxu0
  %v550 = vadd.f32 %v281, %v549
  %551 = vmatprep.mubr.bf16.mxu0 0
  %552 = vmatmul.mubr.bf16.gmra.mrb[0].mxu0 %v307
  %v553 = vpop.f32.mrb[0].mxu0
  %v554 = vadd.f32 %v277, %v553
  %v555 = vpop.f32.mrb[0].mxu0
  %v556 = vadd.f32 %v281, %v555
  %v557 = vpop.f32.mrb[0].mxu0
  %v558 = vadd.f32 %v277, %v557
  %v559 = vpop.f32.mrb[0].mxu0
  %v560 = vadd.f32 %v281, %v559
  %561 = vmatprep.mubr.bf16.mxu0 0
  %562 = vmatmul.mubr.bf16.gmra.mrb[0].mxu0 %v310
  %v563 = vpop.f32.mrb[0].mxu0
  %v564 = vadd.f32 %v277, %v563
  %v565 = vpop.f32.mrb[0].mxu0
  %v566 = vadd.f32 %v281, %v565
  %v567 = vpop.f32.mrb[0].mxu0
  %v568 = vadd.f32 %v277, %v567
  %v569 = vpop.f32.mrb[0].mxu0
  %v570 = vadd.f32 %v281, %v569
  %571 = vmatprep.mubr.bf16.mxu0 0
  %572 = vmatmul.mubr.bf16.gmra.mrb[0].mxu0 %v313
  %v573 = vpop.f32.mrb[0].mxu0
  %v574 = vadd.f32 %v277, %v573
  %v575 = vpop.f32.mrb[0].mxu0
  %v576 = vadd.f32 %v281, %v575
  %v577 = vpop.f32.mrb[0].mxu0
  %v578 = vadd.f32 %v277, %v577
  %v579 = vpop.f32.mrb[0].mxu0
  %v580 = vadd.f32 %v281, %v579
  %581 = vmatprep.mubr.bf16.mxu0 0
  %582 = vmatmul.mubr.bf16.gmra.mrb[0].mxu0 %v316
  %v583 = vpop.f32.mrb[0].mxu0
  %v584 = vadd.f32 %v277, %v583
  %v585 = vpop.f32.mrb[0].mxu0
  %v586 = vadd.f32 %v281, %v585
  %v587 = vpop.f32.mrb[0].mxu0
  %v588 = vadd.f32 %v277, %v587
  %v589 = vpop.f32.mrb[0].mxu0
  %v590 = vadd.f32 %v281, %v589
  %591 = vmatprep.mubr.bf16.mxu0 0
  %592 = vmatmul.mubr.bf16.gmra.mrb[0].mxu0 %v319
  %v593 = vpop.f32.mrb[0].mxu0
  %v594 = vadd.f32 %v277, %v593
  %v595 = vpop.f32.mrb[0].mxu0
  %v596 = vadd.f32 %v281, %v595
  %v597 = vpop.f32.mrb[0].mxu0
  %v598 = vadd.f32 %v277, %v597
  %v599 = vpop.f32.mrb[0].mxu0
  %v600 = vadd.f32 %v281, %v599
  %601 = vmatprep.mubr.bf16.mxu0 0
  %602 = vmatmul.mubr.bf16.gmra.mrb[0].mxu0 %v322
  %v603 = vpop.f32.mrb[0].mxu0
  %v604 = vadd.f32 %v277, %v603
  %v605 = vpop.f32.mrb[0].mxu0
  %v606 = vadd.f32 %v281, %v605
  %v607 = vpop.f32.mrb[0].mxu0
  %v608 = vadd.f32 %v277, %v607
  %v609 = vpop.f32.mrb[0].mxu0
  %v610 = vadd.f32 %v281, %v609
  %611 = vmatprep.mubr.bf16.mxu0 0
  %612 = vmatmul.mubr.bf16.gmra.mrb[0].mxu0 %v325
  %v613 = vpop.f32.mrb[0].mxu0
  %v614 = vadd.f32 %v277, %v613
  %v615 = vpop.f32.mrb[0].mxu0
  %v616 = vadd.f32 %v281, %v615
  %v617 = vpop.f32.mrb[0].mxu0
  %v618 = vadd.f32 %v277, %v617
  %v619 = vpop.f32.mrb[0].mxu0
  %v620 = vadd.f32 %v281, %v619
  %621 = vmatprep.mubr.bf16.mxu0 0
  %622 = vmatmul.mubr.bf16.gmra.mrb[0].mxu0 %v328
  %v623 = vpop.f32.mrb[0].mxu0
  %v624 = vadd.f32 %v277, %v623
  %v625 = vpop.f32.mrb[0].mxu0
  %v626 = vadd.f32 %v281, %v625
  %v627 = vpop.f32.mrb[0].mxu0
  %v628 = vadd.f32 %v277, %v627
  %v629 = vpop.f32.mrb[0].mxu0
  %v630 = vadd.f32 %v281, %v629
  %631 = vmatprep.mubr.bf16.mxu0 0
  %632 = vmatmul.mubr.bf16.gmra.mrb[0].mxu0 %v331
  %v633 = vpop.f32.mrb[0].mxu0
  %v634 = vadd.f32 %v277, %v633
  %v635 = vpop.f32.mrb[0].mxu0
  %v636 = vadd.f32 %v281, %v635
  %v637 = vpop.f32.mrb[0].mxu0
  %v638 = vadd.f32 %v277, %v637
  %v639 = vpop.f32.mrb[0].mxu0
  %v640 = vadd.f32 %v281, %v639
  %641 = vmatprep.mubr.bf16.mxu0 0
  %642 = vmatmul.mubr.bf16.gmra.mrb[0].mxu0 %v334
  %v643 = vpop.f32.mrb[0].mxu0
  %v644 = vadd.f32 %v277, %v643
  %v645 = vpop.f32.mrb[0].mxu0
  %v646 = vadd.f32 %v281, %v645
  %v647 = vpop.f32.mrb[0].mxu0
  %v648 = vadd.f32 %v277, %v647
  %v649 = vpop.f32.mrb[0].mxu0
  %v650 = vadd.f32 %v281, %v649
  %651 = vmatprep.mubr.bf16.mxu0 0
  %652 = vmatmul.mubr.bf16.gmra.mrb[0].mxu0 %v337
  %v653 = vpop.f32.mrb[0].mxu0
  %v654 = vadd.f32 %v277, %v653
  %v655 = vpop.f32.mrb[0].mxu0
  %v656 = vadd.f32 %v281, %v655
  %v657 = vpop.f32.mrb[0].mxu0
  %v658 = vadd.f32 %v277, %v657
  %v659 = vpop.f32.mrb[0].mxu0
  %v660 = vadd.f32 %v281, %v659
  %661 = vmatprep.mubr.bf16.mxu0 0
  %662 = vmatmul.mubr.bf16.gmra.mrb[0].mxu0 %v340
  %v663 = vpop.f32.mrb[0].mxu0
  %v664 = vadd.f32 %v277, %v663
  %v665 = vpop.f32.mrb[0].mxu0
  %v666 = vadd.f32 %v281, %v665
  %v667 = vpop.f32.mrb[0].mxu0
  %v668 = vadd.f32 %v277, %v667
  %v669 = vpop.f32.mrb[0].mxu0
  %v670 = vadd.f32 %v281, %v669
  %671 = vmatprep.mubr.bf16.mxu0 0
  %672 = vmatmul.mubr.bf16.gmra.mrb[0].mxu0 %v343
  %v673 = vpop.f32.mrb[0].mxu0
  %v674 = vadd.f32 %v277, %v673
  %v675 = vpop.f32.mrb[0].mxu0
  %v676 = vadd.f32 %v281, %v675
  %v677 = vpop.f32.mrb[0].mxu0
  %v678 = vadd.f32 %v277, %v677
  %v679 = vpop.f32.mrb[0].mxu0
  %v680 = vadd.f32 %v281, %v679
  %681 = vmatprep.mubr.bf16.mxu0 0
  %682 = vmatmul.mubr.bf16.gmra.mrb[0].mxu0 %v346
  %v683 = vpop.f32.mrb[0].mxu0
  %v684 = vadd.f32 %v277, %v683
  %v685 = vpop.f32.mrb[0].mxu0
  %v686 = vadd.f32 %v281, %v685
  %v687 = vpop.f32.mrb[0].mxu0
  %v688 = vadd.f32 %v277, %v687
  %v689 = vpop.f32.mrb[0].mxu0
  %v690 = vadd.f32 %v281, %v689
  %691 = vmatprep.mubr.bf16.mxu0 0
  %692 = vmatmul.mubr.bf16.gmra.mrb[0].mxu0 %v349
  %v693 = vpop.f32.mrb[0].mxu0
  %v694 = vadd.f32 %v277, %v693
  %v695 = vpop.f32.mrb[0].mxu0
  %v696 = vadd.f32 %v281, %v695
  %v697 = vpop.f32.mrb[0].mxu0
  %v698 = vadd.f32 %v277, %v697
  %v699 = vpop.f32.mrb[0].mxu0
  %v700 = vadd.f32 %v281, %v699
  %701 = vmatprep.mubr.bf16.mxu0 0
  %702 = vmatmul.mubr.bf16.gmra.mrb[0].mxu0 %v352
  %v703 = vpop.f32.mrb[0].mxu0
  %v704 = vadd.f32 %v277, %v703
  %v705 = vpop.f32.mrb[0].mxu0
  %v706 = vadd.f32 %v281, %v705
  %v707 = vpop.f32.mrb[0].mxu0
  %v708 = vadd.f32 %v277, %v707
  %v709 = vpop.f32.mrb[0].mxu0
  %v710 = vadd.f32 %v281, %v709
  %711 = vmatprep.mubr.bf16.mxu0 0
  %712 = vmatmul.mubr.bf16.gmra.mrb[0].mxu0 %v355
  %v713 = vpop.f32.mrb[0].mxu0
  %v714 = vadd.f32 %v277, %v713
  %v715 = vpop.f32.mrb[0].mxu0
  %v716 = vadd.f32 %v281, %v715
  %v717 = vpop.f32.mrb[0].mxu0
  %v718 = vadd.f32 %v277, %v717
  %v719 = vpop.f32.mrb[0].mxu0
  %v720 = vadd.f32 %v281, %v719
  %721 = vmatprep.mubr.bf16.mxu0 0
  %722 = vmatmul.mubr.bf16.gmra.mrb[0].mxu0 %v358
  %v723 = vpop.f32.mrb[0].mxu0
  %v724 = vadd.f32 %v277, %v723
  %v725 = vpop.f32.mrb[0].mxu0
  %v726 = vadd.f32 %v281, %v725
  %v727 = vpop.f32.mrb[0].mxu0
  %v728 = vadd.f32 %v277, %v727
  %v729 = vpop.f32.mrb[0].mxu0
  %v730 = vadd.f32 %v281, %v729
  %731 = vmatprep.mubr.bf16.mxu0 0
  %732 = vmatmul.mubr.bf16.gmra.mrb[0].mxu0 %v361
  %v733 = vpop.f32.mrb[0].mxu0
  %v734 = vadd.f32 %v277, %v733
  %v735 = vpop.f32.mrb[0].mxu0
  %v736 = vadd.f32 %v281, %v735
  %v737 = vpop.f32.mrb[0].mxu0
  %v738 = vadd.f32 %v277, %v737
  %v739 = vpop.f32.mrb[0].mxu0
  %v740 = vadd.f32 %v281, %v739
  %741 = vmatprep.mubr.bf16.mxu0 0
  %742 = vmatmul.mubr.bf16.gmra.mrb[0].mxu0 %v364
  %v743 = vpop.f32.mrb[0].mxu0
  %v744 = vadd.f32 %v277, %v743
  %v745 = vpop.f32.mrb[0].mxu0
  %v746 = vadd.f32 %v281, %v745
  %v747 = vpop.f32.mrb[0].mxu0
  %v748 = vadd.f32 %v277, %v747
  %v749 = vpop.f32.mrb[0].mxu0
  %v750 = vadd.f32 %v281, %v749
  %751 = vmatprep.mubr.bf16.mxu0 0
  %752 = vmatmul.mubr.bf16.gmra.mrb[0].mxu0 %v367
  %v753 = vpop.f32.mrb[0].mxu0
  %v754 = vadd.f32 %v277, %v753
  %v755 = vpop.f32.mrb[0].mxu0
  %v756 = vadd.f32 %v281, %v755
  %v757 = vpop.f32.mrb[0].mxu0
  %v758 = vadd.f32 %v277, %v757
  %v759 = vpop.f32.mrb[0].mxu0
  %v760 = vadd.f32 %v281, %v759
  %761 = vmatprep.mubr.bf16.mxu0 0
  %762 = vmatmul.mubr.bf16.gmra.mrb[0].mxu0 %v370
  %v763 = vpop.f32.mrb[0].mxu0
  %v764 = vadd.f32 %v277, %v763
  %v765 = vpop.f32.mrb[0].mxu0
  %v766 = vadd.f32 %v281, %v765
  %v767 = vpop.f32.mrb[0].mxu0
  %v768 = vadd.f32 %v277, %v767
  %v769 = vpop.f32.mrb[0].mxu0
  %v770 = vadd.f32 %v281, %v769
  %771 = vmatprep.mubr.bf16.mxu0 0
  %772 = vmatmul.mubr.bf16.gmra.mrb[0].mxu0 %v373
  %v773 = vpop.f32.mrb[0].mxu0
  %v774 = vadd.f32 %v277, %v773
  %v775 = vpop.f32.mrb[0].mxu0
  %v776 = vadd.f32 %v281, %v775
  %v777 = vpop.f32.mrb[0].mxu0
  %v778 = vadd.f32 %v277, %v777
  %v779 = vpop.f32.mrb[0].mxu0
  %v780 = vadd.f32 %v281, %v779
  %781 = vmatprep.mubr.bf16.mxu0 0
  %782 = vmatmul.mubr.bf16.gmra.mrb[0].mxu0 %v376
  %v783 = vpop.f32.mrb[0].mxu0
  %v784 = vadd.f32 %v277, %v783
  %v785 = vpop.f32.mrb[0].mxu0
  %v786 = vadd.f32 %v281, %v785
  %v787 = vpop.f32.mrb[0].mxu0
  %v788 = vadd.f32 %v277, %v787
  %v789 = vpop.f32.mrb[0].mxu0
  %v790 = vadd.f32 %v281, %v789
  %791 = vmatprep.mubr.bf16.mxu0 0
  %792 = vmatmul.mubr.bf16.gmra.mrb[0].mxu0 %v379
  %v793 = vpop.f32.mrb[0].mxu0
  %v794 = vadd.f32 %v277, %v793
  %v795 = vpop.f32.mrb[0].mxu0
  %v796 = vadd.f32 %v281, %v795
  %v797 = vpop.f32.mrb[0].mxu0
  %v798 = vadd.f32 %v277, %v797
  %v799 = vpop.f32.mrb[0].mxu0
  %v800 = vadd.f32 %v281, %v799
  %801 = vmatprep.mubr.bf16.mxu0 0
  %802 = vmatmul.mubr.bf16.gmra.mrb[0].mxu0 %v382
  %v803 = vpop.f32.mrb[0].mxu0
  %v804 = vadd.f32 %v277, %v803
  %v805 = vpop.f32.mrb[0].mxu0
  %v806 = vadd.f32 %v281, %v805
  %v807 = vpop.f32.mrb[0].mxu0
  %v808 = vadd.f32 %v277, %v807
  %v809 = vpop.f32.mrb[0].mxu0
  %v810 = vadd.f32 %v281, %v809
  %811 = vmatprep.mubr.bf16.mxu0 0
  %812 = vmatmul.mubr.bf16.gmra.mrb[0].mxu0 %v385
  %v813 = vpop.f32.mrb[0].mxu0
  %v814 = vadd.f32 %v277, %v813
  %v815 = vpop.f32.mrb[0].mxu0
  %v816 = vadd.f32 %v281, %v815
  %v817 = vpop.f32.mrb[0].mxu0
  %v818 = vadd.f32 %v277, %v817
  %v819 = vpop.f32.mrb[0].mxu0
  %v820 = vadd.f32 %v281, %v819
  %821 = vmatprep.mubr.bf16.mxu0 0
  %822 = vmatmul.mubr.bf16.gmra.mrb[0].mxu0 %v388
  %v823 = vpop.f32.mrb[0].mxu0
  %v824 = vadd.f32 %v277, %v823
  %v825 = vpop.f32.mrb[0].mxu0
  %v826 = vadd.f32 %v281, %v825
  %v827 = vpop.f32.mrb[0].mxu0
  %v828 = vadd.f32 %v277, %v827
  %v829 = vpop.f32.mrb[0].mxu0
  %v830 = vadd.f32 %v281, %v829
  %831 = vmatprep.mubr.bf16.mxu0 0
  %832 = vmatmul.mubr.bf16.gmra.mrb[0].mxu0 %v391
  %v833 = vpop.f32.mrb[0].mxu0
  %v834 = vadd.f32 %v277, %v833
  %v835 = vpop.f32.mrb[0].mxu0
  %v836 = vadd.f32 %v281, %v835
  %v837 = vpop.f32.mrb[0].mxu0
  %v838 = vadd.f32 %v277, %v837
  %v839 = vpop.f32.mrb[0].mxu0
  %v840 = vadd.f32 %v281, %v839
  %841 = vmatprep.mubr.bf16.mxu0 0
  %842 = vmatmul.mubr.bf16.gmra.mrb[0].mxu0 %v394
  %v843 = vpop.f32.mrb[0].mxu0
  %v844 = vadd.f32 %v277, %v843
  %v845 = vpop.f32.mrb[0].mxu0
  %v846 = vadd.f32 %v281, %v845
  %v847 = vpop.f32.mrb[0].mxu0
  %v848 = vadd.f32 %v277, %v847
  %v849 = vpop.f32.mrb[0].mxu0
  %v850 = vadd.f32 %v281, %v849
  %851 = vmatprep.mubr.bf16.mxu0 0
  %852 = vmatmul.mubr.bf16.gmra.mrb[0].mxu0 %v397
  %v853 = vpop.f32.mrb[0].mxu0
  %v854 = vadd.f32 %v277, %v853
  %v855 = vpop.f32.mrb[0].mxu0
  %v856 = vadd.f32 %v281, %v855
  %v857 = vpop.f32.mrb[0].mxu0
  %v858 = vadd.f32 %v277, %v857
  %v859 = vpop.f32.mrb[0].mxu0
  %v860 = vadd.f32 %v281, %v859
  %861 = vmatprep.mubr.bf16.mxu0 0
  %862 = vmatmul.mubr.bf16.gmra.mrb[0].mxu0 %v400
  %v863 = vpop.f32.mrb[0].mxu0
  %v864 = vadd.f32 %v277, %v863
  %v865 = vpop.f32.mrb[0].mxu0
  %v866 = vadd.f32 %v281, %v865
  %v867 = vpop.f32.mrb[0].mxu0
  %v868 = vadd.f32 %v277, %v867
  %v869 = vpop.f32.mrb[0].mxu0
  %v870 = vadd.f32 %v281, %v869
  %871 = vmatprep.mubr.bf16.mxu0 0
  %872 = vmatmul.mubr.bf16.gmra.mrb[0].mxu0 %v403
  %v873 = vpop.f32.mrb[0].mxu0
  %v874 = vadd.f32 %v277, %v873
  %v875 = vpop.f32.mrb[0].mxu0
  %v876 = vadd.f32 %v281, %v875
  %v877 = vpop.f32.mrb[0].mxu0
  %v878 = vadd.f32 %v277, %v877
  %v879 = vpop.f32.mrb[0].mxu0
  %v880 = vadd.f32 %v281, %v879
  %881 = vmatprep.mubr.bf16.mxu0 0
  %882 = vmatmul.mubr.bf16.gmra.mrb[0].mxu0 %v406
  %v883 = vpop.f32.mrb[0].mxu0
  %v884 = vadd.f32 %v277, %v883
  %v885 = vpop.f32.mrb[0].mxu0
  %v886 = vadd.f32 %v281, %v885
  %v887 = vpop.f32.mrb[0].mxu0
  %v888 = vadd.f32 %v277, %v887
  %v889 = vpop.f32.mrb[0].mxu0
  %v890 = vadd.f32 %v281, %v889
  %891 = vmatprep.mubr.bf16.mxu0 0
  %892 = vmatmul.mubr.bf16.gmra.mrb[0].mxu0 %v409
  %v893 = vpop.f32.mrb[0].mxu0
  %v894 = vadd.f32 %v277, %v893
  %v895 = vpop.f32.mrb[0].mxu0
  %v896 = vadd.f32 %v281, %v895
  %v897 = vpop.f32.mrb[0].mxu0
  %v898 = vadd.f32 %v277, %v897
  %v899 = vpop.f32.mrb[0].mxu0
  %v900 = vadd.f32 %v281, %v899
  %901 = vmatprep.mubr.bf16.mxu0 0
  %902 = vmatmul.mubr.bf16.gmra.mrb[0].mxu0 %v412
  %v903 = vpop.f32.mrb[0].mxu0
  %v904 = vadd.f32 %v277, %v903
  %v905 = vpop.f32.mrb[0].mxu0
  %v906 = vadd.f32 %v281, %v905
  %v907 = vpop.f32.mrb[0].mxu0
  %v908 = vadd.f32 %v277, %v907
  %v909 = vpop.f32.mrb[0].mxu0
  %v910 = vadd.f32 %v281, %v909
  %911 = vmatprep.mubr.bf16.mxu0 0
  %912 = vmatmul.mubr.bf16.gmra.mrb[0].mxu0 %v415
  %v913 = vpop.f32.mrb[0].mxu0
  %v914 = vadd.f32 %v277, %v913
  %v915 = vpop.f32.mrb[0].mxu0
  %v916 = vadd.f32 %v281, %v915
  %v917 = vpop.f32.mrb[0].mxu0
  %v918 = vadd.f32 %v277, %v917
  %v919 = vpop.f32.mrb[0].mxu0
  %v920 = vadd.f32 %v281, %v919
  %921 = vmatprep.mubr.bf16.mxu0 0
  %922 = vmatmul.mubr.bf16.gmra.mrb[0].mxu0 %v418
  %v923 = vpop.f32.mrb[0].mxu0
  %v924 = vadd.f32 %v277, %v923
  %v925 = vpop.f32.mrb[0].mxu0
  %v926 = vadd.f32 %v281, %v925
  %v927 = vpop.f32.mrb[0].mxu0
  %v928 = vadd.f32 %v277, %v927
  %v929 = vpop.f32.mrb[0].mxu0
  %v930 = vadd.f32 %v281, %v929
  %931 = vmatprep.mubr.bf16.mxu0 0
  %932 = vmatmul.mubr.bf16.gmra.mrb[0].mxu0 %v421
  %v933 = vpop.f32.mrb[0].mxu0
  %v934 = vadd.f32 %v277, %v933
  %v935 = vpop.f32.mrb[0].mxu0
  %v936 = vadd.f32 %v281, %v935
  %v937 = vpop.f32.mrb[0].mxu0
  %v938 = vadd.f32 %v277, %v937
  %v939 = vpop.f32.mrb[0].mxu0
  %v940 = vadd.f32 %v281, %v939
  %941 = vmatprep.mubr.bf16.mxu0 0
  %942 = vmatmul.mubr.bf16.gmra.mrb[0].mxu0 %v424
  %v943 = vpop.f32.mrb[0].mxu0
  %v944 = vadd.f32 %v277, %v943
  %v945 = vpop.f32.mrb[0].mxu0
  %v946 = vadd.f32 %v281, %v945
  %v947 = vpop.f32.mrb[0].mxu0
  %v948 = vadd.f32 %v277, %v947
  %v949 = vpop.f32.mrb[0].mxu0
  %v950 = vadd.f32 %v281, %v949
  %951 = vmatprep.mubr.bf16.mxu0 0
  %952 = vmatmul.mubr.bf16.gmra.mrb[0].mxu0 %v427
  %v953 = vpop.f32.mrb[0].mxu0
  %v954 = vadd.f32 %v277, %v953
  %v955 = vpop.f32.mrb[0].mxu0
  %v956 = vadd.f32 %v281, %v955
  %v957 = vpop.f32.mrb[0].mxu0
  %v958 = vadd.f32 %v277, %v957
  %v959 = vpop.f32.mrb[0].mxu0
  %v960 = vadd.f32 %v281, %v959
  %961 = vmatprep.mubr.bf16.mxu0 0
  %962 = vmatmul.mubr.bf16.gmra.mrb[0].mxu0 %v430
  %v963 = vpop.f32.mrb[0].mxu0
  %v964 = vadd.f32 %v277, %v963
  %v965 = vpop.f32.mrb[0].mxu0
  %v966 = vadd.f32 %v281, %v965
  %v967 = vpop.f32.mrb[0].mxu0
  %v968 = vadd.f32 %v277, %v967
  %v969 = vpop.f32.mrb[0].mxu0
  %v970 = vadd.f32 %v281, %v969
  %971 = vmatprep.mubr.bf16.mxu0 0
  %972 = vmatmul.mubr.bf16.gmra.mrb[0].mxu0 %v433
  %v973 = vpop.f32.mrb[0].mxu0
  %v974 = vadd.f32 %v277, %v973
  %v975 = vpop.f32.mrb[0].mxu0
  %v976 = vadd.f32 %v281, %v975
  %v977 = vpop.f32.mrb[0].mxu0
  %v978 = vadd.f32 %v277, %v977
  %v979 = vpop.f32.mrb[0].mxu0
  %v980 = vadd.f32 %v281, %v979
  %981 = vmatprep.mubr.bf16.mxu0 0
  %982 = vmatmul.mubr.bf16.gmra.mrb[0].mxu0 %v436
  %v983 = vpop.f32.mrb[0].mxu0
  %v984 = vadd.f32 %v277, %v983
  %v985 = vpop.f32.mrb[0].mxu0
  %v986 = vadd.f32 %v281, %v985
  %v987 = vpop.f32.mrb[0].mxu0
  %v988 = vadd.f32 %v277, %v987
  %v989 = vpop.f32.mrb[0].mxu0
  %v990 = vadd.f32 %v281, %v989
  %991 = vmatprep.mubr.bf16.mxu0 0
  %992 = vmatmul.mubr.bf16.gmra.mrb[0].mxu0 %v439
  %v993 = vpop.f32.mrb[0].mxu0
  %v994 = vadd.f32 %v277, %v993
  %v995 = vpop.f32.mrb[0].mxu0
  %v996 = vadd.f32 %v281, %v995
  %v997 = vpop.f32.mrb[0].mxu0
  %v998 = vadd.f32 %v277, %v997
  %v999 = vpop.f32.mrb[0].mxu0
  %v1000 = vadd.f32 %v281, %v999
  %1001 = vmatprep.mubr.bf16.mxu0 0
  %1002 = vmatmul.mubr.bf16.gmra.mrb[0].mxu0 %v442
  %v1003 = vpop.f32.mrb[0].mxu0
  %v1004 = vadd.f32 %v277, %v1003
  %v1005 = vpop.f32.mrb[0].mxu0
  %v1006 = vadd.f32 %v281, %v1005
  %v1007 = vpop.f32.mrb[0].mxu0
  %v1008 = vadd.f32 %v277, %v1007
  %v1009 = vpop.f32.mrb[0].mxu0
  %v1010 = vadd.f32 %v281, %v1009
  %1011 = vmatprep.mubr.bf16.mxu0 0
  %1012 = vmatmul.mubr.bf16.gmra.mrb[0].mxu0 %v445
  %v1013 = vpop.f32.mrb[0].mxu0
  %v1014 = vadd.f32 %v277, %v1013
  %v1015 = vpop.f32.mrb[0].mxu0
  %v1016 = vadd.f32 %v281, %v1015
  %v1017 = vpop.f32.mrb[0].mxu0
  %v1018 = vadd.f32 %v277, %v1017
  %v1019 = vpop.f32.mrb[0].mxu0
  %v1020 = vadd.f32 %v281, %v1019
  %1021 = vmatprep.mubr.bf16.mxu0 0
  %1022 = vmatmul.mubr.bf16.gmra.mrb[0].mxu0 %v448
  %v1023 = vpop.f32.mrb[0].mxu0
  %v1024 = vadd.f32 %v277, %v1023
  %v1025 = vpop.f32.mrb[0].mxu0
  %v1026 = vadd.f32 %v281, %v1025
  %v1027 = vpop.f32.mrb[0].mxu0
  %v1028 = vadd.f32 %v277, %v1027
  %v1029 = vpop.f32.mrb[0].mxu0
  %v1030 = vadd.f32 %v281, %v1029
  %1031 = vmatprep.mubr.bf16.mxu0 0
  %1032 = vmatmul.mubr.bf16.gmra.mrb[0].mxu0 %v451
  %v1033 = vpop.f32.mrb[0].mxu0
  %v1034 = vadd.f32 %v277, %v1033
  %v1035 = vpop.f32.mrb[0].mxu0
  %v1036 = vadd.f32 %v281, %v1035
  %v1037 = vpop.f32.mrb[0].mxu0
  %v1038 = vadd.f32 %v277, %v1037
  %v1039 = vpop.f32.mrb[0].mxu0
  %v1040 = vadd.f32 %v281, %v1039
  %1041 = vmatprep.mubr.bf16.mxu0 0
  %1042 = vmatmul.mubr.bf16.gmra.mrb[0].mxu0 %v454
  %v1043 = vpop.f32.mrb[0].mxu0
  %v1044 = vadd.f32 %v277, %v1043
  %v1045 = vpop.f32.mrb[0].mxu0
  %v1046 = vadd.f32 %v281, %v1045
  %v1047 = vpop.f32.mrb[0].mxu0
  %v1048 = vadd.f32 %v277, %v1047
  %v1049 = vpop.f32.mrb[0].mxu0
  %v1050 = vadd.f32 %v281, %v1049
  %1051 = vmatprep.mubr.bf16.mxu0 0
  %1052 = vmatmul.mubr.bf16.gmra.mrb[0].mxu0 %v457
  %v1053 = vpop.f32.mrb[0].mxu0
  %v1054 = vadd.f32 %v277, %v1053
  %v1055 = vpop.f32.mrb[0].mxu0
  %v1056 = vadd.f32 %v281, %v1055
  %v1057 = vpop.f32.mrb[0].mxu0
  %v1058 = vadd.f32 %v277, %v1057
  %v1059 = vpop.f32.mrb[0].mxu0
  %v1060 = vadd.f32 %v281, %v1059
  %1061 = vmatprep.mubr.bf16.mxu0 0
  %1062 = vmatmul.mubr.bf16.gmra.mrb[0].mxu0 %v460
  %v1063 = vpop.f32.mrb[0].mxu0
  %v1064 = vadd.f32 %v277, %v1063
  %v1065 = vpop.f32.mrb[0].mxu0
  %v1066 = vadd.f32 %v281, %v1065
  %v1067 = vpop.f32.mrb[0].mxu0
  %v1068 = vadd.f32 %v277, %v1067
  %v1069 = vpop.f32.mrb[0].mxu0
  %v1070 = vadd.f32 %v281, %v1069
  %1071 = vmatprep.mubr.bf16.mxu0 0
  %1072 = vmatmul.mubr.bf16.gmra.mrb[0].mxu0 %v463
  %v1073 = vpop.f32.mrb[0].mxu0
  %v1074 = vadd.f32 %v277, %v1073
  %v1075 = vpop.f32.mrb[0].mxu0
  %v1076 = vadd.f32 %v281, %v1075
  %v1077 = vpop.f32.mrb[0].mxu0
  %v1078 = vadd.f32 %v277, %v1077
  %v1079 = vpop.f32.mrb[0].mxu0
  %v1080 = vadd.f32 %v281, %v1079
  %1081 = vmatprep.mubr.bf16.mxu0 0
  %1082 = vmatmul.mubr.bf16.gmra.mrb[0].mxu0 %v466
  %v1083 = vpop.f32.mrb[0].mxu0
  %v1084 = vadd.f32 %v277, %v1083
  %v1085 = vpop.f32.mrb[0].mxu0
  %v1086 = vadd.f32 %v281, %v1085
  %v1087 = vpop.f32.mrb[0].mxu0
  %v1088 = vadd.f32 %v277, %v1087
  %v1089 = vpop.f32.mrb[0].mxu0
  %v1090 = vadd.f32 %v281, %v1089
  %1091 = vmatprep.mubr.bf16.mxu0 0
  %1092 = vmatmul.mubr.bf16.gmra.mrb[0].mxu0 %v469
  %v1093 = vpop.f32.mrb[0].mxu0
  %v1094 = vadd.f32 %v277, %v1093
  %v1095 = vpop.f32.mrb[0].mxu0
  %v1096 = vadd.f32 %v281, %v1095
  %v1097 = vpop.f32.mrb[0].mxu0
  %v1098 = vadd.f32 %v277, %v1097
  %v1099 = vpop.f32.mrb[0].mxu0
  %v1100 = vadd.f32 %v281, %v1099
  %1101 = vmatprep.mubr.bf16.mxu0 0
  %1102 = vmatmul.mubr.bf16.gmra.mrb[0].mxu0 %v472
  %v1103 = vpop.f32.mrb[0].mxu0
  %v1104 = vadd.f32 %v277, %v1103
  %v1105 = vpop.f32.mrb[0].mxu0
  %v1106 = vadd.f32 %v281, %v1105
  %v1107 = vpop.f32.mrb[0].mxu0
  %v1108 = vadd.f32 %v277, %v1107
  %v1109 = vpop.f32.mrb[0].mxu0
  %v1110 = vadd.f32 %v281, %v1109
  %1111 = vmatprep.mubr.bf16.mxu0 0
  %1112 = vmatmul.mubr.bf16.gmra.mrb[0].mxu0 %v475
  %v1113 = vpop.f32.mrb[0].mxu0
  %v1114 = vadd.f32 %v277, %v1113
  %v1115 = vpop.f32.mrb[0].mxu0
  %v1116 = vadd.f32 %v281, %v1115
  %v1117 = vpop.f32.mrb[0].mxu0
  %v1118 = vadd.f32 %v277, %v1117
  %v1119 = vpop.f32.mrb[0].mxu0
  %v1120 = vadd.f32 %v281, %v1119
  %1121 = vmatprep.mubr.bf16.mxu0 0
  %1122 = vmatmul.mubr.bf16.gmra.mrb[0].mxu0 %v478
  %v1123 = vpop.f32.mrb[0].mxu0
  %v1124 = vadd.f32 %v277, %v1123
  %v1125 = vpop.f32.mrb[0].mxu0
  %v1126 = vadd.f32 %v281, %v1125
  %v1127 = vpop.f32.mrb[0].mxu0
  %v1128 = vadd.f32 %v277, %v1127
  %v1129 = vpop.f32.mrb[0].mxu0
  %v1130 = vadd.f32 %v281, %v1129
  %1131 = vmatprep.mubr.bf16.mxu0 0
  %1132 = vmatmul.mubr.bf16.gmra.mrb[0].mxu0 %v481
  %v1133 = vpop.f32.mrb[0].mxu0
  %v1134 = vadd.f32 %v277, %v1133
  %v1135 = vpop.f32.mrb[0].mxu0
  %v1136 = vadd.f32 %v281, %v1135
  %v1137 = vpop.f32.mrb[0].mxu0
  %v1138 = vadd.f32 %v277, %v1137
  %v1139 = vpop.f32.mrb[0].mxu0
  %v1140 = vadd.f32 %v281, %v1139
  %1141 = vmatprep.mubr.bf16.mxu0 0
  %1142 = vmatmul.mubr.bf16.gmra.mrb[0].mxu0 %v484
  %v1143 = vpop.f32.mrb[0].mxu0
  %v1144 = vadd.f32 %v277, %v1143
  %v1145 = vpop.f32.mrb[0].mxu0
  %v1146 = vadd.f32 %v281, %v1145
  %v1147 = vpop.f32.mrb[0].mxu0
  %v1148 = vadd.f32 %v277, %v1147
  %v1149 = vpop.f32.mrb[0].mxu0
  %v1150 = vadd.f32 %v281, %v1149
  %1151 = vmatprep.mubr.bf16.mxu0 0
  %1152 = vmatmul.mubr.bf16.gmra.mrb[0].mxu0 %v487
  %v1153 = vpop.f32.mrb[0].mxu0
  %v1154 = vadd.f32 %v277, %v1153
  %v1155 = vpop.f32.mrb[0].mxu0
  %v1156 = vadd.f32 %v281, %v1155
  %v1157 = vpop.f32.mrb[0].mxu0
  %v1158 = vadd.f32 %v277, %v1157
  %v1159 = vpop.f32.mrb[0].mxu0
  %v1160 = vadd.f32 %v281, %v1159
  %1161 = vmatprep.mubr.bf16.mxu0 0
  %1162 = vmatmul.mubr.bf16.gmra.mrb[0].mxu0 %v490
  %v1163 = vpop.f32.mrb[0].mxu0
  %v1164 = vadd.f32 %v277, %v1163
  %v1165 = vpop.f32.mrb[0].mxu0
  %v1166 = vadd.f32 %v281, %v1165
  %v1167 = vpop.f32.mrb[0].mxu0
  %v1168 = vadd.f32 %v277, %v1167
  %v1169 = vpop.f32.mrb[0].mxu0
  %v1170 = vadd.f32 %v281, %v1169
  %1171 = vdwg.mxu0
  %v1172 = vmax.f32 %v534, 0.0
  %v1173 = vmax.f32 %v536, 0.0
  %v1174 = vmax.f32 %v538, 0.0
  %v1175 = vmax.f32 %v540, 0.0
  %v1176 = vmax.f32 %v544, 0.0
  %v1177 = vmax.f32 %v546, 0.0
  %v1178 = vmax.f32 %v548, 0.0
  %v1179 = vmax.f32 %v550, 0.0
  %v1180 = vmax.f32 %v554, 0.0
  %v1181 = vmax.f32 %v556, 0.0
  %v1182 = vmax.f32 %v558, 0.0
  %v1183 = vmax.f32 %v560, 0.0
  %v1184 = vmax.f32 %v564, 0.0
  %v1185 = vmax.f32 %v566, 0.0
  %v1186 = vmax.f32 %v568, 0.0
  %v1187 = vmax.f32 %v570, 0.0
  %v1188 = vmax.f32 %v574, 0.0
  %v1189 = vmax.f32 %v576, 0.0
  %v1190 = vmax.f32 %v578, 0.0
  %v1191 = vmax.f32 %v580, 0.0
  %v1192 = vmax.f32 %v584, 0.0
  %v1193 = vmax.f32 %v586, 0.0
  %v1194 = vmax.f32 %v588, 0.0
  %v1195 = vmax.f32 %v590, 0.0
  %v1196 = vmax.f32 %v594, 0.0
  %v1197 = vmax.f32 %v596, 0.0
  %v1198 = vmax.f32 %v598, 0.0
  %v1199 = vmax.f32 %v600, 0.0
  %v1200 = vmax.f32 %v604, 0.0
  %v1201 = vmax.f32 %v606, 0.0
  %v1202 = vmax.f32 %v608, 0.0
  %v1203 = vmax.f32 %v610, 0.0
  %v1204 = vmax.f32 %v614, 0.0
  %v1205 = vmax.f32 %v616, 0.0
  %v1206 = vmax.f32 %v618, 0.0
  %v1207 = vmax.f32 %v620, 0.0
  %v1208 = vmax.f32 %v624, 0.0
  %v1209 = vmax.f32 %v626, 0.0
  %v1210 = vmax.f32 %v628, 0.0
  %v1211 = vmax.f32 %v630, 0.0
  %v1212 = vmax.f32 %v634, 0.0
  %v1213 = vmax.f32 %v636, 0.0
  %v1214 = vmax.f32 %v638, 0.0
  %v1215 = vmax.f32 %v640, 0.0
  %v1216 = vmax.f32 %v644, 0.0
  %v1217 = vmax.f32 %v646, 0.0
  %v1218 = vmax.f32 %v648, 0.0
  %v1219 = vmax.f32 %v650, 0.0
  %v1220 = vmax.f32 %v654, 0.0
  %v1221 = vmax.f32 %v656, 0.0
  %v1222 = vmax.f32 %v658, 0.0
  %v1223 = vmax.f32 %v660, 0.0
  %v1224 = vmax.f32 %v664, 0.0
  %v1225 = vmax.f32 %v666, 0.0
  %v1226 = vmax.f32 %v668, 0.0
  %v1227 = vmax.f32 %v670, 0.0
  %v1228 = vmax.f32 %v674, 0.0
  %v1229 = vmax.f32 %v676, 0.0
  %v1230 = vmax.f32 %v678, 0.0
  %v1231 = vmax.f32 %v680, 0.0
  %v1232 = vmax.f32 %v684, 0.0
  %v1233 = vmax.f32 %v686, 0.0
  %v1234 = vmax.f32 %v688, 0.0
  %v1235 = vmax.f32 %v690, 0.0
  %v1236 = vmax.f32 %v694, 0.0
  %v1237 = vmax.f32 %v696, 0.0
  %v1238 = vmax.f32 %v698, 0.0
  %v1239 = vmax.f32 %v700, 0.0
  %v1240 = vmax.f32 %v704, 0.0
  %v1241 = vmax.f32 %v706, 0.0
  %v1242 = vmax.f32 %v708, 0.0
  %v1243 = vmax.f32 %v710, 0.0
  %v1244 = vmax.f32 %v714, 0.0
  %v1245 = vmax.f32 %v716, 0.0
  %v1246 = vmax.f32 %v718, 0.0
  %v1247 = vmax.f32 %v720, 0.0
  %v1248 = vmax.f32 %v724, 0.0
  %v1249 = vmax.f32 %v726, 0.0
  %v1250 = vmax.f32 %v728, 0.0
  %v1251 = vmax.f32 %v730, 0.0
  %v1252 = vmax.f32 %v734, 0.0
  %v1253 = vmax.f32 %v736, 0.0
  %v1254 = vmax.f32 %v738, 0.0
  %v1255 = vmax.f32 %v740, 0.0
  %v1256 = vmax.f32 %v744, 0.0
  %v1257 = vmax.f32 %v746, 0.0
  %v1258 = vmax.f32 %v748, 0.0
  %v1259 = vmax.f32 %v750, 0.0
  %v1260 = vmax.f32 %v754, 0.0
  %v1261 = vmax.f32 %v756, 0.0
  %v1262 = vmax.f32 %v758, 0.0
  %v1263 = vmax.f32 %v760, 0.0
  %v1264 = vmax.f32 %v764, 0.0
  %v1265 = vmax.f32 %v766, 0.0
  %v1266 = vmax.f32 %v768, 0.0
  %v1267 = vmax.f32 %v770, 0.0
  %v1268 = vmax.f32 %v774, 0.0
  %v1269 = vmax.f32 %v776, 0.0
  %v1270 = vmax.f32 %v778, 0.0
  %v1271 = vmax.f32 %v780, 0.0
  %v1272 = vmax.f32 %v784, 0.0
  %v1273 = vmax.f32 %v786, 0.0
  %v1274 = vmax.f32 %v788, 0.0
  %v1275 = vmax.f32 %v790, 0.0
  %v1276 = vmax.f32 %v794, 0.0
  %v1277 = vmax.f32 %v796, 0.0
  %v1278 = vmax.f32 %v798, 0.0
  %v1279 = vmax.f32 %v800, 0.0
  %v1280 = vmax.f32 %v804, 0.0
  %v1281 = vmax.f32 %v806, 0.0
  %v1282 = vmax.f32 %v808, 0.0
  %v1283 = vmax.f32 %v810, 0.0
  %v1284 = vmax.f32 %v814, 0.0
  %v1285 = vmax.f32 %v816, 0.0
  %v1286 = vmax.f32 %v818, 0.0
  %v1287 = vmax.f32 %v820, 0.0
  %v1288 = vmax.f32 %v824, 0.0
  %v1289 = vmax.f32 %v826, 0.0
  %v1290 = vmax.f32 %v828, 0.0
  %v1291 = vmax.f32 %v830, 0.0
  %v1292 = vmax.f32 %v834, 0.0
  %v1293 = vmax.f32 %v836, 0.0
  %v1294 = vmax.f32 %v838, 0.0
  %v1295 = vmax.f32 %v840, 0.0
  %v1296 = vmax.f32 %v844, 0.0
  %v1297 = vmax.f32 %v846, 0.0
  %v1298 = vmax.f32 %v848, 0.0
  %v1299 = vmax.f32 %v850, 0.0
  %v1300 = vmax.f32 %v854, 0.0
  %v1301 = vmax.f32 %v856, 0.0
  %v1302 = vmax.f32 %v858, 0.0
  %v1303 = vmax.f32 %v860, 0.0
  %v1304 = vmax.f32 %v864, 0.0
  %v1305 = vmax.f32 %v866, 0.0
  %v1306 = vmax.f32 %v868, 0.0
  %v1307 = vmax.f32 %v870, 0.0
  %v1308 = vmax.f32 %v874, 0.0
  %v1309 = vmax.f32 %v876, 0.0
  %v1310 = vmax.f32 %v878, 0.0
  %v1311 = vmax.f32 %v880, 0.0
  %v1312 = vmax.f32 %v884, 0.0
  %v1313 = vmax.f32 %v886, 0.0
  %v1314 = vmax.f32 %v888, 0.0
  %v1315 = vmax.f32 %v890, 0.0
  %v1316 = vmax.f32 %v894, 0.0
  %v1317 = vmax.f32 %v896, 0.0
  %v1318 = vmax.f32 %v898, 0.0
  %v1319 = vmax.f32 %v900, 0.0
  %v1320 = vmax.f32 %v904, 0.0
  %v1321 = vmax.f32 %v906, 0.0
  %v1322 = vmax.f32 %v908, 0.0
  %v1323 = vmax.f32 %v910, 0.0
  %v1324 = vmax.f32 %v914, 0.0
  %v1325 = vmax.f32 %v916, 0.0
  %v1326 = vmax.f32 %v918, 0.0
  %v1327 = vmax.f32 %v920, 0.0
  %v1328 = vmax.f32 %v924, 0.0
  %v1329 = vmax.f32 %v926, 0.0
  %v1330 = vmax.f32 %v928, 0.0
  %v1331 = vmax.f32 %v930, 0.0
  %v1332 = vmax.f32 %v934, 0.0
  %v1333 = vmax.f32 %v936, 0.0
  %v1334 = vmax.f32 %v938, 0.0
  %v1335 = vmax.f32 %v940, 0.0
  %v1336 = vmax.f32 %v944, 0.0
  %v1337 = vmax.f32 %v946, 0.0
  %v1338 = vmax.f32 %v948, 0.0
  %v1339 = vmax.f32 %v950, 0.0
  %v1340 = vmax.f32 %v954, 0.0
  %v1341 = vmax.f32 %v956, 0.0
  %v1342 = vmax.f32 %v958, 0.0
  %v1343 = vmax.f32 %v960, 0.0
  %v1344 = vmax.f32 %v964, 0.0
  %v1345 = vmax.f32 %v966, 0.0
  %v1346 = vmax.f32 %v968, 0.0
  %v1347 = vmax.f32 %v970, 0.0
  %v1348 = vmax.f32 %v974, 0.0
  %v1349 = vmax.f32 %v976, 0.0
  %v1350 = vmax.f32 %v978, 0.0
  %v1351 = vmax.f32 %v980, 0.0
  %v1352 = vmax.f32 %v984, 0.0
  %v1353 = vmax.f32 %v986, 0.0
  %v1354 = vmax.f32 %v988, 0.0
  %v1355 = vmax.f32 %v990, 0.0
  %v1356 = vmax.f32 %v994, 0.0
  %v1357 = vmax.f32 %v996, 0.0
  %v1358 = vmax.f32 %v998, 0.0
  %v1359 = vmax.f32 %v1000, 0.0
  %v1360 = vmax.f32 %v1004, 0.0
  %v1361 = vmax.f32 %v1006, 0.0
  %v1362 = vmax.f32 %v1008, 0.0
  %v1363 = vmax.f32 %v1010, 0.0
  %v1364 = vmax.f32 %v1014, 0.0
  %v1365 = vmax.f32 %v1016, 0.0
  %v1366 = vmax.f32 %v1018, 0.0
  %v1367 = vmax.f32 %v1020, 0.0
  %v1368 = vmax.f32 %v1024, 0.0
  %v1369 = vmax.f32 %v1026, 0.0
  %v1370 = vmax.f32 %v1028, 0.0
  %v1371 = vmax.f32 %v1030, 0.0
  %v1372 = vmax.f32 %v1034, 0.0
  %v1373 = vmax.f32 %v1036, 0.0
  %v1374 = vmax.f32 %v1038, 0.0
  %v1375 = vmax.f32 %v1040, 0.0
  %v1376 = vmax.f32 %v1044, 0.0
  %v1377 = vmax.f32 %v1046, 0.0
  %v1378 = vmax.f32 %v1048, 0.0
  %v1379 = vmax.f32 %v1050, 0.0
  %v1380 = vmax.f32 %v1054, 0.0
  %v1381 = vmax.f32 %v1056, 0.0
  %v1382 = vmax.f32 %v1058, 0.0
  %v1383 = vmax.f32 %v1060, 0.0
  %v1384 = vmax.f32 %v1064, 0.0
  %v1385 = vmax.f32 %v1066, 0.0
  %v1386 = vmax.f32 %v1068, 0.0
  %v1387 = vmax.f32 %v1070, 0.0
  %v1388 = vmax.f32 %v1074, 0.0
  %v1389 = vmax.f32 %v1076, 0.0
  %v1390 = vmax.f32 %v1078, 0.0
  %v1391 = vmax.f32 %v1080, 0.0
  %v1392 = vmax.f32 %v1084, 0.0
  %v1393 = vmax.f32 %v1086, 0.0
  %v1394 = vmax.f32 %v1088, 0.0
  %v1395 = vmax.f32 %v1090, 0.0
  %v1396 = vmax.f32 %v1094, 0.0
  %v1397 = vmax.f32 %v1096, 0.0
  %v1398 = vmax.f32 %v1098, 0.0
  %v1399 = vmax.f32 %v1100, 0.0
  %v1400 = vmax.f32 %v1104, 0.0
  %v1401 = vmax.f32 %v1106, 0.0
  %v1402 = vmax.f32 %v1108, 0.0
  %v1403 = vmax.f32 %v1110, 0.0
  %v1404 = vmax.f32 %v1114, 0.0
  %v1405 = vmax.f32 %v1116, 0.0
  %v1406 = vmax.f32 %v1118, 0.0
  %v1407 = vmax.f32 %v1120, 0.0
  %v1408 = vmax.f32 %v1124, 0.0
  %v1409 = vmax.f32 %v1126, 0.0
  %v1410 = vmax.f32 %v1128, 0.0
  %v1411 = vmax.f32 %v1130, 0.0
  %v1412 = vmax.f32 %v1134, 0.0
  %v1413 = vmax.f32 %v1136, 0.0
  %v1414 = vmax.f32 %v1138, 0.0
  %v1415 = vmax.f32 %v1140, 0.0
  %v1416 = vmax.f32 %v1144, 0.0
  %v1417 = vmax.f32 %v1146, 0.0
  %v1418 = vmax.f32 %v1148, 0.0
  %v1419 = vmax.f32 %v1150, 0.0
  %v1420 = vmax.f32 %v1154, 0.0
  %v1421 = vmax.f32 %v1156, 0.0
  %v1422 = vmax.f32 %v1158, 0.0
  %v1423 = vmax.f32 %v1160, 0.0
  %v1424 = vmax.f32 %v1164, 0.0
  %v1425 = vmax.f32 %v1166, 0.0
  %v1426 = vmax.f32 %v1168, 0.0
  %v1427 = vmax.f32 %v1170, 0.0
  %v1428 = vpack.c.bf16 %v1174, %v1172
  %v1429 = vpack.c.bf16 %v1175, %v1173
  %v1430 = vpack.c.bf16 %v1178, %v1176
  %v1431 = vpack.c.bf16 %v1179, %v1177
  %v1432 = vpack.c.bf16 %v1182, %v1180
  %v1433 = vpack.c.bf16 %v1183, %v1181
  %v1434 = vpack.c.bf16 %v1186, %v1184
  %v1435 = vpack.c.bf16 %v1187, %v1185
  %v1436 = vpack.c.bf16 %v1190, %v1188
  %v1437 = vpack.c.bf16 %v1191, %v1189
  %v1438 = vpack.c.bf16 %v1194, %v1192
  %v1439 = vpack.c.bf16 %v1195, %v1193
  %v1440 = vpack.c.bf16 %v1198, %v1196
  %v1441 = vpack.c.bf16 %v1199, %v1197
  %v1442 = vpack.c.bf16 %v1202, %v1200
  %v1443 = vpack.c.bf16 %v1203, %v1201
  %v1444 = vpack.c.bf16 %v1206, %v1204
  %v1445 = vpack.c.bf16 %v1207, %v1205
  %v1446 = vpack.c.bf16 %v1210, %v1208
  %v1447 = vpack.c.bf16 %v1211, %v1209
  %v1448 = vpack.c.bf16 %v1214, %v1212
  %v1449 = vpack.c.bf16 %v1215, %v1213
  %v1450 = vpack.c.bf16 %v1218, %v1216
  %v1451 = vpack.c.bf16 %v1219, %v1217
  %v1452 = vpack.c.bf16 %v1222, %v1220
  %v1453 = vpack.c.bf16 %v1223, %v1221
  %v1454 = vpack.c.bf16 %v1226, %v1224
  %v1455 = vpack.c.bf16 %v1227, %v1225
  %v1456 = vpack.c.bf16 %v1230, %v1228
  %v1457 = vpack.c.bf16 %v1231, %v1229
  %v1458 = vpack.c.bf16 %v1234, %v1232
  %v1459 = vpack.c.bf16 %v1235, %v1233
  %v1460 = vpack.c.bf16 %v1238, %v1236
  %v1461 = vpack.c.bf16 %v1239, %v1237
  %v1462 = vpack.c.bf16 %v1242, %v1240
  %v1463 = vpack.c.bf16 %v1243, %v1241
  %v1464 = vpack.c.bf16 %v1246, %v1244
  %v1465 = vpack.c.bf16 %v1247, %v1245
  %v1466 = vpack.c.bf16 %v1250, %v1248
  %v1467 = vpack.c.bf16 %v1251, %v1249
  %v1468 = vpack.c.bf16 %v1254, %v1252
  %v1469 = vpack.c.bf16 %v1255, %v1253
  %v1470 = vpack.c.bf16 %v1258, %v1256
  %v1471 = vpack.c.bf16 %v1259, %v1257
  %v1472 = vpack.c.bf16 %v1262, %v1260
  %v1473 = vpack.c.bf16 %v1263, %v1261
  %v1474 = vpack.c.bf16 %v1266, %v1264
  %v1475 = vpack.c.bf16 %v1267, %v1265
  %v1476 = vpack.c.bf16 %v1270, %v1268
  %v1477 = vpack.c.bf16 %v1271, %v1269
  %v1478 = vpack.c.bf16 %v1274, %v1272
  %v1479 = vpack.c.bf16 %v1275, %v1273
  %v1480 = vpack.c.bf16 %v1278, %v1276
  %v1481 = vpack.c.bf16 %v1279, %v1277
  %v1482 = vpack.c.bf16 %v1282, %v1280
  %v1483 = vpack.c.bf16 %v1283, %v1281
  %v1484 = vpack.c.bf16 %v1286, %v1284
  %v1485 = vpack.c.bf16 %v1287, %v1285
  %v1486 = vpack.c.bf16 %v1290, %v1288
  %v1487 = vpack.c.bf16 %v1291, %v1289
  %v1488 = vpack.c.bf16 %v1294, %v1292
  %v1489 = vpack.c.bf16 %v1295, %v1293
  %v1490 = vpack.c.bf16 %v1298, %v1296
  %v1491 = vpack.c.bf16 %v1299, %v1297
  %v1492 = vpack.c.bf16 %v1302, %v1300
  %v1493 = vpack.c.bf16 %v1303, %v1301
  %v1494 = vpack.c.bf16 %v1306, %v1304
  %v1495 = vpack.c.bf16 %v1307, %v1305
  %v1496 = vpack.c.bf16 %v1310, %v1308
  %v1497 = vpack.c.bf16 %v1311, %v1309
  %v1498 = vpack.c.bf16 %v1314, %v1312
  %v1499 = vpack.c.bf16 %v1315, %v1313
  %v1500 = vpack.c.bf16 %v1318, %v1316
  %v1501 = vpack.c.bf16 %v1319, %v1317
  %v1502 = vpack.c.bf16 %v1322, %v1320
  %v1503 = vpack.c.bf16 %v1323, %v1321
  %v1504 = vpack.c.bf16 %v1326, %v1324
  %v1505 = vpack.c.bf16 %v1327, %v1325
  %v1506 = vpack.c.bf16 %v1330, %v1328
  %v1507 = vpack.c.bf16 %v1331, %v1329
  %v1508 = vpack.c.bf16 %v1334, %v1332
  %v1509 = vpack.c.bf16 %v1335, %v1333
  %v1510 = vpack.c.bf16 %v1338, %v1336
  %v1511 = vpack.c.bf16 %v1339, %v1337
  %v1512 = vpack.c.bf16 %v1342, %v1340
  %v1513 = vpack.c.bf16 %v1343, %v1341
  %v1514 = vpack.c.bf16 %v1346, %v1344
  %v1515 = vpack.c.bf16 %v1347, %v1345
  %v1516 = vpack.c.bf16 %v1350, %v1348
  %v1517 = vpack.c.bf16 %v1351, %v1349
  %v1518 = vpack.c.bf16 %v1354, %v1352
  %v1519 = vpack.c.bf16 %v1355, %v1353
  %v1520 = vpack.c.bf16 %v1358, %v1356
  %v1521 = vpack.c.bf16 %v1359, %v1357
  %v1522 = vpack.c.bf16 %v1362, %v1360
  %v1523 = vpack.c.bf16 %v1363, %v1361
  %v1524 = vpack.c.bf16 %v1366, %v1364
  %v1525 = vpack.c.bf16 %v1367, %v1365
  %v1526 = vpack.c.bf16 %v1370, %v1368
  %v1527 = vpack.c.bf16 %v1371, %v1369
  %v1528 = vpack.c.bf16 %v1374, %v1372
  %v1529 = vpack.c.bf16 %v1375, %v1373
  %v1530 = vpack.c.bf16 %v1378, %v1376
  %v1531 = vpack.c.bf16 %v1379, %v1377
  %v1532 = vpack.c.bf16 %v1382, %v1380
  %v1533 = vpack.c.bf16 %v1383, %v1381
  %v1534 = vpack.c.bf16 %v1386, %v1384
  %v1535 = vpack.c.bf16 %v1387, %v1385
  %v1536 = vpack.c.bf16 %v1390, %v1388
  %v1537 = vpack.c.bf16 %v1391, %v1389
  %v1538 = vpack.c.bf16 %v1394, %v1392
  %v1539 = vpack.c.bf16 %v1395, %v1393
  %v1540 = vpack.c.bf16 %v1398, %v1396
  %v1541 = vpack.c.bf16 %v1399, %v1397
  %v1542 = vpack.c.bf16 %v1402, %v1400
  %v1543 = vpack.c.bf16 %v1403, %v1401
  %v1544 = vpack.c.bf16 %v1406, %v1404
  %v1545 = vpack.c.bf16 %v1407, %v1405
  %v1546 = vpack.c.bf16 %v1410, %v1408
  %v1547 = vpack.c.bf16 %v1411, %v1409
  %v1548 = vpack.c.bf16 %v1414, %v1412
  %v1549 = vpack.c.bf16 %v1415, %v1413
  %v1550 = vpack.c.bf16 %v1418, %v1416
  %v1551 = vpack.c.bf16 %v1419, %v1417
  %v1552 = vpack.c.bf16 %v1422, %v1420
  %v1553 = vpack.c.bf16 %v1423, %v1421
  %v1554 = vpack.c.bf16 %v1426, %v1424
  %v1555 = vpack.c.bf16 %v1427, %v1425
  %v1557 = vlaneseq
  %v1558 = vshrl.u32 %v1557, 7
  %v1559 = vsub.s32 0, %v1558
  %v1560 = vrot.slane %v63, %v1559
  %v1594 = vunpack.c.l.b16 %v31
  %v1595 = vunpack.c.l.b16 %v32
  %v1596 = vunpack.c.l.b16 %v33
  %v1597 = vunpack.c.l.b16 %v34
  %v1598 = vunpack.c.l.b16 %v35
  %v1599 = vunpack.c.l.b16 %v36
  %v1600 = vunpack.c.l.b16 %v37
  %v1601 = vunpack.c.l.b16 %v38
  %v1602 = vunpack.c.l.b16 %v39
  %v1603 = vunpack.c.l.b16 %v40
  %v1604 = vunpack.c.l.b16 %v41
  %v1605 = vunpack.c.l.b16 %v42
  %v1606 = vunpack.c.l.b16 %v43
  %v1607 = vunpack.c.l.b16 %v44
  %v1608 = vunpack.c.l.b16 %v45
  %v1609 = vunpack.c.l.b16 %v46
  %v1610 = vunpack.c.l.b16 %v47
  %v1611 = vunpack.c.l.b16 %v48
  %v1612 = vunpack.c.l.b16 %v49
  %v1613 = vunpack.c.l.b16 %v50
  %v1614 = vunpack.c.l.b16 %v51
  %v1615 = vunpack.c.l.b16 %v52
  %v1616 = vunpack.c.l.b16 %v53
  %v1617 = vunpack.c.l.b16 %v54
  %v1618 = vunpack.c.l.b16 %v55
  %v1619 = vunpack.c.l.b16 %v56
  %v1620 = vunpack.c.l.b16 %v57
  %v1621 = vunpack.c.l.b16 %v58
  %v1622 = vunpack.c.l.b16 %v59
  %v1623 = vunpack.c.l.b16 %v60
  %v1624 = vunpack.c.l.b16 %v61
  %v1625 = vunpack.c.l.b16 %v62
  %v1626 = vpack.c.b16 %v1595, %v1594
  %v1627 = vpack.c.b16 %v1597, %v1596
  %v1628 = vpack.c.b16 %v1599, %v1598
  %v1629 = vpack.c.b16 %v1601, %v1600
  %v1630 = vpack.c.b16 %v1603, %v1602
  %v1631 = vpack.c.b16 %v1605, %v1604
  %v1632 = vpack.c.b16 %v1607, %v1606
  %v1633 = vpack.c.b16 %v1609, %v1608
  %v1634 = vpack.c.b16 %v1611, %v1610
  %v1635 = vpack.c.b16 %v1613, %v1612
  %v1636 = vpack.c.b16 %v1615, %v1614
  %v1637 = vpack.c.b16 %v1617, %v1616
  %v1638 = vpack.c.b16 %v1619, %v1618
  %v1639 = vpack.c.b16 %v1621, %v1620
  %v1640 = vpack.c.b16 %v1623, %v1622
  %v1641 = vpack.c.b16 %v1625, %v1624
  %1658 = vmatprep.subr.bf16.mxu0 0
  %1659 = vmatpush1.bf16.msra.mxu0 %v1626
  %1660 = vmatprep.subr.bf16.mxu0 0
  %1661 = vmatpush1.bf16.msra.mxu0 %v1627
  %1662 = vmatprep.subr.bf16.mxu0 0
  %1663 = vmatpush1.bf16.msra.mxu0 %v1628
  %1664 = vmatprep.subr.bf16.mxu0 0
  %1665 = vmatpush1.bf16.msra.mxu0 %v1629
  %1666 = vmatprep.subr.bf16.mxu0 0
  %1667 = vmatpush1.bf16.msra.mxu0 %v1630
  %1668 = vmatprep.subr.bf16.mxu0 0
  %1669 = vmatpush1.bf16.msra.mxu0 %v1631
  %1670 = vmatprep.subr.bf16.mxu0 0
  %1671 = vmatpush1.bf16.msra.mxu0 %v1632
  %1672 = vmatprep.subr.bf16.mxu0 0
  %1673 = vmatpush1.bf16.msra.mxu0 %v1633
  %1674 = vmatprep.subr.bf16.mxu0 0
  %1675 = vmatpush1.bf16.msra.mxu0 %v1634
  %1676 = vmatprep.subr.bf16.mxu0 0
  %1677 = vmatpush1.bf16.msra.mxu0 %v1635
  %1678 = vmatprep.subr.bf16.mxu0 0
  %1679 = vmatpush1.bf16.msra.mxu0 %v1636
  %1680 = vmatprep.subr.bf16.mxu0 0
  %1681 = vmatpush1.bf16.msra.mxu0 %v1637
  %1682 = vmatprep.subr.bf16.mxu0 0
  %1683 = vmatpush1.bf16.msra.mxu0 %v1638
  %1684 = vmatprep.subr.bf16.mxu0 0
  %1685 = vmatpush1.bf16.msra.mxu0 %v1639
  %1686 = vmatprep.subr.bf16.mxu0 0
  %1687 = vmatpush1.bf16.msra.mxu0 %v1640
  %1688 = vmatprep.subr.bf16.mxu0 0
  %1689 = vmatpush1.bf16.msra.mxu0 %v1641
  %1690 = vmatprep.mubr.bf16.mxu0 %v1429
  %1691 = vmatmul.mubr.bf16.gmra.mrb[0].mxu0 %v1428
  %v1692 = vpop.f32.mrb[0].mxu0
  %v1693 = vadd.f32 %v1560, %v1692
  %v1694 = vpop.f32.mrb[0].mxu0
  %v1695 = vpop.f32.mrb[0].mxu0
  %v1696 = vadd.f32 %v1560, %v1695
  %v1697 = vpop.f32.mrb[0].mxu0
  %1698 = vmatprep.mubr.bf16.mxu0 %v1431
  %1699 = vmatmul.mubr.bf16.gmra.mrb[0].mxu0 %v1430
  %v1700 = vpop.f32.mrb[0].mxu0
  %v1701 = vadd.f32 %v1560, %v1700
  %v1702 = vpop.f32.mrb[0].mxu0
  %v1703 = vpop.f32.mrb[0].mxu0
  %v1704 = vadd.f32 %v1560, %v1703
  %v1705 = vpop.f32.mrb[0].mxu0
  %1706 = vmatprep.mubr.bf16.mxu0 %v1433
  %1707 = vmatmul.mubr.bf16.gmra.mrb[0].mxu0 %v1432
  %v1708 = vpop.f32.mrb[0].mxu0
  %v1709 = vadd.f32 %v1560, %v1708
  %v1710 = vpop.f32.mrb[0].mxu0
  %v1711 = vpop.f32.mrb[0].mxu0
  %v1712 = vadd.f32 %v1560, %v1711
  %v1713 = vpop.f32.mrb[0].mxu0
  %1714 = vmatprep.mubr.bf16.mxu0 %v1435
  %1715 = vmatmul.mubr.bf16.gmra.mrb[0].mxu0 %v1434
  %v1716 = vpop.f32.mrb[0].mxu0
  %v1717 = vadd.f32 %v1560, %v1716
  %v1718 = vpop.f32.mrb[0].mxu0
  %v1719 = vpop.f32.mrb[0].mxu0
  %v1720 = vadd.f32 %v1560, %v1719
  %v1721 = vpop.f32.mrb[0].mxu0
  %1722 = vmatprep.mubr.bf16.mxu0 %v1437
  %1723 = vmatmul.mubr.bf16.gmra.mrb[0].mxu0 %v1436
  %v1724 = vpop.f32.mrb[0].mxu0
  %v1725 = vadd.f32 %v1560, %v1724
  %v1726 = vpop.f32.mrb[0].mxu0
  %v1727 = vpop.f32.mrb[0].mxu0
  %v1728 = vadd.f32 %v1560, %v1727
  %v1729 = vpop.f32.mrb[0].mxu0
  %1730 = vmatprep.mubr.bf16.mxu0 %v1439
  %1731 = vmatmul.mubr.bf16.gmra.mrb[0].mxu0 %v1438
  %v1732 = vpop.f32.mrb[0].mxu0
  %v1733 = vadd.f32 %v1560, %v1732
  %v1734 = vpop.f32.mrb[0].mxu0
  %v1735 = vpop.f32.mrb[0].mxu0
  %v1736 = vadd.f32 %v1560, %v1735
  %v1737 = vpop.f32.mrb[0].mxu0
  %1738 = vmatprep.mubr.bf16.mxu0 %v1441
  %1739 = vmatmul.mubr.bf16.gmra.mrb[0].mxu0 %v1440
  %v1740 = vpop.f32.mrb[0].mxu0
  %v1741 = vadd.f32 %v1560, %v1740
  %v1742 = vpop.f32.mrb[0].mxu0
  %v1743 = vpop.f32.mrb[0].mxu0
  %v1744 = vadd.f32 %v1560, %v1743
  %v1745 = vpop.f32.mrb[0].mxu0
  %1746 = vmatprep.mubr.bf16.mxu0 %v1443
  %1747 = vmatmul.mubr.bf16.gmra.mrb[0].mxu0 %v1442
  %v1748 = vpop.f32.mrb[0].mxu0
  %v1749 = vadd.f32 %v1560, %v1748
  %v1750 = vpop.f32.mrb[0].mxu0
  %v1751 = vpop.f32.mrb[0].mxu0
  %v1752 = vadd.f32 %v1560, %v1751
  %v1753 = vpop.f32.mrb[0].mxu0
  %1754 = vmatprep.mubr.bf16.mxu0 %v1445
  %1755 = vmatmul.mubr.bf16.gmra.mrb[0].mxu0 %v1444
  %v1756 = vpop.f32.mrb[0].mxu0
  %v1757 = vadd.f32 %v1560, %v1756
  %v1758 = vpop.f32.mrb[0].mxu0
  %v1759 = vpop.f32.mrb[0].mxu0
  %v1760 = vadd.f32 %v1560, %v1759
  %v1761 = vpop.f32.mrb[0].mxu0
  %1762 = vmatprep.mubr.bf16.mxu0 %v1447
  %1763 = vmatmul.mubr.bf16.gmra.mrb[0].mxu0 %v1446
  %v1764 = vpop.f32.mrb[0].mxu0
  %v1765 = vadd.f32 %v1560, %v1764
  %v1766 = vpop.f32.mrb[0].mxu0
  %v1767 = vpop.f32.mrb[0].mxu0
  %v1768 = vadd.f32 %v1560, %v1767
  %v1769 = vpop.f32.mrb[0].mxu0
  %1770 = vmatprep.mubr.bf16.mxu0 %v1449
  %1771 = vmatmul.mubr.bf16.gmra.mrb[0].mxu0 %v1448
  %v1772 = vpop.f32.mrb[0].mxu0
  %v1773 = vadd.f32 %v1560, %v1772
  %v1774 = vpop.f32.mrb[0].mxu0
  %v1775 = vpop.f32.mrb[0].mxu0
  %v1776 = vadd.f32 %v1560, %v1775
  %v1777 = vpop.f32.mrb[0].mxu0
  %1778 = vmatprep.mubr.bf16.mxu0 %v1451
  %1779 = vmatmul.mubr.bf16.gmra.mrb[0].mxu0 %v1450
  %v1780 = vpop.f32.mrb[0].mxu0
  %v1781 = vadd.f32 %v1560, %v1780
  %v1782 = vpop.f32.mrb[0].mxu0
  %v1783 = vpop.f32.mrb[0].mxu0
  %v1784 = vadd.f32 %v1560, %v1783
  %v1785 = vpop.f32.mrb[0].mxu0
  %1786 = vmatprep.mubr.bf16.mxu0 %v1453
  %1787 = vmatmul.mubr.bf16.gmra.mrb[0].mxu0 %v1452
  %v1788 = vpop.f32.mrb[0].mxu0
  %v1789 = vadd.f32 %v1560, %v1788
  %v1790 = vpop.f32.mrb[0].mxu0
  %v1791 = vpop.f32.mrb[0].mxu0
  %v1792 = vadd.f32 %v1560, %v1791
  %v1793 = vpop.f32.mrb[0].mxu0
  %1794 = vmatprep.mubr.bf16.mxu0 %v1455
  %1795 = vmatmul.mubr.bf16.gmra.mrb[0].mxu0 %v1454
  %v1796 = vpop.f32.mrb[0].mxu0
  %v1797 = vadd.f32 %v1560, %v1796
  %v1798 = vpop.f32.mrb[0].mxu0
  %v1799 = vpop.f32.mrb[0].mxu0
  %v1800 = vadd.f32 %v1560, %v1799
  %v1801 = vpop.f32.mrb[0].mxu0
  %1802 = vmatprep.mubr.bf16.mxu0 %v1457
  %1803 = vmatmul.mubr.bf16.gmra.mrb[0].mxu0 %v1456
  %v1804 = vpop.f32.mrb[0].mxu0
  %v1805 = vadd.f32 %v1560, %v1804
  %v1806 = vpop.f32.mrb[0].mxu0
  %v1807 = vpop.f32.mrb[0].mxu0
  %v1808 = vadd.f32 %v1560, %v1807
  %v1809 = vpop.f32.mrb[0].mxu0
  %1810 = vmatprep.mubr.bf16.mxu0 %v1459
  %1811 = vmatmul.mubr.bf16.gmra.mrb[0].mxu0 %v1458
  %v1812 = vpop.f32.mrb[0].mxu0
  %v1813 = vadd.f32 %v1560, %v1812
  %v1814 = vpop.f32.mrb[0].mxu0
  %v1815 = vpop.f32.mrb[0].mxu0
  %v1816 = vadd.f32 %v1560, %v1815
  %v1817 = vpop.f32.mrb[0].mxu0
  %1818 = vmatprep.mubr.bf16.mxu0 %v1461
  %1819 = vmatmul.mubr.bf16.gmra.mrb[0].mxu0 %v1460
  %v1820 = vpop.f32.mrb[0].mxu0
  %v1821 = vadd.f32 %v1560, %v1820
  %v1822 = vpop.f32.mrb[0].mxu0
  %v1823 = vpop.f32.mrb[0].mxu0
  %v1824 = vadd.f32 %v1560, %v1823
  %v1825 = vpop.f32.mrb[0].mxu0
  %1826 = vmatprep.mubr.bf16.mxu0 %v1463
  %1827 = vmatmul.mubr.bf16.gmra.mrb[0].mxu0 %v1462
  %v1828 = vpop.f32.mrb[0].mxu0
  %v1829 = vadd.f32 %v1560, %v1828
  %v1830 = vpop.f32.mrb[0].mxu0
  %v1831 = vpop.f32.mrb[0].mxu0
  %v1832 = vadd.f32 %v1560, %v1831
  %v1833 = vpop.f32.mrb[0].mxu0
  %1834 = vmatprep.mubr.bf16.mxu0 %v1465
  %1835 = vmatmul.mubr.bf16.gmra.mrb[0].mxu0 %v1464
  %v1836 = vpop.f32.mrb[0].mxu0
  %v1837 = vadd.f32 %v1560, %v1836
  %v1838 = vpop.f32.mrb[0].mxu0
  %v1839 = vpop.f32.mrb[0].mxu0
  %v1840 = vadd.f32 %v1560, %v1839
  %v1841 = vpop.f32.mrb[0].mxu0
  %1842 = vmatprep.mubr.bf16.mxu0 %v1467
  %1843 = vmatmul.mubr.bf16.gmra.mrb[0].mxu0 %v1466
  %v1844 = vpop.f32.mrb[0].mxu0
  %v1845 = vadd.f32 %v1560, %v1844
  %v1846 = vpop.f32.mrb[0].mxu0
  %v1847 = vpop.f32.mrb[0].mxu0
  %v1848 = vadd.f32 %v1560, %v1847
  %v1849 = vpop.f32.mrb[0].mxu0
  %1850 = vmatprep.mubr.bf16.mxu0 %v1469
  %1851 = vmatmul.mubr.bf16.gmra.mrb[0].mxu0 %v1468
  %v1852 = vpop.f32.mrb[0].mxu0
  %v1853 = vadd.f32 %v1560, %v1852
  %v1854 = vpop.f32.mrb[0].mxu0
  %v1855 = vpop.f32.mrb[0].mxu0
  %v1856 = vadd.f32 %v1560, %v1855
  %v1857 = vpop.f32.mrb[0].mxu0
  %1858 = vmatprep.mubr.bf16.mxu0 %v1471
  %1859 = vmatmul.mubr.bf16.gmra.mrb[0].mxu0 %v1470
  %v1860 = vpop.f32.mrb[0].mxu0
  %v1861 = vadd.f32 %v1560, %v1860
  %v1862 = vpop.f32.mrb[0].mxu0
  %v1863 = vpop.f32.mrb[0].mxu0
  %v1864 = vadd.f32 %v1560, %v1863
  %v1865 = vpop.f32.mrb[0].mxu0
  %1866 = vmatprep.mubr.bf16.mxu0 %v1473
  %1867 = vmatmul.mubr.bf16.gmra.mrb[0].mxu0 %v1472
  %v1868 = vpop.f32.mrb[0].mxu0
  %v1869 = vadd.f32 %v1560, %v1868
  %v1870 = vpop.f32.mrb[0].mxu0
  %v1871 = vpop.f32.mrb[0].mxu0
  %v1872 = vadd.f32 %v1560, %v1871
  %v1873 = vpop.f32.mrb[0].mxu0
  %1874 = vmatprep.mubr.bf16.mxu0 %v1475
  %1875 = vmatmul.mubr.bf16.gmra.mrb[0].mxu0 %v1474
  %v1876 = vpop.f32.mrb[0].mxu0
  %v1877 = vadd.f32 %v1560, %v1876
  %v1878 = vpop.f32.mrb[0].mxu0
  %v1879 = vpop.f32.mrb[0].mxu0
  %v1880 = vadd.f32 %v1560, %v1879
  %v1881 = vpop.f32.mrb[0].mxu0
  %1882 = vmatprep.mubr.bf16.mxu0 %v1477
  %1883 = vmatmul.mubr.bf16.gmra.mrb[0].mxu0 %v1476
  %v1884 = vpop.f32.mrb[0].mxu0
  %v1885 = vadd.f32 %v1560, %v1884
  %v1886 = vpop.f32.mrb[0].mxu0
  %v1887 = vpop.f32.mrb[0].mxu0
  %v1888 = vadd.f32 %v1560, %v1887
  %v1889 = vpop.f32.mrb[0].mxu0
  %1890 = vmatprep.mubr.bf16.mxu0 %v1479
  %1891 = vmatmul.mubr.bf16.gmra.mrb[0].mxu0 %v1478
  %v1892 = vpop.f32.mrb[0].mxu0
  %v1893 = vadd.f32 %v1560, %v1892
  %v1894 = vpop.f32.mrb[0].mxu0
  %v1895 = vpop.f32.mrb[0].mxu0
  %v1896 = vadd.f32 %v1560, %v1895
  %v1897 = vpop.f32.mrb[0].mxu0
  %1898 = vmatprep.mubr.bf16.mxu0 %v1481
  %1899 = vmatmul.mubr.bf16.gmra.mrb[0].mxu0 %v1480
  %v1900 = vpop.f32.mrb[0].mxu0
  %v1901 = vadd.f32 %v1560, %v1900
  %v1902 = vpop.f32.mrb[0].mxu0
  %v1903 = vpop.f32.mrb[0].mxu0
  %v1904 = vadd.f32 %v1560, %v1903
  %v1905 = vpop.f32.mrb[0].mxu0
  %1906 = vmatprep.mubr.bf16.mxu0 %v1483
  %1907 = vmatmul.mubr.bf16.gmra.mrb[0].mxu0 %v1482
  %v1908 = vpop.f32.mrb[0].mxu0
  %v1909 = vadd.f32 %v1560, %v1908
  %v1910 = vpop.f32.mrb[0].mxu0
  %v1911 = vpop.f32.mrb[0].mxu0
  %v1912 = vadd.f32 %v1560, %v1911
  %v1913 = vpop.f32.mrb[0].mxu0
  %1914 = vmatprep.mubr.bf16.mxu0 %v1485
  %1915 = vmatmul.mubr.bf16.gmra.mrb[0].mxu0 %v1484
  %v1916 = vpop.f32.mrb[0].mxu0
  %v1917 = vadd.f32 %v1560, %v1916
  %v1918 = vpop.f32.mrb[0].mxu0
  %v1919 = vpop.f32.mrb[0].mxu0
  %v1920 = vadd.f32 %v1560, %v1919
  %v1921 = vpop.f32.mrb[0].mxu0
  %1922 = vmatprep.mubr.bf16.mxu0 %v1487
  %1923 = vmatmul.mubr.bf16.gmra.mrb[0].mxu0 %v1486
  %v1924 = vpop.f32.mrb[0].mxu0
  %v1925 = vadd.f32 %v1560, %v1924
  %v1926 = vpop.f32.mrb[0].mxu0
  %v1927 = vpop.f32.mrb[0].mxu0
  %v1928 = vadd.f32 %v1560, %v1927
  %v1929 = vpop.f32.mrb[0].mxu0
  %1930 = vmatprep.mubr.bf16.mxu0 %v1489
  %1931 = vmatmul.mubr.bf16.gmra.mrb[0].mxu0 %v1488
  %v1932 = vpop.f32.mrb[0].mxu0
  %v1933 = vadd.f32 %v1560, %v1932
  %v1934 = vpop.f32.mrb[0].mxu0
  %v1935 = vpop.f32.mrb[0].mxu0
  %v1936 = vadd.f32 %v1560, %v1935
  %v1937 = vpop.f32.mrb[0].mxu0
  %1938 = vmatprep.mubr.bf16.mxu0 %v1491
  %1939 = vmatmul.mubr.bf16.gmra.mrb[0].mxu0 %v1490
  %v1940 = vpop.f32.mrb[0].mxu0
  %v1941 = vadd.f32 %v1560, %v1940
  %v1942 = vpop.f32.mrb[0].mxu0
  %v1943 = vpop.f32.mrb[0].mxu0
  %v1944 = vadd.f32 %v1560, %v1943
  %v1945 = vpop.f32.mrb[0].mxu0
  %1946 = vmatprep.mubr.bf16.mxu0 %v1493
  %1947 = vmatmul.mubr.bf16.gmra.mrb[0].mxu0 %v1492
  %v1948 = vpop.f32.mrb[0].mxu0
  %v1949 = vadd.f32 %v1560, %v1948
  %v1950 = vpop.f32.mrb[0].mxu0
  %v1951 = vpop.f32.mrb[0].mxu0
  %v1952 = vadd.f32 %v1560, %v1951
  %v1953 = vpop.f32.mrb[0].mxu0
  %1954 = vmatprep.mubr.bf16.mxu0 %v1495
  %1955 = vmatmul.mubr.bf16.gmra.mrb[0].mxu0 %v1494
  %v1956 = vpop.f32.mrb[0].mxu0
  %v1957 = vadd.f32 %v1560, %v1956
  %v1958 = vpop.f32.mrb[0].mxu0
  %v1959 = vpop.f32.mrb[0].mxu0
  %v1960 = vadd.f32 %v1560, %v1959
  %v1961 = vpop.f32.mrb[0].mxu0
  %1962 = vmatprep.mubr.bf16.mxu0 %v1497
  %1963 = vmatmul.mubr.bf16.gmra.mrb[0].mxu0 %v1496
  %v1964 = vpop.f32.mrb[0].mxu0
  %v1965 = vadd.f32 %v1560, %v1964
  %v1966 = vpop.f32.mrb[0].mxu0
  %v1967 = vpop.f32.mrb[0].mxu0
  %v1968 = vadd.f32 %v1560, %v1967
  %v1969 = vpop.f32.mrb[0].mxu0
  %1970 = vmatprep.mubr.bf16.mxu0 %v1499
  %1971 = vmatmul.mubr.bf16.gmra.mrb[0].mxu0 %v1498
  %v1972 = vpop.f32.mrb[0].mxu0
  %v1973 = vadd.f32 %v1560, %v1972
  %v1974 = vpop.f32.mrb[0].mxu0
  %v1975 = vpop.f32.mrb[0].mxu0
  %v1976 = vadd.f32 %v1560, %v1975
  %v1977 = vpop.f32.mrb[0].mxu0
  %1978 = vmatprep.mubr.bf16.mxu0 %v1501
  %1979 = vmatmul.mubr.bf16.gmra.mrb[0].mxu0 %v1500
  %v1980 = vpop.f32.mrb[0].mxu0
  %v1981 = vadd.f32 %v1560, %v1980
  %v1982 = vpop.f32.mrb[0].mxu0
  %v1983 = vpop.f32.mrb[0].mxu0
  %v1984 = vadd.f32 %v1560, %v1983
  %v1985 = vpop.f32.mrb[0].mxu0
  %1986 = vmatprep.mubr.bf16.mxu0 %v1503
  %1987 = vmatmul.mubr.bf16.gmra.mrb[0].mxu0 %v1502
  %v1988 = vpop.f32.mrb[0].mxu0
  %v1989 = vadd.f32 %v1560, %v1988
  %v1990 = vpop.f32.mrb[0].mxu0
  %v1991 = vpop.f32.mrb[0].mxu0
  %v1992 = vadd.f32 %v1560, %v1991
  %v1993 = vpop.f32.mrb[0].mxu0
  %1994 = vmatprep.mubr.bf16.mxu0 %v1505
  %1995 = vmatmul.mubr.bf16.gmra.mrb[0].mxu0 %v1504
  %v1996 = vpop.f32.mrb[0].mxu0
  %v1997 = vadd.f32 %v1560, %v1996
  %v1998 = vpop.f32.mrb[0].mxu0
  %v1999 = vpop.f32.mrb[0].mxu0
  %v2000 = vadd.f32 %v1560, %v1999
  %v2001 = vpop.f32.mrb[0].mxu0
  %2002 = vmatprep.mubr.bf16.mxu0 %v1507
  %2003 = vmatmul.mubr.bf16.gmra.mrb[0].mxu0 %v1506
  %v2004 = vpop.f32.mrb[0].mxu0
  %v2005 = vadd.f32 %v1560, %v2004
  %v2006 = vpop.f32.mrb[0].mxu0
  %v2007 = vpop.f32.mrb[0].mxu0
  %v2008 = vadd.f32 %v1560, %v2007
  %v2009 = vpop.f32.mrb[0].mxu0
  %2010 = vmatprep.mubr.bf16.mxu0 %v1509
  %2011 = vmatmul.mubr.bf16.gmra.mrb[0].mxu0 %v1508
  %v2012 = vpop.f32.mrb[0].mxu0
  %v2013 = vadd.f32 %v1560, %v2012
  %v2014 = vpop.f32.mrb[0].mxu0
  %v2015 = vpop.f32.mrb[0].mxu0
  %v2016 = vadd.f32 %v1560, %v2015
  %v2017 = vpop.f32.mrb[0].mxu0
  %2018 = vmatprep.mubr.bf16.mxu0 %v1511
  %2019 = vmatmul.mubr.bf16.gmra.mrb[0].mxu0 %v1510
  %v2020 = vpop.f32.mrb[0].mxu0
  %v2021 = vadd.f32 %v1560, %v2020
  %v2022 = vpop.f32.mrb[0].mxu0
  %v2023 = vpop.f32.mrb[0].mxu0
  %v2024 = vadd.f32 %v1560, %v2023
  %v2025 = vpop.f32.mrb[0].mxu0
  %2026 = vmatprep.mubr.bf16.mxu0 %v1513
  %2027 = vmatmul.mubr.bf16.gmra.mrb[0].mxu0 %v1512
  %v2028 = vpop.f32.mrb[0].mxu0
  %v2029 = vadd.f32 %v1560, %v2028
  %v2030 = vpop.f32.mrb[0].mxu0
  %v2031 = vpop.f32.mrb[0].mxu0
  %v2032 = vadd.f32 %v1560, %v2031
  %v2033 = vpop.f32.mrb[0].mxu0
  %2034 = vmatprep.mubr.bf16.mxu0 %v1515
  %2035 = vmatmul.mubr.bf16.gmra.mrb[0].mxu0 %v1514
  %v2036 = vpop.f32.mrb[0].mxu0
  %v2037 = vadd.f32 %v1560, %v2036
  %v2038 = vpop.f32.mrb[0].mxu0
  %v2039 = vpop.f32.mrb[0].mxu0
  %v2040 = vadd.f32 %v1560, %v2039
  %v2041 = vpop.f32.mrb[0].mxu0
  %2042 = vmatprep.mubr.bf16.mxu0 %v1517
  %2043 = vmatmul.mubr.bf16.gmra.mrb[0].mxu0 %v1516
  %v2044 = vpop.f32.mrb[0].mxu0
  %v2045 = vadd.f32 %v1560, %v2044
  %v2046 = vpop.f32.mrb[0].mxu0
  %v2047 = vpop.f32.mrb[0].mxu0
  %v2048 = vadd.f32 %v1560, %v2047
  %v2049 = vpop.f32.mrb[0].mxu0
  %2050 = vmatprep.mubr.bf16.mxu0 %v1519
  %2051 = vmatmul.mubr.bf16.gmra.mrb[0].mxu0 %v1518
  %v2052 = vpop.f32.mrb[0].mxu0
  %v2053 = vadd.f32 %v1560, %v2052
  %v2054 = vpop.f32.mrb[0].mxu0
  %v2055 = vpop.f32.mrb[0].mxu0
  %v2056 = vadd.f32 %v1560, %v2055
  %v2057 = vpop.f32.mrb[0].mxu0
  %2058 = vmatprep.mubr.bf16.mxu0 %v1521
  %2059 = vmatmul.mubr.bf16.gmra.mrb[0].mxu0 %v1520
  %v2060 = vpop.f32.mrb[0].mxu0
  %v2061 = vadd.f32 %v1560, %v2060
  %v2062 = vpop.f32.mrb[0].mxu0
  %v2063 = vpop.f32.mrb[0].mxu0
  %v2064 = vadd.f32 %v1560, %v2063
  %v2065 = vpop.f32.mrb[0].mxu0
  %2066 = vmatprep.mubr.bf16.mxu0 %v1523
  %2067 = vmatmul.mubr.bf16.gmra.mrb[0].mxu0 %v1522
  %v2068 = vpop.f32.mrb[0].mxu0
  %v2069 = vadd.f32 %v1560, %v2068
  %v2070 = vpop.f32.mrb[0].mxu0
  %v2071 = vpop.f32.mrb[0].mxu0
  %v2072 = vadd.f32 %v1560, %v2071
  %v2073 = vpop.f32.mrb[0].mxu0
  %2074 = vmatprep.mubr.bf16.mxu0 %v1525
  %2075 = vmatmul.mubr.bf16.gmra.mrb[0].mxu0 %v1524
  %v2076 = vpop.f32.mrb[0].mxu0
  %v2077 = vadd.f32 %v1560, %v2076
  %v2078 = vpop.f32.mrb[0].mxu0
  %v2079 = vpop.f32.mrb[0].mxu0
  %v2080 = vadd.f32 %v1560, %v2079
  %v2081 = vpop.f32.mrb[0].mxu0
  %2082 = vmatprep.mubr.bf16.mxu0 %v1527
  %2083 = vmatmul.mubr.bf16.gmra.mrb[0].mxu0 %v1526
  %v2084 = vpop.f32.mrb[0].mxu0
  %v2085 = vadd.f32 %v1560, %v2084
  %v2086 = vpop.f32.mrb[0].mxu0
  %v2087 = vpop.f32.mrb[0].mxu0
  %v2088 = vadd.f32 %v1560, %v2087
  %v2089 = vpop.f32.mrb[0].mxu0
  %2090 = vmatprep.mubr.bf16.mxu0 %v1529
  %2091 = vmatmul.mubr.bf16.gmra.mrb[0].mxu0 %v1528
  %v2092 = vpop.f32.mrb[0].mxu0
  %v2093 = vadd.f32 %v1560, %v2092
  %v2094 = vpop.f32.mrb[0].mxu0
  %v2095 = vpop.f32.mrb[0].mxu0
  %v2096 = vadd.f32 %v1560, %v2095
  %v2097 = vpop.f32.mrb[0].mxu0
  %2098 = vmatprep.mubr.bf16.mxu0 %v1531
  %2099 = vmatmul.mubr.bf16.gmra.mrb[0].mxu0 %v1530
  %v2100 = vpop.f32.mrb[0].mxu0
  %v2101 = vadd.f32 %v1560, %v2100
  %v2102 = vpop.f32.mrb[0].mxu0
  %v2103 = vpop.f32.mrb[0].mxu0
  %v2104 = vadd.f32 %v1560, %v2103
  %v2105 = vpop.f32.mrb[0].mxu0
  %2106 = vmatprep.mubr.bf16.mxu0 %v1533
  %2107 = vmatmul.mubr.bf16.gmra.mrb[0].mxu0 %v1532
  %v2108 = vpop.f32.mrb[0].mxu0
  %v2109 = vadd.f32 %v1560, %v2108
  %v2110 = vpop.f32.mrb[0].mxu0
  %v2111 = vpop.f32.mrb[0].mxu0
  %v2112 = vadd.f32 %v1560, %v2111
  %v2113 = vpop.f32.mrb[0].mxu0
  %2114 = vmatprep.mubr.bf16.mxu0 %v1535
  %2115 = vmatmul.mubr.bf16.gmra.mrb[0].mxu0 %v1534
  %v2116 = vpop.f32.mrb[0].mxu0
  %v2117 = vadd.f32 %v1560, %v2116
  %v2118 = vpop.f32.mrb[0].mxu0
  %v2119 = vpop.f32.mrb[0].mxu0
  %v2120 = vadd.f32 %v1560, %v2119
  %v2121 = vpop.f32.mrb[0].mxu0
  %2122 = vmatprep.mubr.bf16.mxu0 %v1537
  %2123 = vmatmul.mubr.bf16.gmra.mrb[0].mxu0 %v1536
  %v2124 = vpop.f32.mrb[0].mxu0
  %v2125 = vadd.f32 %v1560, %v2124
  %v2126 = vpop.f32.mrb[0].mxu0
  %v2127 = vpop.f32.mrb[0].mxu0
  %v2128 = vadd.f32 %v1560, %v2127
  %v2129 = vpop.f32.mrb[0].mxu0
  %2130 = vmatprep.mubr.bf16.mxu0 %v1539
  %2131 = vmatmul.mubr.bf16.gmra.mrb[0].mxu0 %v1538
  %v2132 = vpop.f32.mrb[0].mxu0
  %v2133 = vadd.f32 %v1560, %v2132
  %v2134 = vpop.f32.mrb[0].mxu0
  %v2135 = vpop.f32.mrb[0].mxu0
  %v2136 = vadd.f32 %v1560, %v2135
  %v2137 = vpop.f32.mrb[0].mxu0
  %2138 = vmatprep.mubr.bf16.mxu0 %v1541
  %2139 = vmatmul.mubr.bf16.gmra.mrb[0].mxu0 %v1540
  %v2140 = vpop.f32.mrb[0].mxu0
  %v2141 = vadd.f32 %v1560, %v2140
  %v2142 = vpop.f32.mrb[0].mxu0
  %v2143 = vpop.f32.mrb[0].mxu0
  %v2144 = vadd.f32 %v1560, %v2143
  %v2145 = vpop.f32.mrb[0].mxu0
  %2146 = vmatprep.mubr.bf16.mxu0 %v1543
  %2147 = vmatmul.mubr.bf16.gmra.mrb[0].mxu0 %v1542
  %v2148 = vpop.f32.mrb[0].mxu0
  %v2149 = vadd.f32 %v1560, %v2148
  %v2150 = vpop.f32.mrb[0].mxu0
  %v2151 = vpop.f32.mrb[0].mxu0
  %v2152 = vadd.f32 %v1560, %v2151
  %v2153 = vpop.f32.mrb[0].mxu0
  %2154 = vmatprep.mubr.bf16.mxu0 %v1545
  %2155 = vmatmul.mubr.bf16.gmra.mrb[0].mxu0 %v1544
  %v2156 = vpop.f32.mrb[0].mxu0
  %v2157 = vadd.f32 %v1560, %v2156
  %v2158 = vpop.f32.mrb[0].mxu0
  %v2159 = vpop.f32.mrb[0].mxu0
  %v2160 = vadd.f32 %v1560, %v2159
  %v2161 = vpop.f32.mrb[0].mxu0
  %2162 = vmatprep.mubr.bf16.mxu0 %v1547
  %2163 = vmatmul.mubr.bf16.gmra.mrb[0].mxu0 %v1546
  %v2164 = vpop.f32.mrb[0].mxu0
  %v2165 = vadd.f32 %v1560, %v2164
  %v2166 = vpop.f32.mrb[0].mxu0
  %v2167 = vpop.f32.mrb[0].mxu0
  %v2168 = vadd.f32 %v1560, %v2167
  %v2169 = vpop.f32.mrb[0].mxu0
  %2170 = vmatprep.mubr.bf16.mxu0 %v1549
  %2171 = vmatmul.mubr.bf16.gmra.mrb[0].mxu0 %v1548
  %v2172 = vpop.f32.mrb[0].mxu0
  %v2173 = vadd.f32 %v1560, %v2172
  %v2174 = vpop.f32.mrb[0].mxu0
  %v2175 = vpop.f32.mrb[0].mxu0
  %v2176 = vadd.f32 %v1560, %v2175
  %v2177 = vpop.f32.mrb[0].mxu0
  %2178 = vmatprep.mubr.bf16.mxu0 %v1551
  %2179 = vmatmul.mubr.bf16.gmra.mrb[0].mxu0 %v1550
  %v2180 = vpop.f32.mrb[0].mxu0
  %v2181 = vadd.f32 %v1560, %v2180
  %v2182 = vpop.f32.mrb[0].mxu0
  %v2183 = vpop.f32.mrb[0].mxu0
  %v2184 = vadd.f32 %v1560, %v2183
  %v2185 = vpop.f32.mrb[0].mxu0
  %2186 = vmatprep.mubr.bf16.mxu0 %v1553
  %2187 = vmatmul.mubr.bf16.gmra.mrb[0].mxu0 %v1552
  %v2188 = vpop.f32.mrb[0].mxu0
  %v2189 = vadd.f32 %v1560, %v2188
  %v2190 = vpop.f32.mrb[0].mxu0
  %v2191 = vpop.f32.mrb[0].mxu0
  %v2192 = vadd.f32 %v1560, %v2191
  %v2193 = vpop.f32.mrb[0].mxu0
  %2194 = vmatprep.mubr.bf16.mxu0 %v1555
  %2195 = vmatmul.mubr.bf16.gmra.mrb[0].mxu0 %v1554
  %v2196 = vpop.f32.mrb[0].mxu0
  %v2197 = vadd.f32 %v1560, %v2196
  %v2198 = vpop.f32.mrb[0].mxu0
  %v2199 = vpop.f32.mrb[0].mxu0
  %v2200 = vadd.f32 %v1560, %v2199
  %v2201 = vpop.f32.mrb[0].mxu0
  %2202 = vdwg.mxu0
  %v2203 = vmax.f32 %v1693, 0.0
  %v2204 = vmax.f32 %v1696, 0.0
  %v2205 = vmax.f32 %v1701, 0.0
  %v2206 = vmax.f32 %v1704, 0.0
  %v2207 = vmax.f32 %v1709, 0.0
  %v2208 = vmax.f32 %v1712, 0.0
  %v2209 = vmax.f32 %v1717, 0.0
  %v2210 = vmax.f32 %v1720, 0.0
  %v2211 = vmax.f32 %v1725, 0.0
  %v2212 = vmax.f32 %v1728, 0.0
  %v2213 = vmax.f32 %v1733, 0.0
  %v2214 = vmax.f32 %v1736, 0.0
  %v2215 = vmax.f32 %v1741, 0.0
  %v2216 = vmax.f32 %v1744, 0.0
  %v2217 = vmax.f32 %v1749, 0.0
  %v2218 = vmax.f32 %v1752, 0.0
  %v2219 = vmax.f32 %v1757, 0.0
  %v2220 = vmax.f32 %v1760, 0.0
  %v2221 = vmax.f32 %v1765, 0.0
  %v2222 = vmax.f32 %v1768, 0.0
  %v2223 = vmax.f32 %v1773, 0.0
  %v2224 = vmax.f32 %v1776, 0.0
  %v2225 = vmax.f32 %v1781, 0.0
  %v2226 = vmax.f32 %v1784, 0.0
  %v2227 = vmax.f32 %v1789, 0.0
  %v2228 = vmax.f32 %v1792, 0.0
  %v2229 = vmax.f32 %v1797, 0.0
  %v2230 = vmax.f32 %v1800, 0.0
  %v2231 = vmax.f32 %v1805, 0.0
  %v2232 = vmax.f32 %v1808, 0.0
  %v2233 = vmax.f32 %v1813, 0.0
  %v2234 = vmax.f32 %v1816, 0.0
  %v2235 = vmax.f32 %v1821, 0.0
  %v2236 = vmax.f32 %v1824, 0.0
  %v2237 = vmax.f32 %v1829, 0.0
  %v2238 = vmax.f32 %v1832, 0.0
  %v2239 = vmax.f32 %v1837, 0.0
  %v2240 = vmax.f32 %v1840, 0.0
  %v2241 = vmax.f32 %v1845, 0.0
  %v2242 = vmax.f32 %v1848, 0.0
  %v2243 = vmax.f32 %v1853, 0.0
  %v2244 = vmax.f32 %v1856, 0.0
  %v2245 = vmax.f32 %v1861, 0.0
  %v2246 = vmax.f32 %v1864, 0.0
  %v2247 = vmax.f32 %v1869, 0.0
  %v2248 = vmax.f32 %v1872, 0.0
  %v2249 = vmax.f32 %v1877, 0.0
  %v2250 = vmax.f32 %v1880, 0.0
  %v2251 = vmax.f32 %v1885, 0.0
  %v2252 = vmax.f32 %v1888, 0.0
  %v2253 = vmax.f32 %v1893, 0.0
  %v2254 = vmax.f32 %v1896, 0.0
  %v2255 = vmax.f32 %v1901, 0.0
  %v2256 = vmax.f32 %v1904, 0.0
  %v2257 = vmax.f32 %v1909, 0.0
  %v2258 = vmax.f32 %v1912, 0.0
  %v2259 = vmax.f32 %v1917, 0.0
  %v2260 = vmax.f32 %v1920, 0.0
  %v2261 = vmax.f32 %v1925, 0.0
  %v2262 = vmax.f32 %v1928, 0.0
  %v2263 = vmax.f32 %v1933, 0.0
  %v2264 = vmax.f32 %v1936, 0.0
  %v2265 = vmax.f32 %v1941, 0.0
  %v2266 = vmax.f32 %v1944, 0.0
  %v2267 = vmax.f32 %v1949, 0.0
  %v2268 = vmax.f32 %v1952, 0.0
  %v2269 = vmax.f32 %v1957, 0.0
  %v2270 = vmax.f32 %v1960, 0.0
  %v2271 = vmax.f32 %v1965, 0.0
  %v2272 = vmax.f32 %v1968, 0.0
  %v2273 = vmax.f32 %v1973, 0.0
  %v2274 = vmax.f32 %v1976, 0.0
  %v2275 = vmax.f32 %v1981, 0.0
  %v2276 = vmax.f32 %v1984, 0.0
  %v2277 = vmax.f32 %v1989, 0.0
  %v2278 = vmax.f32 %v1992, 0.0
  %v2279 = vmax.f32 %v1997, 0.0
  %v2280 = vmax.f32 %v2000, 0.0
  %v2281 = vmax.f32 %v2005, 0.0
  %v2282 = vmax.f32 %v2008, 0.0
  %v2283 = vmax.f32 %v2013, 0.0
  %v2284 = vmax.f32 %v2016, 0.0
  %v2285 = vmax.f32 %v2021, 0.0
  %v2286 = vmax.f32 %v2024, 0.0
  %v2287 = vmax.f32 %v2029, 0.0
  %v2288 = vmax.f32 %v2032, 0.0
  %v2289 = vmax.f32 %v2037, 0.0
  %v2290 = vmax.f32 %v2040, 0.0
  %v2291 = vmax.f32 %v2045, 0.0
  %v2292 = vmax.f32 %v2048, 0.0
  %v2293 = vmax.f32 %v2053, 0.0
  %v2294 = vmax.f32 %v2056, 0.0
  %v2295 = vmax.f32 %v2061, 0.0
  %v2296 = vmax.f32 %v2064, 0.0
  %v2297 = vmax.f32 %v2069, 0.0
  %v2298 = vmax.f32 %v2072, 0.0
  %v2299 = vmax.f32 %v2077, 0.0
  %v2300 = vmax.f32 %v2080, 0.0
  %v2301 = vmax.f32 %v2085, 0.0
  %v2302 = vmax.f32 %v2088, 0.0
  %v2303 = vmax.f32 %v2093, 0.0
  %v2304 = vmax.f32 %v2096, 0.0
  %v2305 = vmax.f32 %v2101, 0.0
  %v2306 = vmax.f32 %v2104, 0.0
  %v2307 = vmax.f32 %v2109, 0.0
  %v2308 = vmax.f32 %v2112, 0.0
  %v2309 = vmax.f32 %v2117, 0.0
  %v2310 = vmax.f32 %v2120, 0.0
  %v2311 = vmax.f32 %v2125, 0.0
  %v2312 = vmax.f32 %v2128, 0.0
  %v2313 = vmax.f32 %v2133, 0.0
  %v2314 = vmax.f32 %v2136, 0.0
  %v2315 = vmax.f32 %v2141, 0.0
  %v2316 = vmax.f32 %v2144, 0.0
  %v2317 = vmax.f32 %v2149, 0.0
  %v2318 = vmax.f32 %v2152, 0.0
  %v2319 = vmax.f32 %v2157, 0.0
  %v2320 = vmax.f32 %v2160, 0.0
  %v2321 = vmax.f32 %v2165, 0.0
  %v2322 = vmax.f32 %v2168, 0.0
  %v2323 = vmax.f32 %v2173, 0.0
  %v2324 = vmax.f32 %v2176, 0.0
  %v2325 = vmax.f32 %v2181, 0.0
  %v2326 = vmax.f32 %v2184, 0.0
  %v2327 = vmax.f32 %v2189, 0.0
  %v2328 = vmax.f32 %v2192, 0.0
  %v2329 = vmax.f32 %v2197, 0.0
  %v2330 = vmax.f32 %v2200, 0.0
  %v2331 = vpack.c.bf16 %v2204, %v2203
  %v2332 = vpack.c.bf16 %v2206, %v2205
  %v2333 = vpack.c.bf16 %v2208, %v2207
  %v2334 = vpack.c.bf16 %v2210, %v2209
  %v2335 = vpack.c.bf16 %v2212, %v2211
  %v2336 = vpack.c.bf16 %v2214, %v2213
  %v2337 = vpack.c.bf16 %v2216, %v2215
  %v2338 = vpack.c.bf16 %v2218, %v2217
  %v2339 = vpack.c.bf16 %v2220, %v2219
  %v2340 = vpack.c.bf16 %v2222, %v2221
  %v2341 = vpack.c.bf16 %v2224, %v2223
  %v2342 = vpack.c.bf16 %v2226, %v2225
  %v2343 = vpack.c.bf16 %v2228, %v2227
  %v2344 = vpack.c.bf16 %v2230, %v2229
  %v2345 = vpack.c.bf16 %v2232, %v2231
  %v2346 = vpack.c.bf16 %v2234, %v2233
  %v2347 = vpack.c.bf16 %v2236, %v2235
  %v2348 = vpack.c.bf16 %v2238, %v2237
  %v2349 = vpack.c.bf16 %v2240, %v2239
  %v2350 = vpack.c.bf16 %v2242, %v2241
  %v2351 = vpack.c.bf16 %v2244, %v2243
  %v2352 = vpack.c.bf16 %v2246, %v2245
  %v2353 = vpack.c.bf16 %v2248, %v2247
  %v2354 = vpack.c.bf16 %v2250, %v2249
  %v2355 = vpack.c.bf16 %v2252, %v2251
  %v2356 = vpack.c.bf16 %v2254, %v2253
  %v2357 = vpack.c.bf16 %v2256, %v2255
  %v2358 = vpack.c.bf16 %v2258, %v2257
  %v2359 = vpack.c.bf16 %v2260, %v2259
  %v2360 = vpack.c.bf16 %v2262, %v2261
  %v2361 = vpack.c.bf16 %v2264, %v2263
  %v2362 = vpack.c.bf16 %v2266, %v2265
  %v2363 = vpack.c.bf16 %v2268, %v2267
  %v2364 = vpack.c.bf16 %v2270, %v2269
  %v2365 = vpack.c.bf16 %v2272, %v2271
  %v2366 = vpack.c.bf16 %v2274, %v2273
  %v2367 = vpack.c.bf16 %v2276, %v2275
  %v2368 = vpack.c.bf16 %v2278, %v2277
  %v2369 = vpack.c.bf16 %v2280, %v2279
  %v2370 = vpack.c.bf16 %v2282, %v2281
  %v2371 = vpack.c.bf16 %v2284, %v2283
  %v2372 = vpack.c.bf16 %v2286, %v2285
  %v2373 = vpack.c.bf16 %v2288, %v2287
  %v2374 = vpack.c.bf16 %v2290, %v2289
  %v2375 = vpack.c.bf16 %v2292, %v2291
  %v2376 = vpack.c.bf16 %v2294, %v2293
  %v2377 = vpack.c.bf16 %v2296, %v2295
  %v2378 = vpack.c.bf16 %v2298, %v2297
  %v2379 = vpack.c.bf16 %v2300, %v2299
  %v2380 = vpack.c.bf16 %v2302, %v2301
  %v2381 = vpack.c.bf16 %v2304, %v2303
  %v2382 = vpack.c.bf16 %v2306, %v2305
  %v2383 = vpack.c.bf16 %v2308, %v2307
  %v2384 = vpack.c.bf16 %v2310, %v2309
  %v2385 = vpack.c.bf16 %v2312, %v2311
  %v2386 = vpack.c.bf16 %v2314, %v2313
  %v2387 = vpack.c.bf16 %v2316, %v2315
  %v2388 = vpack.c.bf16 %v2318, %v2317
  %v2389 = vpack.c.bf16 %v2320, %v2319
  %v2390 = vpack.c.bf16 %v2322, %v2321
  %v2391 = vpack.c.bf16 %v2324, %v2323
  %v2392 = vpack.c.bf16 %v2326, %v2325
  %v2393 = vpack.c.bf16 %v2328, %v2327
  %v2394 = vpack.c.bf16 %v2330, %v2329
  %v2396 = vlaneseq
  %v2397 = vshrl.u32 %v2396, 7
  %v2398 = vsub.s32 0, %v2397
  %v2399 = vrot.slane %v80, %v2398
  %v2417 = vunpack.c.l.b16 %v64
  %v2418 = vunpack.c.l.b16 %v65
  %v2419 = vunpack.c.l.b16 %v66
  %v2420 = vunpack.c.l.b16 %v67
  %v2421 = vunpack.c.l.b16 %v68
  %v2422 = vunpack.c.l.b16 %v69
  %v2423 = vunpack.c.l.b16 %v70
  %v2424 = vunpack.c.l.b16 %v71
  %v2425 = vunpack.c.l.b16 %v72
  %v2426 = vunpack.c.l.b16 %v73
  %v2427 = vunpack.c.l.b16 %v74
  %v2428 = vunpack.c.l.b16 %v75
  %v2429 = vunpack.c.l.b16 %v76
  %v2430 = vunpack.c.l.b16 %v77
  %v2431 = vunpack.c.l.b16 %v78
  %v2432 = vunpack.c.l.b16 %v79
  %v2433 = vpack.c.b16 %v2418, %v2417
  %v2434 = vpack.c.b16 %v2420, %v2419
  %v2435 = vpack.c.b16 %v2422, %v2421
  %v2436 = vpack.c.b16 %v2424, %v2423
  %v2437 = vpack.c.b16 %v2426, %v2425
  %v2438 = vpack.c.b16 %v2428, %v2427
  %v2439 = vpack.c.b16 %v2430, %v2429
  %v2440 = vpack.c.b16 %v2432, %v2431
  %2449 = vmatprep.subr.bf16.mxu0 0
  %2450 = vmatpush1.bf16.msra.mxu0 %v2433
  %2451 = vmatprep.subr.bf16.mxu0 0
  %2452 = vmatpush1.bf16.msra.mxu0 %v2434
  %2453 = vmatprep.subr.bf16.mxu0 0
  %2454 = vmatpush1.bf16.msra.mxu0 %v2435
  %2455 = vmatprep.subr.bf16.mxu0 0
  %2456 = vmatpush1.bf16.msra.mxu0 %v2436
  %2457 = vmatprep.subr.bf16.mxu0 0
  %2458 = vmatpush1.bf16.msra.mxu0 %v2437
  %2459 = vmatprep.subr.bf16.mxu0 0
  %2460 = vmatpush1.bf16.msra.mxu0 %v2438
  %2461 = vmatprep.subr.bf16.mxu0 0
  %2462 = vmatpush1.bf16.msra.mxu0 %v2439
  %2463 = vmatprep.subr.bf16.mxu0 0
  %2464 = vmatpush1.bf16.msra.mxu0 %v2440
  %2465 = vmatprep.subr.bf16.mxu0 0
  %2466 = vmatpush1.bf16.msra.mxu0 0
  %2467 = vmatprep.subr.bf16.mxu0 0
  %2468 = vmatpush1.bf16.msra.mxu0 0
  %2469 = vmatprep.subr.bf16.mxu0 0
  %2470 = vmatpush1.bf16.msra.mxu0 0
  %2471 = vmatprep.subr.bf16.mxu0 0
  %2472 = vmatpush1.bf16.msra.mxu0 0
  %2473 = vmatprep.subr.bf16.mxu0 0
  %2474 = vmatpush1.bf16.msra.mxu0 0
  %2475 = vmatprep.subr.bf16.mxu0 0
  %2476 = vmatpush1.bf16.msra.mxu0 0
  %2477 = vmatprep.subr.bf16.mxu0 0
  %2478 = vmatpush1.bf16.msra.mxu0 0
  %2479 = vmatprep.subr.bf16.mxu0 0
  %2480 = vmatpush1.bf16.msra.mxu0 0
  %2481 = vmatprep.mubr.bf16.mxu0 0
  %2482 = vmatmul.mubr.bf16.gmra.mrb[0].mxu0 %v2331
  %v2483 = vpop.f32.mrb[0].mxu0
  %v2484 = vadd.f32 %v2399, %v2483
  %v2485 = vpop.f32.mrb[0].mxu0
  %v2486 = vpop.f32.mrb[0].mxu0
  %v2487 = vadd.f32 %v2399, %v2486
  %v2488 = vpop.f32.mrb[0].mxu0
  %2489 = vmatprep.mubr.bf16.mxu0 0
  %2490 = vmatmul.mubr.bf16.gmra.mrb[0].mxu0 %v2332
  %v2491 = vpop.f32.mrb[0].mxu0
  %v2492 = vadd.f32 %v2399, %v2491
  %v2493 = vpop.f32.mrb[0].mxu0
  %v2494 = vpop.f32.mrb[0].mxu0
  %v2495 = vadd.f32 %v2399, %v2494
  %v2496 = vpop.f32.mrb[0].mxu0
  %2497 = vmatprep.mubr.bf16.mxu0 0
  %2498 = vmatmul.mubr.bf16.gmra.mrb[0].mxu0 %v2333
  %v2499 = vpop.f32.mrb[0].mxu0
  %v2500 = vadd.f32 %v2399, %v2499
  %v2501 = vpop.f32.mrb[0].mxu0
  %v2502 = vpop.f32.mrb[0].mxu0
  %v2503 = vadd.f32 %v2399, %v2502
  %v2504 = vpop.f32.mrb[0].mxu0
  %2505 = vmatprep.mubr.bf16.mxu0 0
  %2506 = vmatmul.mubr.bf16.gmra.mrb[0].mxu0 %v2334
  %v2507 = vpop.f32.mrb[0].mxu0
  %v2508 = vadd.f32 %v2399, %v2507
  %v2509 = vpop.f32.mrb[0].mxu0
  %v2510 = vpop.f32.mrb[0].mxu0
  %v2511 = vadd.f32 %v2399, %v2510
  %v2512 = vpop.f32.mrb[0].mxu0
  %2513 = vmatprep.mubr.bf16.mxu0 0
  %2514 = vmatmul.mubr.bf16.gmra.mrb[0].mxu0 %v2335
  %v2515 = vpop.f32.mrb[0].mxu0
  %v2516 = vadd.f32 %v2399, %v2515
  %v2517 = vpop.f32.mrb[0].mxu0
  %v2518 = vpop.f32.mrb[0].mxu0
  %v2519 = vadd.f32 %v2399, %v2518
  %v2520 = vpop.f32.mrb[0].mxu0
  %2521 = vmatprep.mubr.bf16.mxu0 0
  %2522 = vmatmul.mubr.bf16.gmra.mrb[0].mxu0 %v2336
  %v2523 = vpop.f32.mrb[0].mxu0
  %v2524 = vadd.f32 %v2399, %v2523
  %v2525 = vpop.f32.mrb[0].mxu0
  %v2526 = vpop.f32.mrb[0].mxu0
  %v2527 = vadd.f32 %v2399, %v2526
  %v2528 = vpop.f32.mrb[0].mxu0
  %2529 = vmatprep.mubr.bf16.mxu0 0
  %2530 = vmatmul.mubr.bf16.gmra.mrb[0].mxu0 %v2337
  %v2531 = vpop.f32.mrb[0].mxu0
  %v2532 = vadd.f32 %v2399, %v2531
  %v2533 = vpop.f32.mrb[0].mxu0
  %v2534 = vpop.f32.mrb[0].mxu0
  %v2535 = vadd.f32 %v2399, %v2534
  %v2536 = vpop.f32.mrb[0].mxu0
  %2537 = vmatprep.mubr.bf16.mxu0 0
  %2538 = vmatmul.mubr.bf16.gmra.mrb[0].mxu0 %v2338
  %v2539 = vpop.f32.mrb[0].mxu0
  %v2540 = vadd.f32 %v2399, %v2539
  %v2541 = vpop.f32.mrb[0].mxu0
  %v2542 = vpop.f32.mrb[0].mxu0
  %v2543 = vadd.f32 %v2399, %v2542
  %v2544 = vpop.f32.mrb[0].mxu0
  %2545 = vmatprep.mubr.bf16.mxu0 0
  %2546 = vmatmul.mubr.bf16.gmra.mrb[0].mxu0 %v2339
  %v2547 = vpop.f32.mrb[0].mxu0
  %v2548 = vadd.f32 %v2399, %v2547
  %v2549 = vpop.f32.mrb[0].mxu0
  %v2550 = vpop.f32.mrb[0].mxu0
  %v2551 = vadd.f32 %v2399, %v2550
  %v2552 = vpop.f32.mrb[0].mxu0
  %2553 = vmatprep.mubr.bf16.mxu0 0
  %2554 = vmatmul.mubr.bf16.gmra.mrb[0].mxu0 %v2340
  %v2555 = vpop.f32.mrb[0].mxu0
  %v2556 = vadd.f32 %v2399, %v2555
  %v2557 = vpop.f32.mrb[0].mxu0
  %v2558 = vpop.f32.mrb[0].mxu0
  %v2559 = vadd.f32 %v2399, %v2558
  %v2560 = vpop.f32.mrb[0].mxu0
  %2561 = vmatprep.mubr.bf16.mxu0 0
  %2562 = vmatmul.mubr.bf16.gmra.mrb[0].mxu0 %v2341
  %v2563 = vpop.f32.mrb[0].mxu0
  %v2564 = vadd.f32 %v2399, %v2563
  %v2565 = vpop.f32.mrb[0].mxu0
  %v2566 = vpop.f32.mrb[0].mxu0
  %v2567 = vadd.f32 %v2399, %v2566
  %v2568 = vpop.f32.mrb[0].mxu0
  %2569 = vmatprep.mubr.bf16.mxu0 0
  %2570 = vmatmul.mubr.bf16.gmra.mrb[0].mxu0 %v2342
  %v2571 = vpop.f32.mrb[0].mxu0
  %v2572 = vadd.f32 %v2399, %v2571
  %v2573 = vpop.f32.mrb[0].mxu0
  %v2574 = vpop.f32.mrb[0].mxu0
  %v2575 = vadd.f32 %v2399, %v2574
  %v2576 = vpop.f32.mrb[0].mxu0
  %2577 = vmatprep.mubr.bf16.mxu0 0
  %2578 = vmatmul.mubr.bf16.gmra.mrb[0].mxu0 %v2343
  %v2579 = vpop.f32.mrb[0].mxu0
  %v2580 = vadd.f32 %v2399, %v2579
  %v2581 = vpop.f32.mrb[0].mxu0
  %v2582 = vpop.f32.mrb[0].mxu0
  %v2583 = vadd.f32 %v2399, %v2582
  %v2584 = vpop.f32.mrb[0].mxu0
  %2585 = vmatprep.mubr.bf16.mxu0 0
  %2586 = vmatmul.mubr.bf16.gmra.mrb[0].mxu0 %v2344
  %v2587 = vpop.f32.mrb[0].mxu0
  %v2588 = vadd.f32 %v2399, %v2587
  %v2589 = vpop.f32.mrb[0].mxu0
  %v2590 = vpop.f32.mrb[0].mxu0
  %v2591 = vadd.f32 %v2399, %v2590
  %v2592 = vpop.f32.mrb[0].mxu0
  %2593 = vmatprep.mubr.bf16.mxu0 0
  %2594 = vmatmul.mubr.bf16.gmra.mrb[0].mxu0 %v2345
  %v2595 = vpop.f32.mrb[0].mxu0
  %v2596 = vadd.f32 %v2399, %v2595
  %v2597 = vpop.f32.mrb[0].mxu0
  %v2598 = vpop.f32.mrb[0].mxu0
  %v2599 = vadd.f32 %v2399, %v2598
  %v2600 = vpop.f32.mrb[0].mxu0
  %2601 = vmatprep.mubr.bf16.mxu0 0
  %2602 = vmatmul.mubr.bf16.gmra.mrb[0].mxu0 %v2346
  %v2603 = vpop.f32.mrb[0].mxu0
  %v2604 = vadd.f32 %v2399, %v2603
  %v2605 = vpop.f32.mrb[0].mxu0
  %v2606 = vpop.f32.mrb[0].mxu0
  %v2607 = vadd.f32 %v2399, %v2606
  %v2608 = vpop.f32.mrb[0].mxu0
  %2609 = vmatprep.mubr.bf16.mxu0 0
  %2610 = vmatmul.mubr.bf16.gmra.mrb[0].mxu0 %v2347
  %v2611 = vpop.f32.mrb[0].mxu0
  %v2612 = vadd.f32 %v2399, %v2611
  %v2613 = vpop.f32.mrb[0].mxu0
  %v2614 = vpop.f32.mrb[0].mxu0
  %v2615 = vadd.f32 %v2399, %v2614
  %v2616 = vpop.f32.mrb[0].mxu0
  %2617 = vmatprep.mubr.bf16.mxu0 0
  %2618 = vmatmul.mubr.bf16.gmra.mrb[0].mxu0 %v2348
  %v2619 = vpop.f32.mrb[0].mxu0
  %v2620 = vadd.f32 %v2399, %v2619
  %v2621 = vpop.f32.mrb[0].mxu0
  %v2622 = vpop.f32.mrb[0].mxu0
  %v2623 = vadd.f32 %v2399, %v2622
  %v2624 = vpop.f32.mrb[0].mxu0
  %2625 = vmatprep.mubr.bf16.mxu0 0
  %2626 = vmatmul.mubr.bf16.gmra.mrb[0].mxu0 %v2349
  %v2627 = vpop.f32.mrb[0].mxu0
  %v2628 = vadd.f32 %v2399, %v2627
  %v2629 = vpop.f32.mrb[0].mxu0
  %v2630 = vpop.f32.mrb[0].mxu0
  %v2631 = vadd.f32 %v2399, %v2630
  %v2632 = vpop.f32.mrb[0].mxu0
  %2633 = vmatprep.mubr.bf16.mxu0 0
  %2634 = vmatmul.mubr.bf16.gmra.mrb[0].mxu0 %v2350
  %v2635 = vpop.f32.mrb[0].mxu0
  %v2636 = vadd.f32 %v2399, %v2635
  %v2637 = vpop.f32.mrb[0].mxu0
  %v2638 = vpop.f32.mrb[0].mxu0
  %v2639 = vadd.f32 %v2399, %v2638
  %v2640 = vpop.f32.mrb[0].mxu0
  %2641 = vmatprep.mubr.bf16.mxu0 0
  %2642 = vmatmul.mubr.bf16.gmra.mrb[0].mxu0 %v2351
  %v2643 = vpop.f32.mrb[0].mxu0
  %v2644 = vadd.f32 %v2399, %v2643
  %v2645 = vpop.f32.mrb[0].mxu0
  %v2646 = vpop.f32.mrb[0].mxu0
  %v2647 = vadd.f32 %v2399, %v2646
  %v2648 = vpop.f32.mrb[0].mxu0
  %2649 = vmatprep.mubr.bf16.mxu0 0
  %2650 = vmatmul.mubr.bf16.gmra.mrb[0].mxu0 %v2352
  %v2651 = vpop.f32.mrb[0].mxu0
  %v2652 = vadd.f32 %v2399, %v2651
  %v2653 = vpop.f32.mrb[0].mxu0
  %v2654 = vpop.f32.mrb[0].mxu0
  %v2655 = vadd.f32 %v2399, %v2654
  %v2656 = vpop.f32.mrb[0].mxu0
  %2657 = vmatprep.mubr.bf16.mxu0 0
  %2658 = vmatmul.mubr.bf16.gmra.mrb[0].mxu0 %v2353
  %v2659 = vpop.f32.mrb[0].mxu0
  %v2660 = vadd.f32 %v2399, %v2659
  %v2661 = vpop.f32.mrb[0].mxu0
  %v2662 = vpop.f32.mrb[0].mxu0
  %v2663 = vadd.f32 %v2399, %v2662
  %v2664 = vpop.f32.mrb[0].mxu0
  %2665 = vmatprep.mubr.bf16.mxu0 0
  %2666 = vmatmul.mubr.bf16.gmra.mrb[0].mxu0 %v2354
  %v2667 = vpop.f32.mrb[0].mxu0
  %v2668 = vadd.f32 %v2399, %v2667
  %v2669 = vpop.f32.mrb[0].mxu0
  %v2670 = vpop.f32.mrb[0].mxu0
  %v2671 = vadd.f32 %v2399, %v2670
  %v2672 = vpop.f32.mrb[0].mxu0
  %2673 = vmatprep.mubr.bf16.mxu0 0
  %2674 = vmatmul.mubr.bf16.gmra.mrb[0].mxu0 %v2355
  %v2675 = vpop.f32.mrb[0].mxu0
  %v2676 = vadd.f32 %v2399, %v2675
  %v2677 = vpop.f32.mrb[0].mxu0
  %v2678 = vpop.f32.mrb[0].mxu0
  %v2679 = vadd.f32 %v2399, %v2678
  %v2680 = vpop.f32.mrb[0].mxu0
  %2681 = vmatprep.mubr.bf16.mxu0 0
  %2682 = vmatmul.mubr.bf16.gmra.mrb[0].mxu0 %v2356
  %v2683 = vpop.f32.mrb[0].mxu0
  %v2684 = vadd.f32 %v2399, %v2683
  %v2685 = vpop.f32.mrb[0].mxu0
  %v2686 = vpop.f32.mrb[0].mxu0
  %v2687 = vadd.f32 %v2399, %v2686
  %v2688 = vpop.f32.mrb[0].mxu0
  %2689 = vmatprep.mubr.bf16.mxu0 0
  %2690 = vmatmul.mubr.bf16.gmra.mrb[0].mxu0 %v2357
  %v2691 = vpop.f32.mrb[0].mxu0
  %v2692 = vadd.f32 %v2399, %v2691
  %v2693 = vpop.f32.mrb[0].mxu0
  %v2694 = vpop.f32.mrb[0].mxu0
  %v2695 = vadd.f32 %v2399, %v2694
  %v2696 = vpop.f32.mrb[0].mxu0
  %2697 = vmatprep.mubr.bf16.mxu0 0
  %2698 = vmatmul.mubr.bf16.gmra.mrb[0].mxu0 %v2358
  %v2699 = vpop.f32.mrb[0].mxu0
  %v2700 = vadd.f32 %v2399, %v2699
  %v2701 = vpop.f32.mrb[0].mxu0
  %v2702 = vpop.f32.mrb[0].mxu0
  %v2703 = vadd.f32 %v2399, %v2702
  %v2704 = vpop.f32.mrb[0].mxu0
  %2705 = vmatprep.mubr.bf16.mxu0 0
  %2706 = vmatmul.mubr.bf16.gmra.mrb[0].mxu0 %v2359
  %v2707 = vpop.f32.mrb[0].mxu0
  %v2708 = vadd.f32 %v2399, %v2707
  %v2709 = vpop.f32.mrb[0].mxu0
  %v2710 = vpop.f32.mrb[0].mxu0
  %v2711 = vadd.f32 %v2399, %v2710
  %v2712 = vpop.f32.mrb[0].mxu0
  %2713 = vmatprep.mubr.bf16.mxu0 0
  %2714 = vmatmul.mubr.bf16.gmra.mrb[0].mxu0 %v2360
  %v2715 = vpop.f32.mrb[0].mxu0
  %v2716 = vadd.f32 %v2399, %v2715
  %v2717 = vpop.f32.mrb[0].mxu0
  %v2718 = vpop.f32.mrb[0].mxu0
  %v2719 = vadd.f32 %v2399, %v2718
  %v2720 = vpop.f32.mrb[0].mxu0
  %2721 = vmatprep.mubr.bf16.mxu0 0
  %2722 = vmatmul.mubr.bf16.gmra.mrb[0].mxu0 %v2361
  %v2723 = vpop.f32.mrb[0].mxu0
  %v2724 = vadd.f32 %v2399, %v2723
  %v2725 = vpop.f32.mrb[0].mxu0
  %v2726 = vpop.f32.mrb[0].mxu0
  %v2727 = vadd.f32 %v2399, %v2726
  %v2728 = vpop.f32.mrb[0].mxu0
  %2729 = vmatprep.mubr.bf16.mxu0 0
  %2730 = vmatmul.mubr.bf16.gmra.mrb[0].mxu0 %v2362
  %v2731 = vpop.f32.mrb[0].mxu0
  %v2732 = vadd.f32 %v2399, %v2731
  %v2733 = vpop.f32.mrb[0].mxu0
  %v2734 = vpop.f32.mrb[0].mxu0
  %v2735 = vadd.f32 %v2399, %v2734
  %v2736 = vpop.f32.mrb[0].mxu0
  %2737 = vmatprep.mubr.bf16.mxu0 0
  %2738 = vmatmul.mubr.bf16.gmra.mrb[0].mxu0 %v2363
  %v2739 = vpop.f32.mrb[0].mxu0
  %v2740 = vadd.f32 %v2399, %v2739
  %v2741 = vpop.f32.mrb[0].mxu0
  %v2742 = vpop.f32.mrb[0].mxu0
  %v2743 = vadd.f32 %v2399, %v2742
  %v2744 = vpop.f32.mrb[0].mxu0
  %2745 = vmatprep.mubr.bf16.mxu0 0
  %2746 = vmatmul.mubr.bf16.gmra.mrb[0].mxu0 %v2364
  %v2747 = vpop.f32.mrb[0].mxu0
  %v2748 = vadd.f32 %v2399, %v2747
  %v2749 = vpop.f32.mrb[0].mxu0
  %v2750 = vpop.f32.mrb[0].mxu0
  %v2751 = vadd.f32 %v2399, %v2750
  %v2752 = vpop.f32.mrb[0].mxu0
  %2753 = vmatprep.mubr.bf16.mxu0 0
  %2754 = vmatmul.mubr.bf16.gmra.mrb[0].mxu0 %v2365
  %v2755 = vpop.f32.mrb[0].mxu0
  %v2756 = vadd.f32 %v2399, %v2755
  %v2757 = vpop.f32.mrb[0].mxu0
  %v2758 = vpop.f32.mrb[0].mxu0
  %v2759 = vadd.f32 %v2399, %v2758
  %v2760 = vpop.f32.mrb[0].mxu0
  %2761 = vmatprep.mubr.bf16.mxu0 0
  %2762 = vmatmul.mubr.bf16.gmra.mrb[0].mxu0 %v2366
  %v2763 = vpop.f32.mrb[0].mxu0
  %v2764 = vadd.f32 %v2399, %v2763
  %v2765 = vpop.f32.mrb[0].mxu0
  %v2766 = vpop.f32.mrb[0].mxu0
  %v2767 = vadd.f32 %v2399, %v2766
  %v2768 = vpop.f32.mrb[0].mxu0
  %2769 = vmatprep.mubr.bf16.mxu0 0
  %2770 = vmatmul.mubr.bf16.gmra.mrb[0].mxu0 %v2367
  %v2771 = vpop.f32.mrb[0].mxu0
  %v2772 = vadd.f32 %v2399, %v2771
  %v2773 = vpop.f32.mrb[0].mxu0
  %v2774 = vpop.f32.mrb[0].mxu0
  %v2775 = vadd.f32 %v2399, %v2774
  %v2776 = vpop.f32.mrb[0].mxu0
  %2777 = vmatprep.mubr.bf16.mxu0 0
  %2778 = vmatmul.mubr.bf16.gmra.mrb[0].mxu0 %v2368
  %v2779 = vpop.f32.mrb[0].mxu0
  %v2780 = vadd.f32 %v2399, %v2779
  %v2781 = vpop.f32.mrb[0].mxu0
  %v2782 = vpop.f32.mrb[0].mxu0
  %v2783 = vadd.f32 %v2399, %v2782
  %v2784 = vpop.f32.mrb[0].mxu0
  %2785 = vmatprep.mubr.bf16.mxu0 0
  %2786 = vmatmul.mubr.bf16.gmra.mrb[0].mxu0 %v2369
  %v2787 = vpop.f32.mrb[0].mxu0
  %v2788 = vadd.f32 %v2399, %v2787
  %v2789 = vpop.f32.mrb[0].mxu0
  %v2790 = vpop.f32.mrb[0].mxu0
  %v2791 = vadd.f32 %v2399, %v2790
  %v2792 = vpop.f32.mrb[0].mxu0
  %2793 = vmatprep.mubr.bf16.mxu0 0
  %2794 = vmatmul.mubr.bf16.gmra.mrb[0].mxu0 %v2370
  %v2795 = vpop.f32.mrb[0].mxu0
  %v2796 = vadd.f32 %v2399, %v2795
  %v2797 = vpop.f32.mrb[0].mxu0
  %v2798 = vpop.f32.mrb[0].mxu0
  %v2799 = vadd.f32 %v2399, %v2798
  %v2800 = vpop.f32.mrb[0].mxu0
  %2801 = vmatprep.mubr.bf16.mxu0 0
  %2802 = vmatmul.mubr.bf16.gmra.mrb[0].mxu0 %v2371
  %v2803 = vpop.f32.mrb[0].mxu0
  %v2804 = vadd.f32 %v2399, %v2803
  %v2805 = vpop.f32.mrb[0].mxu0
  %v2806 = vpop.f32.mrb[0].mxu0
  %v2807 = vadd.f32 %v2399, %v2806
  %v2808 = vpop.f32.mrb[0].mxu0
  %2809 = vmatprep.mubr.bf16.mxu0 0
  %2810 = vmatmul.mubr.bf16.gmra.mrb[0].mxu0 %v2372
  %v2811 = vpop.f32.mrb[0].mxu0
  %v2812 = vadd.f32 %v2399, %v2811
  %v2813 = vpop.f32.mrb[0].mxu0
  %v2814 = vpop.f32.mrb[0].mxu0
  %v2815 = vadd.f32 %v2399, %v2814
  %v2816 = vpop.f32.mrb[0].mxu0
  %2817 = vmatprep.mubr.bf16.mxu0 0
  %2818 = vmatmul.mubr.bf16.gmra.mrb[0].mxu0 %v2373
  %v2819 = vpop.f32.mrb[0].mxu0
  %v2820 = vadd.f32 %v2399, %v2819
  %v2821 = vpop.f32.mrb[0].mxu0
  %v2822 = vpop.f32.mrb[0].mxu0
  %v2823 = vadd.f32 %v2399, %v2822
  %v2824 = vpop.f32.mrb[0].mxu0
  %2825 = vmatprep.mubr.bf16.mxu0 0
  %2826 = vmatmul.mubr.bf16.gmra.mrb[0].mxu0 %v2374
  %v2827 = vpop.f32.mrb[0].mxu0
  %v2828 = vadd.f32 %v2399, %v2827
  %v2829 = vpop.f32.mrb[0].mxu0
  %v2830 = vpop.f32.mrb[0].mxu0
  %v2831 = vadd.f32 %v2399, %v2830
  %v2832 = vpop.f32.mrb[0].mxu0
  %2833 = vmatprep.mubr.bf16.mxu0 0
  %2834 = vmatmul.mubr.bf16.gmra.mrb[0].mxu0 %v2375
  %v2835 = vpop.f32.mrb[0].mxu0
  %v2836 = vadd.f32 %v2399, %v2835
  %v2837 = vpop.f32.mrb[0].mxu0
  %v2838 = vpop.f32.mrb[0].mxu0
  %v2839 = vadd.f32 %v2399, %v2838
  %v2840 = vpop.f32.mrb[0].mxu0
  %2841 = vmatprep.mubr.bf16.mxu0 0
  %2842 = vmatmul.mubr.bf16.gmra.mrb[0].mxu0 %v2376
  %v2843 = vpop.f32.mrb[0].mxu0
  %v2844 = vadd.f32 %v2399, %v2843
  %v2845 = vpop.f32.mrb[0].mxu0
  %v2846 = vpop.f32.mrb[0].mxu0
  %v2847 = vadd.f32 %v2399, %v2846
  %v2848 = vpop.f32.mrb[0].mxu0
  %2849 = vmatprep.mubr.bf16.mxu0 0
  %2850 = vmatmul.mubr.bf16.gmra.mrb[0].mxu0 %v2377
  %v2851 = vpop.f32.mrb[0].mxu0
  %v2852 = vadd.f32 %v2399, %v2851
  %v2853 = vpop.f32.mrb[0].mxu0
  %v2854 = vpop.f32.mrb[0].mxu0
  %v2855 = vadd.f32 %v2399, %v2854
  %v2856 = vpop.f32.mrb[0].mxu0
  %2857 = vmatprep.mubr.bf16.mxu0 0
  %2858 = vmatmul.mubr.bf16.gmra.mrb[0].mxu0 %v2378
  %v2859 = vpop.f32.mrb[0].mxu0
  %v2860 = vadd.f32 %v2399, %v2859
  %v2861 = vpop.f32.mrb[0].mxu0
  %v2862 = vpop.f32.mrb[0].mxu0
  %v2863 = vadd.f32 %v2399, %v2862
  %v2864 = vpop.f32.mrb[0].mxu0
  %2865 = vmatprep.mubr.bf16.mxu0 0
  %2866 = vmatmul.mubr.bf16.gmra.mrb[0].mxu0 %v2379
  %v2867 = vpop.f32.mrb[0].mxu0
  %v2868 = vadd.f32 %v2399, %v2867
  %v2869 = vpop.f32.mrb[0].mxu0
  %v2870 = vpop.f32.mrb[0].mxu0
  %v2871 = vadd.f32 %v2399, %v2870
  %v2872 = vpop.f32.mrb[0].mxu0
  %2873 = vmatprep.mubr.bf16.mxu0 0
  %2874 = vmatmul.mubr.bf16.gmra.mrb[0].mxu0 %v2380
  %v2875 = vpop.f32.mrb[0].mxu0
  %v2876 = vadd.f32 %v2399, %v2875
  %v2877 = vpop.f32.mrb[0].mxu0
  %v2878 = vpop.f32.mrb[0].mxu0
  %v2879 = vadd.f32 %v2399, %v2878
  %v2880 = vpop.f32.mrb[0].mxu0
  %2881 = vmatprep.mubr.bf16.mxu0 0
  %2882 = vmatmul.mubr.bf16.gmra.mrb[0].mxu0 %v2381
  %v2883 = vpop.f32.mrb[0].mxu0
  %v2884 = vadd.f32 %v2399, %v2883
  %v2885 = vpop.f32.mrb[0].mxu0
  %v2886 = vpop.f32.mrb[0].mxu0
  %v2887 = vadd.f32 %v2399, %v2886
  %v2888 = vpop.f32.mrb[0].mxu0
  %2889 = vmatprep.mubr.bf16.mxu0 0
  %2890 = vmatmul.mubr.bf16.gmra.mrb[0].mxu0 %v2382
  %v2891 = vpop.f32.mrb[0].mxu0
  %v2892 = vadd.f32 %v2399, %v2891
  %v2893 = vpop.f32.mrb[0].mxu0
  %v2894 = vpop.f32.mrb[0].mxu0
  %v2895 = vadd.f32 %v2399, %v2894
  %v2896 = vpop.f32.mrb[0].mxu0
  %2897 = vmatprep.mubr.bf16.mxu0 0
  %2898 = vmatmul.mubr.bf16.gmra.mrb[0].mxu0 %v2383
  %v2899 = vpop.f32.mrb[0].mxu0
  %v2900 = vadd.f32 %v2399, %v2899
  %v2901 = vpop.f32.mrb[0].mxu0
  %v2902 = vpop.f32.mrb[0].mxu0
  %v2903 = vadd.f32 %v2399, %v2902
  %v2904 = vpop.f32.mrb[0].mxu0
  %2905 = vmatprep.mubr.bf16.mxu0 0
  %2906 = vmatmul.mubr.bf16.gmra.mrb[0].mxu0 %v2384
  %v2907 = vpop.f32.mrb[0].mxu0
  %v2908 = vadd.f32 %v2399, %v2907
  %v2909 = vpop.f32.mrb[0].mxu0
  %v2910 = vpop.f32.mrb[0].mxu0
  %v2911 = vadd.f32 %v2399, %v2910
  %v2912 = vpop.f32.mrb[0].mxu0
  %2913 = vmatprep.mubr.bf16.mxu0 0
  %2914 = vmatmul.mubr.bf16.gmra.mrb[0].mxu0 %v2385
  %v2915 = vpop.f32.mrb[0].mxu0
  %v2916 = vadd.f32 %v2399, %v2915
  %v2917 = vpop.f32.mrb[0].mxu0
  %v2918 = vpop.f32.mrb[0].mxu0
  %v2919 = vadd.f32 %v2399, %v2918
  %v2920 = vpop.f32.mrb[0].mxu0
  %2921 = vmatprep.mubr.bf16.mxu0 0
  %2922 = vmatmul.mubr.bf16.gmra.mrb[0].mxu0 %v2386
  %v2923 = vpop.f32.mrb[0].mxu0
  %v2924 = vadd.f32 %v2399, %v2923
  %v2925 = vpop.f32.mrb[0].mxu0
  %v2926 = vpop.f32.mrb[0].mxu0
  %v2927 = vadd.f32 %v2399, %v2926
  %v2928 = vpop.f32.mrb[0].mxu0
  %2929 = vmatprep.mubr.bf16.mxu0 0
  %2930 = vmatmul.mubr.bf16.gmra.mrb[0].mxu0 %v2387
  %v2931 = vpop.f32.mrb[0].mxu0
  %v2932 = vadd.f32 %v2399, %v2931
  %v2933 = vpop.f32.mrb[0].mxu0
  %v2934 = vpop.f32.mrb[0].mxu0
  %v2935 = vadd.f32 %v2399, %v2934
  %v2936 = vpop.f32.mrb[0].mxu0
  %2937 = vmatprep.mubr.bf16.mxu0 0
  %2938 = vmatmul.mubr.bf16.gmra.mrb[0].mxu0 %v2388
  %v2939 = vpop.f32.mrb[0].mxu0
  %v2940 = vadd.f32 %v2399, %v2939
  %v2941 = vpop.f32.mrb[0].mxu0
  %v2942 = vpop.f32.mrb[0].mxu0
  %v2943 = vadd.f32 %v2399, %v2942
  %v2944 = vpop.f32.mrb[0].mxu0
  %2945 = vmatprep.mubr.bf16.mxu0 0
  %2946 = vmatmul.mubr.bf16.gmra.mrb[0].mxu0 %v2389
  %v2947 = vpop.f32.mrb[0].mxu0
  %v2948 = vadd.f32 %v2399, %v2947
  %v2949 = vpop.f32.mrb[0].mxu0
  %v2950 = vpop.f32.mrb[0].mxu0
  %v2951 = vadd.f32 %v2399, %v2950
  %v2952 = vpop.f32.mrb[0].mxu0
  %2953 = vmatprep.mubr.bf16.mxu0 0
  %2954 = vmatmul.mubr.bf16.gmra.mrb[0].mxu0 %v2390
  %v2955 = vpop.f32.mrb[0].mxu0
  %v2956 = vadd.f32 %v2399, %v2955
  %v2957 = vpop.f32.mrb[0].mxu0
  %v2958 = vpop.f32.mrb[0].mxu0
  %v2959 = vadd.f32 %v2399, %v2958
  %v2960 = vpop.f32.mrb[0].mxu0
  %2961 = vmatprep.mubr.bf16.mxu0 0
  %2962 = vmatmul.mubr.bf16.gmra.mrb[0].mxu0 %v2391
  %v2963 = vpop.f32.mrb[0].mxu0
  %v2964 = vadd.f32 %v2399, %v2963
  %v2965 = vpop.f32.mrb[0].mxu0
  %v2966 = vpop.f32.mrb[0].mxu0
  %v2967 = vadd.f32 %v2399, %v2966
  %v2968 = vpop.f32.mrb[0].mxu0
  %2969 = vmatprep.mubr.bf16.mxu0 0
  %2970 = vmatmul.mubr.bf16.gmra.mrb[0].mxu0 %v2392
  %v2971 = vpop.f32.mrb[0].mxu0
  %v2972 = vadd.f32 %v2399, %v2971
  %v2973 = vpop.f32.mrb[0].mxu0
  %v2974 = vpop.f32.mrb[0].mxu0
  %v2975 = vadd.f32 %v2399, %v2974
  %v2976 = vpop.f32.mrb[0].mxu0
  %2977 = vmatprep.mubr.bf16.mxu0 0
  %2978 = vmatmul.mubr.bf16.gmra.mrb[0].mxu0 %v2393
  %v2979 = vpop.f32.mrb[0].mxu0
  %v2980 = vadd.f32 %v2399, %v2979
  %v2981 = vpop.f32.mrb[0].mxu0
  %v2982 = vpop.f32.mrb[0].mxu0
  %v2983 = vadd.f32 %v2399, %v2982
  %v2984 = vpop.f32.mrb[0].mxu0
  %2985 = vmatprep.mubr.bf16.mxu0 0
  %2986 = vmatmul.mubr.bf16.gmra.mrb[0].mxu0 %v2394
  %v2987 = vpop.f32.mrb[0].mxu0
  %v2988 = vadd.f32 %v2399, %v2987
  %v2989 = vpop.f32.mrb[0].mxu0
  %v2990 = vpop.f32.mrb[0].mxu0
  %v2991 = vadd.f32 %v2399, %v2990
  %v2992 = vpop.f32.mrb[0].mxu0
  %2993 = vdwg.mxu0
  %vm2994 = vcmask 130048
  %2995 = vst.msk [vmem:[%s7] sm:$0xff] %vm2994, %v2484
  %2996 = vst.msk [vmem:[%s7 + $0x8] sm:$0xff] %vm2994, %v2487
  %2997 = vst.msk [vmem:[%s7 + $0x10] sm:$0xff] %vm2994, %v2492
  %2998 = vst.msk [vmem:[%s7 + $0x18] sm:$0xff] %vm2994, %v2495
  %2999 = vst.msk [vmem:[%s7 + $0x20] sm:$0xff] %vm2994, %v2500
  %3000 = vst.msk [vmem:[%s7 + $0x28] sm:$0xff] %vm2994, %v2503
  %3001 = vst.msk [vmem:[%s7 + $0x30] sm:$0xff] %vm2994, %v2508
  %3002 = vst.msk [vmem:[%s7 + $0x38] sm:$0xff] %vm2994, %v2511
  %3003 = vst.msk [vmem:[%s7 + $0x40] sm:$0xff] %vm2994, %v2516
  %3004 = vst.msk [vmem:[%s7 + $0x48] sm:$0xff] %vm2994, %v2519
  %3005 = vst.msk [vmem:[%s7 + $0x50] sm:$0xff] %vm2994, %v2524
  %3006 = vst.msk [vmem:[%s7 + $0x58] sm:$0xff] %vm2994, %v2527
  %3007 = vst.msk [vmem:[%s7 + $0x60] sm:$0xff] %vm2994, %v2532
  %3008 = vst.msk [vmem:[%s7 + $0x68] sm:$0xff] %vm2994, %v2535
  %3009 = vst.msk [vmem:[%s7 + $0x70] sm:$0xff] %vm2994, %v2540
  %3010 = vst.msk [vmem:[%s7 + $0x78] sm:$0xff] %vm2994, %v2543
  %3011 = vst.msk [vmem:[%s7 + $0x80] sm:$0xff] %vm2994, %v2548
  %3012 = vst.msk [vmem:[%s7 + $0x88] sm:$0xff] %vm2994, %v2551
  %3013 = vst.msk [vmem:[%s7 + $0x90] sm:$0xff] %vm2994, %v2556
  %3014 = vst.msk [vmem:[%s7 + $0x98] sm:$0xff] %vm2994, %v2559
  %3015 = vst.msk [vmem:[%s7 + $0xa0] sm:$0xff] %vm2994, %v2564
  %3016 = vst.msk [vmem:[%s7 + $0xa8] sm:$0xff] %vm2994, %v2567
  %3017 = vst.msk [vmem:[%s7 + $0xb0] sm:$0xff] %vm2994, %v2572
  %3018 = vst.msk [vmem:[%s7 + $0xb8] sm:$0xff] %vm2994, %v2575
  %3019 = vst.msk [vmem:[%s7 + $0xc0] sm:$0xff] %vm2994, %v2580
  %3020 = vst.msk [vmem:[%s7 + $0xc8] sm:$0xff] %vm2994, %v2583
  %3021 = vst.msk [vmem:[%s7 + $0xd0] sm:$0xff] %vm2994, %v2588
  %3022 = vst.msk [vmem:[%s7 + $0xd8] sm:$0xff] %vm2994, %v2591
  %3023 = vst.msk [vmem:[%s7 + $0xe0] sm:$0xff] %vm2994, %v2596
  %3024 = vst.msk [vmem:[%s7 + $0xe8] sm:$0xff] %vm2994, %v2599
  %3025 = vst.msk [vmem:[%s7 + $0xf0] sm:$0xff] %vm2994, %v2604
  %3026 = vst.msk [vmem:[%s7 + $0xf8] sm:$0xff] %vm2994, %v2607
  %3027 = vst.msk [vmem:[%s7 + $0x100] sm:$0xff] %vm2994, %v2612
  %3028 = vst.msk [vmem:[%s7 + $0x108] sm:$0xff] %vm2994, %v2615
  %3029 = vst.msk [vmem:[%s7 + $0x110] sm:$0xff] %vm2994, %v2620
  %3030 = vst.msk [vmem:[%s7 + $0x118] sm:$0xff] %vm2994, %v2623
  %3031 = vst.msk [vmem:[%s7 + $0x120] sm:$0xff] %vm2994, %v2628
  %3032 = vst.msk [vmem:[%s7 + $0x128] sm:$0xff] %vm2994, %v2631
  %3033 = vst.msk [vmem:[%s7 + $0x130] sm:$0xff] %vm2994, %v2636
  %3034 = vst.msk [vmem:[%s7 + $0x138] sm:$0xff] %vm2994, %v2639
  %3035 = vst.msk [vmem:[%s7 + $0x140] sm:$0xff] %vm2994, %v2644
  %3036 = vst.msk [vmem:[%s7 + $0x148] sm:$0xff] %vm2994, %v2647
  %3037 = vst.msk [vmem:[%s7 + $0x150] sm:$0xff] %vm2994, %v2652
  %3038 = vst.msk [vmem:[%s7 + $0x158] sm:$0xff] %vm2994, %v2655
  %3039 = vst.msk [vmem:[%s7 + $0x160] sm:$0xff] %vm2994, %v2660
  %3040 = vst.msk [vmem:[%s7 + $0x168] sm:$0xff] %vm2994, %v2663
  %3041 = vst.msk [vmem:[%s7 + $0x170] sm:$0xff] %vm2994, %v2668
  %3042 = vst.msk [vmem:[%s7 + $0x178] sm:$0xff] %vm2994, %v2671
  %3043 = vst.msk [vmem:[%s7 + $0x180] sm:$0xff] %vm2994, %v2676
  %3044 = vst.msk [vmem:[%s7 + $0x188] sm:$0xff] %vm2994, %v2679
  %3045 = vst.msk [vmem:[%s7 + $0x190] sm:$0xff] %vm2994, %v2684
  %3046 = vst.msk [vmem:[%s7 + $0x198] sm:$0xff] %vm2994, %v2687
  %3047 = vst.msk [vmem:[%s7 + $0x1a0] sm:$0xff] %vm2994, %v2692
  %3048 = vst.msk [vmem:[%s7 + $0x1a8] sm:$0xff] %vm2994, %v2695
  %3049 = vst.msk [vmem:[%s7 + $0x1b0] sm:$0xff] %vm2994, %v2700
  %3050 = vst.msk [vmem:[%s7 + $0x1b8] sm:$0xff] %vm2994, %v2703
  %3051 = vst.msk [vmem:[%s7 + $0x1c0] sm:$0xff] %vm2994, %v2708
  %3052 = vst.msk [vmem:[%s7 + $0x1c8] sm:$0xff] %vm2994, %v2711
  %3053 = vst.msk [vmem:[%s7 + $0x1d0] sm:$0xff] %vm2994, %v2716
  %3054 = vst.msk [vmem:[%s7 + $0x1d8] sm:$0xff] %vm2994, %v2719
  %3055 = vst.msk [vmem:[%s7 + $0x1e0] sm:$0xff] %vm2994, %v2724
  %3056 = vst.msk [vmem:[%s7 + $0x1e8] sm:$0xff] %vm2994, %v2727
  %3057 = vst.msk [vmem:[%s7 + $0x1f0] sm:$0xff] %vm2994, %v2732
  %3058 = vst.msk [vmem:[%s7 + $0x1f8] sm:$0xff] %vm2994, %v2735
  %3059 = vst.msk [vmem:[%s7 + $0x200] sm:$0xff] %vm2994, %v2740
  %3060 = vst.msk [vmem:[%s7 + $0x208] sm:$0xff] %vm2994, %v2743
  %3061 = vst.msk [vmem:[%s7 + $0x210] sm:$0xff] %vm2994, %v2748
  %3062 = vst.msk [vmem:[%s7 + $0x218] sm:$0xff] %vm2994, %v2751
  %3063 = vst.msk [vmem:[%s7 + $0x220] sm:$0xff] %vm2994, %v2756
  %3064 = vst.msk [vmem:[%s7 + $0x228] sm:$0xff] %vm2994, %v2759
  %3065 = vst.msk [vmem:[%s7 + $0x230] sm:$0xff] %vm2994, %v2764
  %3066 = vst.msk [vmem:[%s7 + $0x238] sm:$0xff] %vm2994, %v2767
  %3067 = vst.msk [vmem:[%s7 + $0x240] sm:$0xff] %vm2994, %v2772
  %3068 = vst.msk [vmem:[%s7 + $0x248] sm:$0xff] %vm2994, %v2775
  %3069 = vst.msk [vmem:[%s7 + $0x250] sm:$0xff] %vm2994, %v2780
  %3070 = vst.msk [vmem:[%s7 + $0x258] sm:$0xff] %vm2994, %v2783
  %3071 = vst.msk [vmem:[%s7 + $0x260] sm:$0xff] %vm2994, %v2788
  %3072 = vst.msk [vmem:[%s7 + $0x268] sm:$0xff] %vm2994, %v2791
  %3073 = vst.msk [vmem:[%s7 + $0x270] sm:$0xff] %vm2994, %v2796
  %3074 = vst.msk [vmem:[%s7 + $0x278] sm:$0xff] %vm2994, %v2799
  %3075 = vst.msk [vmem:[%s7 + $0x280] sm:$0xff] %vm2994, %v2804
  %3076 = vst.msk [vmem:[%s7 + $0x288] sm:$0xff] %vm2994, %v2807
  %3077 = vst.msk [vmem:[%s7 + $0x290] sm:$0xff] %vm2994, %v2812
  %3078 = vst.msk [vmem:[%s7 + $0x298] sm:$0xff] %vm2994, %v2815
  %3079 = vst.msk [vmem:[%s7 + $0x2a0] sm:$0xff] %vm2994, %v2820
  %3080 = vst.msk [vmem:[%s7 + $0x2a8] sm:$0xff] %vm2994, %v2823
  %3081 = vst.msk [vmem:[%s7 + $0x2b0] sm:$0xff] %vm2994, %v2828
  %3082 = vst.msk [vmem:[%s7 + $0x2b8] sm:$0xff] %vm2994, %v2831
  %3083 = vst.msk [vmem:[%s7 + $0x2c0] sm:$0xff] %vm2994, %v2836
  %3084 = vst.msk [vmem:[%s7 + $0x2c8] sm:$0xff] %vm2994, %v2839
  %3085 = vst.msk [vmem:[%s7 + $0x2d0] sm:$0xff] %vm2994, %v2844
  %3086 = vst.msk [vmem:[%s7 + $0x2d8] sm:$0xff] %vm2994, %v2847
  %3087 = vst.msk [vmem:[%s7 + $0x2e0] sm:$0xff] %vm2994, %v2852
  %3088 = vst.msk [vmem:[%s7 + $0x2e8] sm:$0xff] %vm2994, %v2855
  %3089 = vst.msk [vmem:[%s7 + $0x2f0] sm:$0xff] %vm2994, %v2860
  %3090 = vst.msk [vmem:[%s7 + $0x2f8] sm:$0xff] %vm2994, %v2863
  %3091 = vst.msk [vmem:[%s7 + $0x300] sm:$0xff] %vm2994, %v2868
  %3092 = vst.msk [vmem:[%s7 + $0x308] sm:$0xff] %vm2994, %v2871
  %3093 = vst.msk [vmem:[%s7 + $0x310] sm:$0xff] %vm2994, %v2876
  %3094 = vst.msk [vmem:[%s7 + $0x318] sm:$0xff] %vm2994, %v2879
  %3095 = vst.msk [vmem:[%s7 + $0x320] sm:$0xff] %vm2994, %v2884
  %3096 = vst.msk [vmem:[%s7 + $0x328] sm:$0xff] %vm2994, %v2887
  %3097 = vst.msk [vmem:[%s7 + $0x330] sm:$0xff] %vm2994, %v2892
  %3098 = vst.msk [vmem:[%s7 + $0x338] sm:$0xff] %vm2994, %v2895
  %3099 = vst.msk [vmem:[%s7 + $0x340] sm:$0xff] %vm2994, %v2900
  %3100 = vst.msk [vmem:[%s7 + $0x348] sm:$0xff] %vm2994, %v2903
  %3101 = vst.msk [vmem:[%s7 + $0x350] sm:$0xff] %vm2994, %v2908
  %3102 = vst.msk [vmem:[%s7 + $0x358] sm:$0xff] %vm2994, %v2911
  %3103 = vst.msk [vmem:[%s7 + $0x360] sm:$0xff] %vm2994, %v2916
  %3104 = vst.msk [vmem:[%s7 + $0x368] sm:$0xff] %vm2994, %v2919
  %3105 = vst.msk [vmem:[%s7 + $0x370] sm:$0xff] %vm2994, %v2924
  %3106 = vst.msk [vmem:[%s7 + $0x378] sm:$0xff] %vm2994, %v2927
  %3107 = vst.msk [vmem:[%s7 + $0x380] sm:$0xff] %vm2994, %v2932
  %3108 = vst.msk [vmem:[%s7 + $0x388] sm:$0xff] %vm2994, %v2935
  %3109 = vst.msk [vmem:[%s7 + $0x390] sm:$0xff] %vm2994, %v2940
  %3110 = vst.msk [vmem:[%s7 + $0x398] sm:$0xff] %vm2994, %v2943
  %3111 = vst.msk [vmem:[%s7 + $0x3a0] sm:$0xff] %vm2994, %v2948
  %3112 = vst.msk [vmem:[%s7 + $0x3a8] sm:$0xff] %vm2994, %v2951
  %3113 = vst.msk [vmem:[%s7 + $0x3b0] sm:$0xff] %vm2994, %v2956
  %3114 = vst.msk [vmem:[%s7 + $0x3b8] sm:$0xff] %vm2994, %v2959
  %3115 = vst.msk [vmem:[%s7 + $0x3c0] sm:$0xff] %vm2994, %v2964
  %3116 = vst.msk [vmem:[%s7 + $0x3c8] sm:$0xff] %vm2994, %v2967
  %3117 = vst.msk [vmem:[%s7 + $0x3d0] sm:$0xff] %vm2994, %v2972
  %3118 = vst.msk [vmem:[%s7 + $0x3d8] sm:$0xff] %vm2994, %v2975
  %3119 = vst.msk [vmem:[%s7 + $0x3e0] sm:$0xff] %vm2994, %v2980
  %3120 = vst.msk [vmem:[%s7 + $0x3e8] sm:$0xff] %vm2994, %v2983
  %3121 = vst.msk [vmem:[%s7 + $0x3f0] sm:$0xff] %vm2994, %v2988
  %3122 = vst.msk [vmem:[%s7 + $0x3f8] sm:$0xff] %vm2994, %v2991
  // Predicated region
  $region30: #{_lambda_.1} parent=0 // pred_check
    _
  $region31: #{_lambda_.1} parent=0 // pred_check_branch
    %3124 = sbr.rel (0) target = $region33
  $region32: #{_lambda_.1} parent=0 // pred_region
    _
  $region33: #{_lambda_.1} parent=0 // pred_fallthru
    _
  // Predicated region
  $region34: #{_lambda_.1} parent=0 // pred_check
    _
  $region35: #{_lambda_.1} parent=0 // pred_check_branch
    %3126 = sbr.rel (0) target = $region37
  $region36: #{_lambda_.1} parent=0 // pred_region
    _
  $region37: #{_lambda_.1} parent=0 // pred_fallthru
    _

</llo_original>
